<compile_context>
chip_gen: v7x
topology: tpu7x:2x2x1
jax: 0.10.0
libtpu: 0.0.40
codegen_flags: <defaults>
</compile_context>

<pallas_src>
import jax
import jax.numpy as jnp
from jax import lax
from jax.experimental import pallas as pl
from jax.experimental.pallas import tpu as pltpu


def _round_up(n, m):
    return ((n + m - 1) // m) * m


def lstm_kernel(x_ref, w1_ref, b1_ref, w2_ref, b2_ref, wout_ref, bout_ref,
                o_ref, h2_all):
    """Full 2-layer LSTM recurrence + output Linear in one invocation.

    x_ref   : (S, Bp, Ep)       padded input, resident in VMEM
    w1_ref  : (Ep + Hp, 4*Hp)   stacked [W_ih1; W_hh1], gate-major, Hp-padded
    w2_ref  : (Hp + Hp, 4*Hp)   stacked [W_ih2; W_hh2]
    b1/b2   : (1, 4*Hp)         combined b_ih + b_hh (padded gates -> 0 bias)
    wout    : (Hp, Vp), bout: (1, Vp)
    o_ref   : (S, Bp, Vp)
    h2_all  : VMEM scratch (S, Bp, Hp) holding per-step layer-2 hidden states
    """
    S, Bp, _ = x_ref.shape
    Hp4 = w1_ref.shape[1]
    Hp = Hp4 // 4
    Vp = o_ref.shape[-1]

    # Weights loaded and bias broadcasts built once; reused across all steps.
    w1 = w1_ref[...]
    w2 = w2_ref[...]
    b1 = jnp.broadcast_to(b1_ref[...], (Bp, Hp4))
    b2 = jnp.broadcast_to(b2_ref[...], (Bp, Hp4))

    def sigmoid(v):
        # tanh-based sigmoid runs on the EUP slot; avoids an f32 VALU divide.
        return 0.5 * jnp.tanh(0.5 * v) + 0.5

    def cell(z, c, w, b):
        # Fused input+recurrent matmul: z = concat([input, h]) (lane-aligned).
        gates = jnp.dot(z, w, preferred_element_type=jnp.float32) + b
        # Hp = 128 -> every gate slice is a full-vreg, lane-aligned block.
        i = sigmoid(gates[:, 0 * Hp:1 * Hp])
        f = sigmoid(gates[:, 1 * Hp:2 * Hp])
        g = jnp.tanh(gates[:, 2 * Hp:3 * Hp])
        o = sigmoid(gates[:, 3 * Hp:4 * Hp])
        c_new = f * c + i * g
        h_new = o * jnp.tanh(c_new)
        return h_new, c_new

    def step(t, carry):
        h1, c1, h2, c2 = carry
        x_t = x_ref[t]                                            # (Bp, Ep)
        h1, c1 = cell(jnp.concatenate([x_t, h1], axis=-1), c1, w1, b1)
        h2, c2 = cell(jnp.concatenate([h1, h2], axis=-1), c2, w2, b2)
        h2_all[t] = h2
        return h1, c1, h2, c2

    z0 = jnp.zeros((Bp, Hp), jnp.float32)
    lax.fori_loop(0, S, step, (z0, z0, z0, z0), unroll=True)

    # Output projection hoisted out of the recurrence: one lane-dense
    # (S*Bp, Hp) @ (Hp, Vp) matmul + bias, then a single slab write.
    h2_flat = h2_all[...].reshape(S * Bp, Hp)
    out = jnp.dot(h2_flat, wout_ref[...], preferred_element_type=jnp.float32)
    out = out + bout_ref[...]
    o_ref[...] = out.reshape(S, Bp, Vp).astype(o_ref.dtype)


def lstm_forward(x, params):
    """x: (S, B, E) float32. Returns (S, B, V).

    Matches nn.LSTM(E, H, num_layers=2) + nn.Linear(H, V) with zero initial
    (h, c). Host-side prep pads to TPU-friendly shapes and stacks weights.
    """
    S, B, E = x.shape
    H = params["whh1"].shape[0]
    V = params["wout"].shape[1]

    # Pad lanes to multiples of 128 and sublanes (batch) to multiples of 8.
    Bp = _round_up(max(B, 8), 8)
    Ep = _round_up(E, 128)
    Hp = _round_up(H, 128)          # per-gate padding -> lane-aligned slices
    Vp = _round_up(V, 128)
    f32 = jnp.float32

    def stack_layer(wih, whh, b, in_dim, in_pad):
        # (in_pad + Hp, 4*Hp): rows [0:in_dim] take W_ih, rows
        # [in_pad:in_pad+H] take W_hh; padded gate columns are zero so padded
        # hidden lanes stay exactly 0 through the recurrence.
        w = jnp.zeros((in_pad + Hp, 4 * Hp), f32)
        bp = jnp.zeros((1, 4 * Hp), f32)
        for k in range(4):
            w = w.at[:in_dim, k * Hp:k * Hp + H].set(wih[:, k * H:(k + 1) * H])
            w = w.at[in_pad:in_pad + H, k * Hp:k * Hp + H].set(
                whh[:, k * H:(k + 1) * H])
            bp = bp.at[:, k * Hp:k * Hp + H].set(b[:, k * H:(k + 1) * H])
        return w, bp

    w1, b1 = stack_layer(params["wih1"], params["whh1"], params["b1"], E, Ep)
    w2, b2 = stack_layer(params["wih2"], params["whh2"], params["b2"], H, Hp)
    wout = jnp.zeros((Hp, Vp), f32).at[:H, :V].set(params["wout"])
    bout = jnp.zeros((1, Vp), f32).at[:, :V].set(params["bout"])
    xp = jnp.zeros((S, Bp, Ep), f32).at[:, :B, :E].set(x)

    # Single kernel invocation (no grid): everything is VMEM-resident.
    # TODO(synk): for long sequences that overflow VMEM, tile S with a grid
    # and carry (h, c) in scratch across "arbitrary" grid steps.
    vmem = pl.BlockSpec(memory_space=pltpu.MemorySpace.VMEM)
    out = pl.pallas_call(
        lstm_kernel,
        out_shape=jax.ShapeDtypeStruct((S, Bp, Vp), f32),
        in_specs=[vmem] * 7,
        out_specs=vmem,
        scratch_shapes=[pltpu.VMEM((S, Bp, Hp), f32)],
    )(xp, w1, b1, w2, b2, wout, bout)

    return out[:, :B, :V]


def init_params(key, embedding_dim, hidden_dim, vocab_size):
    """Deterministic init mirroring PyTorch shapes; weights stored transposed
    so forward computes x @ W^T as x @ W_T. Gate order: i, f, g, o."""
    ks = jax.random.split(key, 10)
    H, E, V = hidden_dim, embedding_dim, vocab_size
    s = 1.0 / jnp.sqrt(H)
    u = lambda k, shape: jax.random.uniform(k, shape, jnp.float32, -s, s)
    return {
        # layer 1: weight_ih_l0 (4H,E) -> transposed (E,4H); bias = b_ih+b_hh
        "wih1": u(ks[0], (E, 4 * H)),
        "whh1": u(ks[1], (H, 4 * H)),
        "b1": (u(ks[2], (1, 4 * H)) + u(ks[3], (1, 4 * H))),
        # layer 2
        "wih2": u(ks[4], (H, 4 * H)),
        "whh2": u(ks[5], (H, 4 * H)),
        "b2": (u(ks[6], (1, 4 * H)) + u(ks[7], (1, 4 * H))),
        # output linear
        "wout": u(ks[8], (H, V)),
        "bout": u(ks[9], (1, V)),
    }


def reference_forward(x, params):
    """Pure-JAX reference (lax.scan) replicating PyTorch 2-layer LSTM+Linear."""
    S, B, E = x.shape
    H = params["whh1"].shape[0]

    def cell(x_t, h, c, wih, whh, b):
        gates = x_t @ wih + h @ whh + b
        i = jax.nn.sigmoid(gates[:, 0 * H:1 * H])
        f = jax.nn.sigmoid(gates[:, 1 * H:2 * H])
        g = jnp.tanh(gates[:, 2 * H:3 * H])
        o = jax.nn.sigmoid(gates[:, 3 * H:4 * H])
        c = f * c + i * g
        h = o * jnp.tanh(c)
        return h, c

    def step(carry, x_t):
        h1, c1, h2, c2 = carry
        h1, c1 = cell(x_t, h1, c1, params["wih1"], params["whh1"], params["b1"])
        h2, c2 = cell(h1, h2, c2, params["wih2"], params["whh2"], params["b2"])
        out = h2 @ params["wout"] + params["bout"]
        return (h1, c1, h2, c2), out

    z = jnp.zeros((B, H), jnp.float32)
    _, ys = jax.lax.scan(step, (z, z, z, z), x)
    return ys


if __name__ == "__main__":
    # hps.embedding_dim=32, hps.lstm_h_dim=32, vocab_size=64
    SEQ, BATCH, EMB, HID, VOCAB = 8, 4, 32, 32, 64

    key = jax.random.PRNGKey(0)
    k_x, k_p = jax.random.split(key)
    x = jax.random.normal(k_x, (SEQ, BATCH, EMB), jnp.float32)
    params = init_params(k_p, EMB, HID, VOCAB)

    out = jax.block_until_ready(lstm_forward(x, params))
    assert out.shape == (SEQ, BATCH, VOCAB), out.shape

    ref = jax.block_until_ready(reference_forward(x, params))
    assert jnp.allclose(out, ref, atol=2e-3, rtol=2e-3), \
        float(jnp.max(jnp.abs(out - ref)))

    print("KERNEL_OK")
</pallas_src>

<mosaic_0001>
module attributes {stable_mosaic.version = 11 : i64} {
  func.func @lstm_kernel(%arg0: memref<8x8x128xf32, #tpu.memory_space<vmem>>, %arg1: memref<256x512xf32, #tpu.memory_space<vmem>>, %arg2: memref<1x512xf32, #tpu.memory_space<vmem>>, %arg3: memref<256x512xf32, #tpu.memory_space<vmem>>, %arg4: memref<1x512xf32, #tpu.memory_space<vmem>>, %arg5: memref<128x128xf32, #tpu.memory_space<vmem>>, %arg6: memref<1x128xf32, #tpu.memory_space<vmem>>, %arg7: memref<8x8x128xf32, #tpu.memory_space<vmem>>, %arg8: memref<8x8x128xf32, #tpu.memory_space<vmem>>) attributes {dimension_semantics = [], scalar_prefetch = 0 : i64, scratch_operands = 1 : i64, tpu.core_type = #tpu.core_type<tc>} {
    %c0 = arith.constant 0 : index
    %c0_0 = arith.constant 0 : index
    %0 = vector.load %arg1[%c0, %c0_0] : memref<256x512xf32, #tpu.memory_space<vmem>>, vector<256x512xf32>
    %c0_1 = arith.constant 0 : index
    %c0_2 = arith.constant 0 : index
    %1 = vector.load %arg3[%c0_1, %c0_2] : memref<256x512xf32, #tpu.memory_space<vmem>>, vector<256x512xf32>
    %c0_3 = arith.constant 0 : index
    %c0_4 = arith.constant 0 : index
    %2 = vector.load %arg2[%c0_3, %c0_4] : memref<1x512xf32, #tpu.memory_space<vmem>>, vector<1x512xf32>
    %3 = vector.shape_cast %2 : vector<1x512xf32> to vector<1x512xf32>
    %4 = vector.broadcast %3 : vector<1x512xf32> to vector<8x512xf32>
    %c0_5 = arith.constant 0 : index
    %c0_6 = arith.constant 0 : index
    %5 = vector.load %arg4[%c0_5, %c0_6] : memref<1x512xf32, #tpu.memory_space<vmem>>, vector<1x512xf32>
    %6 = vector.shape_cast %5 : vector<1x512xf32> to vector<1x512xf32>
    %7 = vector.broadcast %6 : vector<1x512xf32> to vector<8x512xf32>
    %cst = arith.constant 0.000000e+00 : f32
    %8 = vector.broadcast %cst : f32 to vector<8x128xf32>
    %c0_i32 = arith.constant 0 : i32
    %9 = arith.index_cast %c0_i32 : i32 to index
    %c0_7 = arith.constant 0 : index
    %c0_8 = arith.constant 0 : index
    %10 = vector.load %arg0[%9, %c0_7, %c0_8] : memref<8x8x128xf32, #tpu.memory_space<vmem>>, vector<1x8x128xf32>
    %11 = vector.shape_cast %10 : vector<1x8x128xf32> to vector<8x128xf32>
    %12 = tpu.concatenate %11, %8 in 1 : vector<8x128xf32>, vector<8x128xf32> -> vector<8x256xf32>
    %cst_9 = arith.constant dense<0.000000e+00> : vector<8x512xf32>
    %13 = tpu.matmul %12, %0, %cst_9 {dimension_numbers = #tpu.dot_dimension_numbers<[1], [0], [0], [1], [0, 0, 1, 1], [], []>} : vector<8x256xf32>, vector<256x512xf32>, vector<8x512xf32> -> vector<8x512xf32>
    %14 = arith.addf %13, %4 : vector<8x512xf32>
    %15 = vector.extract_strided_slice %14 {offsets = [0, 0], sizes = [8, 128], strides = [1, 1]} : vector<8x512xf32> to vector<8x128xf32>
    %cst_10 = arith.constant 5.000000e-01 : f32
    %16 = vector.broadcast %cst_10 : f32 to vector<8x128xf32>
    %17 = arith.mulf %16, %15 : vector<8x128xf32>
    %18 = math.tanh %17 : vector<8x128xf32>
    %cst_11 = arith.constant 5.000000e-01 : f32
    %19 = vector.broadcast %cst_11 : f32 to vector<8x128xf32>
    %20 = arith.mulf %19, %18 : vector<8x128xf32>
    %cst_12 = arith.constant 5.000000e-01 : f32
    %21 = vector.broadcast %cst_12 : f32 to vector<8x128xf32>
    %22 = arith.addf %20, %21 : vector<8x128xf32>
    %23 = vector.extract_strided_slice %14 {offsets = [0, 128], sizes = [8, 128], strides = [1, 1]} : vector<8x512xf32> to vector<8x128xf32>
    %cst_13 = arith.constant 5.000000e-01 : f32
    %24 = vector.broadcast %cst_13 : f32 to vector<8x128xf32>
    %25 = arith.mulf %24, %23 : vector<8x128xf32>
    %26 = math.tanh %25 : vector<8x128xf32>
    %cst_14 = arith.constant 5.000000e-01 : f32
    %27 = vector.broadcast %cst_14 : f32 to vector<8x128xf32>
    %28 = arith.mulf %27, %26 : vector<8x128xf32>
    %cst_15 = arith.constant 5.000000e-01 : f32
    %29 = vector.broadcast %cst_15 : f32 to vector<8x128xf32>
    %30 = arith.addf %28, %29 : vector<8x128xf32>
    %31 = vector.extract_strided_slice %14 {offsets = [0, 256], sizes = [8, 128], strides = [1, 1]} : vector<8x512xf32> to vector<8x128xf32>
    %32 = math.tanh %31 : vector<8x128xf32>
    %33 = vector.extract_strided_slice %14 {offsets = [0, 384], sizes = [8, 128], strides = [1, 1]} : vector<8x512xf32> to vector<8x128xf32>
    %cst_16 = arith.constant 5.000000e-01 : f32
    %34 = vector.broadcast %cst_16 : f32 to vector<8x128xf32>
    %35 = arith.mulf %34, %33 : vector<8x128xf32>
    %36 = math.tanh %35 : vector<8x128xf32>
    %cst_17 = arith.constant 5.000000e-01 : f32
    %37 = vector.broadcast %cst_17 : f32 to vector<8x128xf32>
    %38 = arith.mulf %37, %36 : vector<8x128xf32>
    %cst_18 = arith.constant 5.000000e-01 : f32
    %39 = vector.broadcast %cst_18 : f32 to vector<8x128xf32>
    %40 = arith.addf %38, %39 : vector<8x128xf32>
    %41 = arith.mulf %30, %8 : vector<8x128xf32>
    %42 = arith.mulf %22, %32 : vector<8x128xf32>
    %43 = arith.addf %41, %42 : vector<8x128xf32>
    %44 = math.tanh %43 : vector<8x128xf32>
    %45 = arith.mulf %40, %44 : vector<8x128xf32>
    %46 = tpu.concatenate %45, %8 in 1 : vector<8x128xf32>, vector<8x128xf32> -> vector<8x256xf32>
    %cst_19 = arith.constant dense<0.000000e+00> : vector<8x512xf32>
    %47 = tpu.matmul %46, %1, %cst_19 {dimension_numbers = #tpu.dot_dimension_numbers<[1], [0], [0], [1], [0, 0, 1, 1], [], []>} : vector<8x256xf32>, vector<256x512xf32>, vector<8x512xf32> -> vector<8x512xf32>
    %48 = arith.addf %47, %7 : vector<8x512xf32>
    %49 = vector.extract_strided_slice %48 {offsets = [0, 0], sizes = [8, 128], strides = [1, 1]} : vector<8x512xf32> to vector<8x128xf32>
    %cst_20 = arith.constant 5.000000e-01 : f32
    %50 = vector.broadcast %cst_20 : f32 to vector<8x128xf32>
    %51 = arith.mulf %50, %49 : vector<8x128xf32>
    %52 = math.tanh %51 : vector<8x128xf32>
    %cst_21 = arith.constant 5.000000e-01 : f32
    %53 = vector.broadcast %cst_21 : f32 to vector<8x128xf32>
    %54 = arith.mulf %53, %52 : vector<8x128xf32>
    %cst_22 = arith.constant 5.000000e-01 : f32
    %55 = vector.broadcast %cst_22 : f32 to vector<8x128xf32>
    %56 = arith.addf %54, %55 : vector<8x128xf32>
    %57 = vector.extract_strided_slice %48 {offsets = [0, 128], sizes = [8, 128], strides = [1, 1]} : vector<8x512xf32> to vector<8x128xf32>
    %cst_23 = arith.constant 5.000000e-01 : f32
    %58 = vector.broadcast %cst_23 : f32 to vector<8x128xf32>
    %59 = arith.mulf %58, %57 : vector<8x128xf32>
    %60 = math.tanh %59 : vector<8x128xf32>
    %cst_24 = arith.constant 5.000000e-01 : f32
    %61 = vector.broadcast %cst_24 : f32 to vector<8x128xf32>
    %62 = arith.mulf %61, %60 : vector<8x128xf32>
    %cst_25 = arith.constant 5.000000e-01 : f32
    %63 = vector.broadcast %cst_25 : f32 to vector<8x128xf32>
    %64 = arith.addf %62, %63 : vector<8x128xf32>
    %65 = vector.extract_strided_slice %48 {offsets = [0, 256], sizes = [8, 128], strides = [1, 1]} : vector<8x512xf32> to vector<8x128xf32>
    %66 = math.tanh %65 : vector<8x128xf32>
    %67 = vector.extract_strided_slice %48 {offsets = [0, 384], sizes = [8, 128], strides = [1, 1]} : vector<8x512xf32> to vector<8x128xf32>
    %cst_26 = arith.constant 5.000000e-01 : f32
    %68 = vector.broadcast %cst_26 : f32 to vector<8x128xf32>
    %69 = arith.mulf %68, %67 : vector<8x128xf32>
    %70 = math.tanh %69 : vector<8x128xf32>
    %cst_27 = arith.constant 5.000000e-01 : f32
    %71 = vector.broadcast %cst_27 : f32 to vector<8x128xf32>
    %72 = arith.mulf %71, %70 : vector<8x128xf32>
    %cst_28 = arith.constant 5.000000e-01 : f32
    %73 = vector.broadcast %cst_28 : f32 to vector<8x128xf32>
    %74 = arith.addf %72, %73 : vector<8x128xf32>
    %75 = arith.mulf %64, %8 : vector<8x128xf32>
    %76 = arith.mulf %56, %66 : vector<8x128xf32>
    %77 = arith.addf %75, %76 : vector<8x128xf32>
    %78 = math.tanh %77 : vector<8x128xf32>
    %79 = arith.mulf %74, %78 : vector<8x128xf32>
    %80 = arith.index_cast %c0_i32 : i32 to index
    %c0_29 = arith.constant 0 : index
    %c0_30 = arith.constant 0 : index
    %81 = vector.load %arg8[%80, %c0_29, %c0_30] : memref<8x8x128xf32, #tpu.memory_space<vmem>>, vector<1x8x128xf32>
    %82 = vector.shape_cast %81 : vector<1x8x128xf32> to vector<8x128xf32>
    %83 = vector.shape_cast %79 : vector<8x128xf32> to vector<1x8x128xf32>
    tpu.vector_store %arg8[%80, %c0_29, %c0_30], %83 {strides = array<i32>} : memref<8x8x128xf32, #tpu.memory_space<vmem>>, vector<1x8x128xf32>,
    %c1_i32 = arith.constant 1 : i32
    %84 = arith.index_cast %c1_i32 : i32 to index
    %c0_31 = arith.constant 0 : index
    %c0_32 = arith.constant 0 : index
    %85 = vector.load %arg0[%84, %c0_31, %c0_32] : memref<8x8x128xf32, #tpu.memory_space<vmem>>, vector<1x8x128xf32>
    %86 = vector.shape_cast %85 : vector<1x8x128xf32> to vector<8x128xf32>
    %87 = tpu.concatenate %86, %45 in 1 : vector<8x128xf32>, vector<8x128xf32> -> vector<8x256xf32>
    %cst_33 = arith.constant dense<0.000000e+00> : vector<8x512xf32>
    %88 = tpu.matmul %87, %0, %cst_33 {dimension_numbers = #tpu.dot_dimension_numbers<[1], [0], [0], [1], [0, 0, 1, 1], [], []>} : vector<8x256xf32>, vector<256x512xf32>, vector<8x512xf32> -> vector<8x512xf32>
    %89 = arith.addf %88, %4 : vector<8x512xf32>
    %90 = vector.extract_strided_slice %89 {offsets = [0, 0], sizes = [8, 128], strides = [1, 1]} : vector<8x512xf32> to vector<8x128xf32>
    %cst_34 = arith.constant 5.000000e-01 : f32
    %91 = vector.broadcast %cst_34 : f32 to vector<8x128xf32>
    %92 = arith.mulf %91, %90 : vector<8x128xf32>
    %93 = math.tanh %92 : vector<8x128xf32>
    %cst_35 = arith.constant 5.000000e-01 : f32
    %94 = vector.broadcast %cst_35 : f32 to vector<8x128xf32>
    %95 = arith.mulf %94, %93 : vector<8x128xf32>
    %cst_36 = arith.constant 5.000000e-01 : f32
    %96 = vector.broadcast %cst_36 : f32 to vector<8x128xf32>
    %97 = arith.addf %95, %96 : vector<8x128xf32>
    %98 = vector.extract_strided_slice %89 {offsets = [0, 128], sizes = [8, 128], strides = [1, 1]} : vector<8x512xf32> to vector<8x128xf32>
    %cst_37 = arith.constant 5.000000e-01 : f32
    %99 = vector.broadcast %cst_37 : f32 to vector<8x128xf32>
    %100 = arith.mulf %99, %98 : vector<8x128xf32>
    %101 = math.tanh %100 : vector<8x128xf32>
    %cst_38 = arith.constant 5.000000e-01 : f32
    %102 = vector.broadcast %cst_38 : f32 to vector<8x128xf32>
    %103 = arith.mulf %102, %101 : vector<8x128xf32>
    %cst_39 = arith.constant 5.000000e-01 : f32
    %104 = vector.broadcast %cst_39 : f32 to vector<8x128xf32>
    %105 = arith.addf %103, %104 : vector<8x128xf32>
    %106 = vector.extract_strided_slice %89 {offsets = [0, 256], sizes = [8, 128], strides = [1, 1]} : vector<8x512xf32> to vector<8x128xf32>
    %107 = math.tanh %106 : vector<8x128xf32>
    %108 = vector.extract_strided_slice %89 {offsets = [0, 384], sizes = [8, 128], strides = [1, 1]} : vector<8x512xf32> to vector<8x128xf32>
    %cst_40 = arith.constant 5.000000e-01 : f32
    %109 = vector.broadcast %cst_40 : f32 to vector<8x128xf32>
    %110 = arith.mulf %109, %108 : vector<8x128xf32>
    %111 = math.tanh %110 : vector<8x128xf32>
    %cst_41 = arith.constant 5.000000e-01 : f32
    %112 = vector.broadcast %cst_41 : f32 to vector<8x128xf32>
    %113 = arith.mulf %112, %111 : vector<8x128xf32>
    %cst_42 = arith.constant 5.000000e-01 : f32
    %114 = vector.broadcast %cst_42 : f32 to vector<8x128xf32>
    %115 = arith.addf %113, %114 : vector<8x128xf32>
    %116 = arith.mulf %105, %43 : vector<8x128xf32>
    %117 = arith.mulf %97, %107 : vector<8x128xf32>
    %118 = arith.addf %116, %117 : vector<8x128xf32>
    %119 = math.tanh %118 : vector<8x128xf32>
    %120 = arith.mulf %115, %119 : vector<8x128xf32>
    %121 = tpu.concatenate %120, %79 in 1 : vector<8x128xf32>, vector<8x128xf32> -> vector<8x256xf32>
    %cst_43 = arith.constant dense<0.000000e+00> : vector<8x512xf32>
    %122 = tpu.matmul %121, %1, %cst_43 {dimension_numbers = #tpu.dot_dimension_numbers<[1], [0], [0], [1], [0, 0, 1, 1], [], []>} : vector<8x256xf32>, vector<256x512xf32>, vector<8x512xf32> -> vector<8x512xf32>
    %123 = arith.addf %122, %7 : vector<8x512xf32>
    %124 = vector.extract_strided_slice %123 {offsets = [0, 0], sizes = [8, 128], strides = [1, 1]} : vector<8x512xf32> to vector<8x128xf32>
    %cst_44 = arith.constant 5.000000e-01 : f32
    %125 = vector.broadcast %cst_44 : f32 to vector<8x128xf32>
    %126 = arith.mulf %125, %124 : vector<8x128xf32>
    %127 = math.tanh %126 : vector<8x128xf32>
    %cst_45 = arith.constant 5.000000e-01 : f32
    %128 = vector.broadcast %cst_45 : f32 to vector<8x128xf32>
    %129 = arith.mulf %128, %127 : vector<8x128xf32>
    %cst_46 = arith.constant 5.000000e-01 : f32
    %130 = vector.broadcast %cst_46 : f32 to vector<8x128xf32>
    %131 = arith.addf %129, %130 : vector<8x128xf32>
    %132 = vector.extract_strided_slice %123 {offsets = [0, 128], sizes = [8, 128], strides = [1, 1]} : vector<8x512xf32> to vector<8x128xf32>
    %cst_47 = arith.constant 5.000000e-01 : f32
    %133 = vector.broadcast %cst_47 : f32 to vector<8x128xf32>
    %134 = arith.mulf %133, %132 : vector<8x128xf32>
    %135 = math.tanh %134 : vector<8x128xf32>
    %cst_48 = arith.constant 5.000000e-01 : f32
    %136 = vector.broadcast %cst_48 : f32 to vector<8x128xf32>
    %137 = arith.mulf %136, %135 : vector<8x128xf32>
    %cst_49 = arith.constant 5.000000e-01 : f32
    %138 = vector.broadcast %cst_49 : f32 to vector<8x128xf32>
    %139 = arith.addf %137, %138 : vector<8x128xf32>
    %140 = vector.extract_strided_slice %123 {offsets = [0, 256], sizes = [8, 128], strides = [1, 1]} : vector<8x512xf32> to vector<8x128xf32>
    %141 = math.tanh %140 : vector<8x128xf32>
    %142 = vector.extract_strided_slice %123 {offsets = [0, 384], sizes = [8, 128], strides = [1, 1]} : vector<8x512xf32> to vector<8x128xf32>
    %cst_50 = arith.constant 5.000000e-01 : f32
    %143 = vector.broadcast %cst_50 : f32 to vector<8x128xf32>
    %144 = arith.mulf %143, %142 : vector<8x128xf32>
    %145 = math.tanh %144 : vector<8x128xf32>
    %cst_51 = arith.constant 5.000000e-01 : f32
    %146 = vector.broadcast %cst_51 : f32 to vector<8x128xf32>
    %147 = arith.mulf %146, %145 : vector<8x128xf32>
    %cst_52 = arith.constant 5.000000e-01 : f32
    %148 = vector.broadcast %cst_52 : f32 to vector<8x128xf32>
    %149 = arith.addf %147, %148 : vector<8x128xf32>
    %150 = arith.mulf %139, %77 : vector<8x128xf32>
    %151 = arith.mulf %131, %141 : vector<8x128xf32>
    %152 = arith.addf %150, %151 : vector<8x128xf32>
    %153 = math.tanh %152 : vector<8x128xf32>
    %154 = arith.mulf %149, %153 : vector<8x128xf32>
    %155 = arith.index_cast %c1_i32 : i32 to index
    %c0_53 = arith.constant 0 : index
    %c0_54 = arith.constant 0 : index
    %156 = vector.load %arg8[%155, %c0_53, %c0_54] : memref<8x8x128xf32, #tpu.memory_space<vmem>>, vector<1x8x128xf32>
    %157 = vector.shape_cast %156 : vector<1x8x128xf32> to vector<8x128xf32>
    %158 = vector.shape_cast %154 : vector<8x128xf32> to vector<1x8x128xf32>
    tpu.vector_store %arg8[%155, %c0_53, %c0_54], %158 {strides = array<i32>} : memref<8x8x128xf32, #tpu.memory_space<vmem>>, vector<1x8x128xf32>,
    %c2_i32 = arith.constant 2 : i32
    %159 = arith.index_cast %c2_i32 : i32 to index
    %c0_55 = arith.constant 0 : index
    %c0_56 = arith.constant 0 : index
    %160 = vector.load %arg0[%159, %c0_55, %c0_56] : memref<8x8x128xf32, #tpu.memory_space<vmem>>, vector<1x8x128xf32>
    %161 = vector.shape_cast %160 : vector<1x8x128xf32> to vector<8x128xf32>
    %162 = tpu.concatenate %161, %120 in 1 : vector<8x128xf32>, vector<8x128xf32> -> vector<8x256xf32>
    %cst_57 = arith.constant dense<0.000000e+00> : vector<8x512xf32>
    %163 = tpu.matmul %162, %0, %cst_57 {dimension_numbers = #tpu.dot_dimension_numbers<[1], [0], [0], [1], [0, 0, 1, 1], [], []>} : vector<8x256xf32>, vector<256x512xf32>, vector<8x512xf32> -> vector<8x512xf32>
    %164 = arith.addf %163, %4 : vector<8x512xf32>
    %165 = vector.extract_strided_slice %164 {offsets = [0, 0], sizes = [8, 128], strides = [1, 1]} : vector<8x512xf32> to vector<8x128xf32>
    %cst_58 = arith.constant 5.000000e-01 : f32
    %166 = vector.broadcast %cst_58 : f32 to vector<8x128xf32>
    %167 = arith.mulf %166, %165 : vector<8x128xf32>
    %168 = math.tanh %167 : vector<8x128xf32>
    %cst_59 = arith.constant 5.000000e-01 : f32
    %169 = vector.broadcast %cst_59 : f32 to vector<8x128xf32>
    %170 = arith.mulf %169, %168 : vector<8x128xf32>
    %cst_60 = arith.constant 5.000000e-01 : f32
    %171 = vector.broadcast %cst_60 : f32 to vector<8x128xf32>
    %172 = arith.addf %170, %171 : vector<8x128xf32>
    %173 = vector.extract_strided_slice %164 {offsets = [0, 128], sizes = [8, 128], strides = [1, 1]} : vector<8x512xf32> to vector<8x128xf32>
    %cst_61 = arith.constant 5.000000e-01 : f32
    %174 = vector.broadcast %cst_61 : f32 to vector<8x128xf32>
    %175 = arith.mulf %174, %173 : vector<8x128xf32>
    %176 = math.tanh %175 : vector<8x128xf32>
    %cst_62 = arith.constant 5.000000e-01 : f32
    %177 = vector.broadcast %cst_62 : f32 to vector<8x128xf32>
    %178 = arith.mulf %177, %176 : vector<8x128xf32>
    %cst_63 = arith.constant 5.000000e-01 : f32
    %179 = vector.broadcast %cst_63 : f32 to vector<8x128xf32>
    %180 = arith.addf %178, %179 : vector<8x128xf32>
    %181 = vector.extract_strided_slice %164 {offsets = [0, 256], sizes = [8, 128], strides = [1, 1]} : vector<8x512xf32> to vector<8x128xf32>
    %182 = math.tanh %181 : vector<8x128xf32>
    %183 = vector.extract_strided_slice %164 {offsets = [0, 384], sizes = [8, 128], strides = [1, 1]} : vector<8x512xf32> to vector<8x128xf32>
    %cst_64 = arith.constant 5.000000e-01 : f32
    %184 = vector.broadcast %cst_64 : f32 to vector<8x128xf32>
    %185 = arith.mulf %184, %183 : vector<8x128xf32>
    %186 = math.tanh %185 : vector<8x128xf32>
    %cst_65 = arith.constant 5.000000e-01 : f32
    %187 = vector.broadcast %cst_65 : f32 to vector<8x128xf32>
    %188 = arith.mulf %187, %186 : vector<8x128xf32>
    %cst_66 = arith.constant 5.000000e-01 : f32
    %189 = vector.broadcast %cst_66 : f32 to vector<8x128xf32>
    %190 = arith.addf %188, %189 : vector<8x128xf32>
    %191 = arith.mulf %180, %118 : vector<8x128xf32>
    %192 = arith.mulf %172, %182 : vector<8x128xf32>
    %193 = arith.addf %191, %192 : vector<8x128xf32>
    %194 = math.tanh %193 : vector<8x128xf32>
    %195 = arith.mulf %190, %194 : vector<8x128xf32>
    %196 = tpu.concatenate %195, %154 in 1 : vector<8x128xf32>, vector<8x128xf32> -> vector<8x256xf32>
    %cst_67 = arith.constant dense<0.000000e+00> : vector<8x512xf32>
    %197 = tpu.matmul %196, %1, %cst_67 {dimension_numbers = #tpu.dot_dimension_numbers<[1], [0], [0], [1], [0, 0, 1, 1], [], []>} : vector<8x256xf32>, vector<256x512xf32>, vector<8x512xf32> -> vector<8x512xf32>
    %198 = arith.addf %197, %7 : vector<8x512xf32>
    %199 = vector.extract_strided_slice %198 {offsets = [0, 0], sizes = [8, 128], strides = [1, 1]} : vector<8x512xf32> to vector<8x128xf32>
    %cst_68 = arith.constant 5.000000e-01 : f32
    %200 = vector.broadcast %cst_68 : f32 to vector<8x128xf32>
    %201 = arith.mulf %200, %199 : vector<8x128xf32>
    %202 = math.tanh %201 : vector<8x128xf32>
    %cst_69 = arith.constant 5.000000e-01 : f32
    %203 = vector.broadcast %cst_69 : f32 to vector<8x128xf32>
    %204 = arith.mulf %203, %202 : vector<8x128xf32>
    %cst_70 = arith.constant 5.000000e-01 : f32
    %205 = vector.broadcast %cst_70 : f32 to vector<8x128xf32>
    %206 = arith.addf %204, %205 : vector<8x128xf32>
    %207 = vector.extract_strided_slice %198 {offsets = [0, 128], sizes = [8, 128], strides = [1, 1]} : vector<8x512xf32> to vector<8x128xf32>
    %cst_71 = arith.constant 5.000000e-01 : f32
    %208 = vector.broadcast %cst_71 : f32 to vector<8x128xf32>
    %209 = arith.mulf %208, %207 : vector<8x128xf32>
    %210 = math.tanh %209 : vector<8x128xf32>
    %cst_72 = arith.constant 5.000000e-01 : f32
    %211 = vector.broadcast %cst_72 : f32 to vector<8x128xf32>
    %212 = arith.mulf %211, %210 : vector<8x128xf32>
    %cst_73 = arith.constant 5.000000e-01 : f32
    %213 = vector.broadcast %cst_73 : f32 to vector<8x128xf32>
    %214 = arith.addf %212, %213 : vector<8x128xf32>
    %215 = vector.extract_strided_slice %198 {offsets = [0, 256], sizes = [8, 128], strides = [1, 1]} : vector<8x512xf32> to vector<8x128xf32>
    %216 = math.tanh %215 : vector<8x128xf32>
    %217 = vector.extract_strided_slice %198 {offsets = [0, 384], sizes = [8, 128], strides = [1, 1]} : vector<8x512xf32> to vector<8x128xf32>
    %cst_74 = arith.constant 5.000000e-01 : f32
    %218 = vector.broadcast %cst_74 : f32 to vector<8x128xf32>
    %219 = arith.mulf %218, %217 : vector<8x128xf32>
    %220 = math.tanh %219 : vector<8x128xf32>
    %cst_75 = arith.constant 5.000000e-01 : f32
    %221 = vector.broadcast %cst_75 : f32 to vector<8x128xf32>
    %222 = arith.mulf %221, %220 : vector<8x128xf32>
    %cst_76 = arith.constant 5.000000e-01 : f32
    %223 = vector.broadcast %cst_76 : f32 to vector<8x128xf32>
    %224 = arith.addf %222, %223 : vector<8x128xf32>
    %225 = arith.mulf %214, %152 : vector<8x128xf32>
    %226 = arith.mulf %206, %216 : vector<8x128xf32>
    %227 = arith.addf %225, %226 : vector<8x128xf32>
    %228 = math.tanh %227 : vector<8x128xf32>
    %229 = arith.mulf %224, %228 : vector<8x128xf32>
    %230 = arith.index_cast %c2_i32 : i32 to index
    %c0_77 = arith.constant 0 : index
    %c0_78 = arith.constant 0 : index
    %231 = vector.load %arg8[%230, %c0_77, %c0_78] : memref<8x8x128xf32, #tpu.memory_space<vmem>>, vector<1x8x128xf32>
    %232 = vector.shape_cast %231 : vector<1x8x128xf32> to vector<8x128xf32>
    %233 = vector.shape_cast %229 : vector<8x128xf32> to vector<1x8x128xf32>
    tpu.vector_store %arg8[%230, %c0_77, %c0_78], %233 {strides = array<i32>} : memref<8x8x128xf32, #tpu.memory_space<vmem>>, vector<1x8x128xf32>,
    %c3_i32 = arith.constant 3 : i32
    %234 = arith.index_cast %c3_i32 : i32 to index
    %c0_79 = arith.constant 0 : index
    %c0_80 = arith.constant 0 : index
    %235 = vector.load %arg0[%234, %c0_79, %c0_80] : memref<8x8x128xf32, #tpu.memory_space<vmem>>, vector<1x8x128xf32>
    %236 = vector.shape_cast %235 : vector<1x8x128xf32> to vector<8x128xf32>
    %237 = tpu.concatenate %236, %195 in 1 : vector<8x128xf32>, vector<8x128xf32> -> vector<8x256xf32>
    %cst_81 = arith.constant dense<0.000000e+00> : vector<8x512xf32>
    %238 = tpu.matmul %237, %0, %cst_81 {dimension_numbers = #tpu.dot_dimension_numbers<[1], [0], [0], [1], [0, 0, 1, 1], [], []>} : vector<8x256xf32>, vector<256x512xf32>, vector<8x512xf32> -> vector<8x512xf32>
    %239 = arith.addf %238, %4 : vector<8x512xf32>
    %240 = vector.extract_strided_slice %239 {offsets = [0, 0], sizes = [8, 128], strides = [1, 1]} : vector<8x512xf32> to vector<8x128xf32>
    %cst_82 = arith.constant 5.000000e-01 : f32
    %241 = vector.broadcast %cst_82 : f32 to vector<8x128xf32>
    %242 = arith.mulf %241, %240 : vector<8x128xf32>
    %243 = math.tanh %242 : vector<8x128xf32>
    %cst_83 = arith.constant 5.000000e-01 : f32
    %244 = vector.broadcast %cst_83 : f32 to vector<8x128xf32>
    %245 = arith.mulf %244, %243 : vector<8x128xf32>
    %cst_84 = arith.constant 5.000000e-01 : f32
    %246 = vector.broadcast %cst_84 : f32 to vector<8x128xf32>
    %247 = arith.addf %245, %246 : vector<8x128xf32>
    %248 = vector.extract_strided_slice %239 {offsets = [0, 128], sizes = [8, 128], strides = [1, 1]} : vector<8x512xf32> to vector<8x128xf32>
    %cst_85 = arith.constant 5.000000e-01 : f32
    %249 = vector.broadcast %cst_85 : f32 to vector<8x128xf32>
    %250 = arith.mulf %249, %248 : vector<8x128xf32>
    %251 = math.tanh %250 : vector<8x128xf32>
    %cst_86 = arith.constant 5.000000e-01 : f32
    %252 = vector.broadcast %cst_86 : f32 to vector<8x128xf32>
    %253 = arith.mulf %252, %251 : vector<8x128xf32>
    %cst_87 = arith.constant 5.000000e-01 : f32
    %254 = vector.broadcast %cst_87 : f32 to vector<8x128xf32>
    %255 = arith.addf %253, %254 : vector<8x128xf32>
    %256 = vector.extract_strided_slice %239 {offsets = [0, 256], sizes = [8, 128], strides = [1, 1]} : vector<8x512xf32> to vector<8x128xf32>
    %257 = math.tanh %256 : vector<8x128xf32>
    %258 = vector.extract_strided_slice %239 {offsets = [0, 384], sizes = [8, 128], strides = [1, 1]} : vector<8x512xf32> to vector<8x128xf32>
    %cst_88 = arith.constant 5.000000e-01 : f32
    %259 = vector.broadcast %cst_88 : f32 to vector<8x128xf32>
    %260 = arith.mulf %259, %258 : vector<8x128xf32>
    %261 = math.tanh %260 : vector<8x128xf32>
    %cst_89 = arith.constant 5.000000e-01 : f32
    %262 = vector.broadcast %cst_89 : f32 to vector<8x128xf32>
    %263 = arith.mulf %262, %261 : vector<8x128xf32>
    %cst_90 = arith.constant 5.000000e-01 : f32
    %264 = vector.broadcast %cst_90 : f32 to vector<8x128xf32>
    %265 = arith.addf %263, %264 : vector<8x128xf32>
    %266 = arith.mulf %255, %193 : vector<8x128xf32>
    %267 = arith.mulf %247, %257 : vector<8x128xf32>
    %268 = arith.addf %266, %267 : vector<8x128xf32>
    %269 = math.tanh %268 : vector<8x128xf32>
    %270 = arith.mulf %265, %269 : vector<8x128xf32>
    %271 = tpu.concatenate %270, %229 in 1 : vector<8x128xf32>, vector<8x128xf32> -> vector<8x256xf32>
    %cst_91 = arith.constant dense<0.000000e+00> : vector<8x512xf32>
    %272 = tpu.matmul %271, %1, %cst_91 {dimension_numbers = #tpu.dot_dimension_numbers<[1], [0], [0], [1], [0, 0, 1, 1], [], []>} : vector<8x256xf32>, vector<256x512xf32>, vector<8x512xf32> -> vector<8x512xf32>
    %273 = arith.addf %272, %7 : vector<8x512xf32>
    %274 = vector.extract_strided_slice %273 {offsets = [0, 0], sizes = [8, 128], strides = [1, 1]} : vector<8x512xf32> to vector<8x128xf32>
    %cst_92 = arith.constant 5.000000e-01 : f32
    %275 = vector.broadcast %cst_92 : f32 to vector<8x128xf32>
    %276 = arith.mulf %275, %274 : vector<8x128xf32>
    %277 = math.tanh %276 : vector<8x128xf32>
    %cst_93 = arith.constant 5.000000e-01 : f32
    %278 = vector.broadcast %cst_93 : f32 to vector<8x128xf32>
    %279 = arith.mulf %278, %277 : vector<8x128xf32>
    %cst_94 = arith.constant 5.000000e-01 : f32
    %280 = vector.broadcast %cst_94 : f32 to vector<8x128xf32>
    %281 = arith.addf %279, %280 : vector<8x128xf32>
    %282 = vector.extract_strided_slice %273 {offsets = [0, 128], sizes = [8, 128], strides = [1, 1]} : vector<8x512xf32> to vector<8x128xf32>
    %cst_95 = arith.constant 5.000000e-01 : f32
    %283 = vector.broadcast %cst_95 : f32 to vector<8x128xf32>
    %284 = arith.mulf %283, %282 : vector<8x128xf32>
    %285 = math.tanh %284 : vector<8x128xf32>
    %cst_96 = arith.constant 5.000000e-01 : f32
    %286 = vector.broadcast %cst_96 : f32 to vector<8x128xf32>
    %287 = arith.mulf %286, %285 : vector<8x128xf32>
    %cst_97 = arith.constant 5.000000e-01 : f32
    %288 = vector.broadcast %cst_97 : f32 to vector<8x128xf32>
    %289 = arith.addf %287, %288 : vector<8x128xf32>
    %290 = vector.extract_strided_slice %273 {offsets = [0, 256], sizes = [8, 128], strides = [1, 1]} : vector<8x512xf32> to vector<8x128xf32>
    %291 = math.tanh %290 : vector<8x128xf32>
    %292 = vector.extract_strided_slice %273 {offsets = [0, 384], sizes = [8, 128], strides = [1, 1]} : vector<8x512xf32> to vector<8x128xf32>
    %cst_98 = arith.constant 5.000000e-01 : f32
    %293 = vector.broadcast %cst_98 : f32 to vector<8x128xf32>
    %294 = arith.mulf %293, %292 : vector<8x128xf32>
    %295 = math.tanh %294 : vector<8x128xf32>
    %cst_99 = arith.constant 5.000000e-01 : f32
    %296 = vector.broadcast %cst_99 : f32 to vector<8x128xf32>
    %297 = arith.mulf %296, %295 : vector<8x128xf32>
    %cst_100 = arith.constant 5.000000e-01 : f32
    %298 = vector.broadcast %cst_100 : f32 to vector<8x128xf32>
    %299 = arith.addf %297, %298 : vector<8x128xf32>
    %300 = arith.mulf %289, %227 : vector<8x128xf32>
    %301 = arith.mulf %281, %291 : vector<8x128xf32>
    %302 = arith.addf %300, %301 : vector<8x128xf32>
    %303 = math.tanh %302 : vector<8x128xf32>
    %304 = arith.mulf %299, %303 : vector<8x128xf32>
    %305 = arith.index_cast %c3_i32 : i32 to index
    %c0_101 = arith.constant 0 : index
    %c0_102 = arith.constant 0 : index
    %306 = vector.load %arg8[%305, %c0_101, %c0_102] : memref<8x8x128xf32, #tpu.memory_space<vmem>>, vector<1x8x128xf32>
    %307 = vector.shape_cast %306 : vector<1x8x128xf32> to vector<8x128xf32>
    %308 = vector.shape_cast %304 : vector<8x128xf32> to vector<1x8x128xf32>
    tpu.vector_store %arg8[%305, %c0_101, %c0_102], %308 {strides = array<i32>} : memref<8x8x128xf32, #tpu.memory_space<vmem>>, vector<1x8x128xf32>,
    %c4_i32 = arith.constant 4 : i32
    %309 = arith.index_cast %c4_i32 : i32 to index
    %c0_103 = arith.constant 0 : index
    %c0_104 = arith.constant 0 : index
    %310 = vector.load %arg0[%309, %c0_103, %c0_104] : memref<8x8x128xf32, #tpu.memory_space<vmem>>, vector<1x8x128xf32>
    %311 = vector.shape_cast %310 : vector<1x8x128xf32> to vector<8x128xf32>
    %312 = tpu.concatenate %311, %270 in 1 : vector<8x128xf32>, vector<8x128xf32> -> vector<8x256xf32>
    %cst_105 = arith.constant dense<0.000000e+00> : vector<8x512xf32>
    %313 = tpu.matmul %312, %0, %cst_105 {dimension_numbers = #tpu.dot_dimension_numbers<[1], [0], [0], [1], [0, 0, 1, 1], [], []>} : vector<8x256xf32>, vector<256x512xf32>, vector<8x512xf32> -> vector<8x512xf32>
    %314 = arith.addf %313, %4 : vector<8x512xf32>
    %315 = vector.extract_strided_slice %314 {offsets = [0, 0], sizes = [8, 128], strides = [1, 1]} : vector<8x512xf32> to vector<8x128xf32>
    %cst_106 = arith.constant 5.000000e-01 : f32
    %316 = vector.broadcast %cst_106 : f32 to vector<8x128xf32>
    %317 = arith.mulf %316, %315 : vector<8x128xf32>
    %318 = math.tanh %317 : vector<8x128xf32>
    %cst_107 = arith.constant 5.000000e-01 : f32
    %319 = vector.broadcast %cst_107 : f32 to vector<8x128xf32>
    %320 = arith.mulf %319, %318 : vector<8x128xf32>
    %cst_108 = arith.constant 5.000000e-01 : f32
    %321 = vector.broadcast %cst_108 : f32 to vector<8x128xf32>
    %322 = arith.addf %320, %321 : vector<8x128xf32>
    %323 = vector.extract_strided_slice %314 {offsets = [0, 128], sizes = [8, 128], strides = [1, 1]} : vector<8x512xf32> to vector<8x128xf32>
    %cst_109 = arith.constant 5.000000e-01 : f32
    %324 = vector.broadcast %cst_109 : f32 to vector<8x128xf32>
    %325 = arith.mulf %324, %323 : vector<8x128xf32>
    %326 = math.tanh %325 : vector<8x128xf32>
    %cst_110 = arith.constant 5.000000e-01 : f32
    %327 = vector.broadcast %cst_110 : f32 to vector<8x128xf32>
    %328 = arith.mulf %327, %326 : vector<8x128xf32>
    %cst_111 = arith.constant 5.000000e-01 : f32
    %329 = vector.broadcast %cst_111 : f32 to vector<8x128xf32>
    %330 = arith.addf %328, %329 : vector<8x128xf32>
    %331 = vector.extract_strided_slice %314 {offsets = [0, 256], sizes = [8, 128], strides = [1, 1]} : vector<8x512xf32> to vector<8x128xf32>
    %332 = math.tanh %331 : vector<8x128xf32>
    %333 = vector.extract_strided_slice %314 {offsets = [0, 384], sizes = [8, 128], strides = [1, 1]} : vector<8x512xf32> to vector<8x128xf32>
    %cst_112 = arith.constant 5.000000e-01 : f32
    %334 = vector.broadcast %cst_112 : f32 to vector<8x128xf32>
    %335 = arith.mulf %334, %333 : vector<8x128xf32>
    %336 = math.tanh %335 : vector<8x128xf32>
    %cst_113 = arith.constant 5.000000e-01 : f32
    %337 = vector.broadcast %cst_113 : f32 to vector<8x128xf32>
    %338 = arith.mulf %337, %336 : vector<8x128xf32>
    %cst_114 = arith.constant 5.000000e-01 : f32
    %339 = vector.broadcast %cst_114 : f32 to vector<8x128xf32>
    %340 = arith.addf %338, %339 : vector<8x128xf32>
    %341 = arith.mulf %330, %268 : vector<8x128xf32>
    %342 = arith.mulf %322, %332 : vector<8x128xf32>
    %343 = arith.addf %341, %342 : vector<8x128xf32>
    %344 = math.tanh %343 : vector<8x128xf32>
    %345 = arith.mulf %340, %344 : vector<8x128xf32>
    %346 = tpu.concatenate %345, %304 in 1 : vector<8x128xf32>, vector<8x128xf32> -> vector<8x256xf32>
    %cst_115 = arith.constant dense<0.000000e+00> : vector<8x512xf32>
    %347 = tpu.matmul %346, %1, %cst_115 {dimension_numbers = #tpu.dot_dimension_numbers<[1], [0], [0], [1], [0, 0, 1, 1], [], []>} : vector<8x256xf32>, vector<256x512xf32>, vector<8x512xf32> -> vector<8x512xf32>
    %348 = arith.addf %347, %7 : vector<8x512xf32>
    %349 = vector.extract_strided_slice %348 {offsets = [0, 0], sizes = [8, 128], strides = [1, 1]} : vector<8x512xf32> to vector<8x128xf32>
    %cst_116 = arith.constant 5.000000e-01 : f32
    %350 = vector.broadcast %cst_116 : f32 to vector<8x128xf32>
    %351 = arith.mulf %350, %349 : vector<8x128xf32>
    %352 = math.tanh %351 : vector<8x128xf32>
    %cst_117 = arith.constant 5.000000e-01 : f32
    %353 = vector.broadcast %cst_117 : f32 to vector<8x128xf32>
    %354 = arith.mulf %353, %352 : vector<8x128xf32>
    %cst_118 = arith.constant 5.000000e-01 : f32
    %355 = vector.broadcast %cst_118 : f32 to vector<8x128xf32>
    %356 = arith.addf %354, %355 : vector<8x128xf32>
    %357 = vector.extract_strided_slice %348 {offsets = [0, 128], sizes = [8, 128], strides = [1, 1]} : vector<8x512xf32> to vector<8x128xf32>
    %cst_119 = arith.constant 5.000000e-01 : f32
    %358 = vector.broadcast %cst_119 : f32 to vector<8x128xf32>
    %359 = arith.mulf %358, %357 : vector<8x128xf32>
    %360 = math.tanh %359 : vector<8x128xf32>
    %cst_120 = arith.constant 5.000000e-01 : f32
    %361 = vector.broadcast %cst_120 : f32 to vector<8x128xf32>
    %362 = arith.mulf %361, %360 : vector<8x128xf32>
    %cst_121 = arith.constant 5.000000e-01 : f32
    %363 = vector.broadcast %cst_121 : f32 to vector<8x128xf32>
    %364 = arith.addf %362, %363 : vector<8x128xf32>
    %365 = vector.extract_strided_slice %348 {offsets = [0, 256], sizes = [8, 128], strides = [1, 1]} : vector<8x512xf32> to vector<8x128xf32>
    %366 = math.tanh %365 : vector<8x128xf32>
    %367 = vector.extract_strided_slice %348 {offsets = [0, 384], sizes = [8, 128], strides = [1, 1]} : vector<8x512xf32> to vector<8x128xf32>
    %cst_122 = arith.constant 5.000000e-01 : f32
    %368 = vector.broadcast %cst_122 : f32 to vector<8x128xf32>
    %369 = arith.mulf %368, %367 : vector<8x128xf32>
    %370 = math.tanh %369 : vector<8x128xf32>
    %cst_123 = arith.constant 5.000000e-01 : f32
    %371 = vector.broadcast %cst_123 : f32 to vector<8x128xf32>
    %372 = arith.mulf %371, %370 : vector<8x128xf32>
    %cst_124 = arith.constant 5.000000e-01 : f32
    %373 = vector.broadcast %cst_124 : f32 to vector<8x128xf32>
    %374 = arith.addf %372, %373 : vector<8x128xf32>
    %375 = arith.mulf %364, %302 : vector<8x128xf32>
    %376 = arith.mulf %356, %366 : vector<8x128xf32>
    %377 = arith.addf %375, %376 : vector<8x128xf32>
    %378 = math.tanh %377 : vector<8x128xf32>
    %379 = arith.mulf %374, %378 : vector<8x128xf32>
    %380 = arith.index_cast %c4_i32 : i32 to index
    %c0_125 = arith.constant 0 : index
    %c0_126 = arith.constant 0 : index
    %381 = vector.load %arg8[%380, %c0_125, %c0_126] : memref<8x8x128xf32, #tpu.memory_space<vmem>>, vector<1x8x128xf32>
    %382 = vector.shape_cast %381 : vector<1x8x128xf32> to vector<8x128xf32>
    %383 = vector.shape_cast %379 : vector<8x128xf32> to vector<1x8x128xf32>
    tpu.vector_store %arg8[%380, %c0_125, %c0_126], %383 {strides = array<i32>} : memref<8x8x128xf32, #tpu.memory_space<vmem>>, vector<1x8x128xf32>,
    %c5_i32 = arith.constant 5 : i32
    %384 = arith.index_cast %c5_i32 : i32 to index
    %c0_127 = arith.constant 0 : index
    %c0_128 = arith.constant 0 : index
    %385 = vector.load %arg0[%384, %c0_127, %c0_128] : memref<8x8x128xf32, #tpu.memory_space<vmem>>, vector<1x8x128xf32>
    %386 = vector.shape_cast %385 : vector<1x8x128xf32> to vector<8x128xf32>
    %387 = tpu.concatenate %386, %345 in 1 : vector<8x128xf32>, vector<8x128xf32> -> vector<8x256xf32>
    %cst_129 = arith.constant dense<0.000000e+00> : vector<8x512xf32>
    %388 = tpu.matmul %387, %0, %cst_129 {dimension_numbers = #tpu.dot_dimension_numbers<[1], [0], [0], [1], [0, 0, 1, 1], [], []>} : vector<8x256xf32>, vector<256x512xf32>, vector<8x512xf32> -> vector<8x512xf32>
    %389 = arith.addf %388, %4 : vector<8x512xf32>
    %390 = vector.extract_strided_slice %389 {offsets = [0, 0], sizes = [8, 128], strides = [1, 1]} : vector<8x512xf32> to vector<8x128xf32>
    %cst_130 = arith.constant 5.000000e-01 : f32
    %391 = vector.broadcast %cst_130 : f32 to vector<8x128xf32>
    %392 = arith.mulf %391, %390 : vector<8x128xf32>
    %393 = math.tanh %392 : vector<8x128xf32>
    %cst_131 = arith.constant 5.000000e-01 : f32
    %394 = vector.broadcast %cst_131 : f32 to vector<8x128xf32>
    %395 = arith.mulf %394, %393 : vector<8x128xf32>
    %cst_132 = arith.constant 5.000000e-01 : f32
    %396 = vector.broadcast %cst_132 : f32 to vector<8x128xf32>
    %397 = arith.addf %395, %396 : vector<8x128xf32>
    %398 = vector.extract_strided_slice %389 {offsets = [0, 128], sizes = [8, 128], strides = [1, 1]} : vector<8x512xf32> to vector<8x128xf32>
    %cst_133 = arith.constant 5.000000e-01 : f32
    %399 = vector.broadcast %cst_133 : f32 to vector<8x128xf32>
    %400 = arith.mulf %399, %398 : vector<8x128xf32>
    %401 = math.tanh %400 : vector<8x128xf32>
    %cst_134 = arith.constant 5.000000e-01 : f32
    %402 = vector.broadcast %cst_134 : f32 to vector<8x128xf32>
    %403 = arith.mulf %402, %401 : vector<8x128xf32>
    %cst_135 = arith.constant 5.000000e-01 : f32
    %404 = vector.broadcast %cst_135 : f32 to vector<8x128xf32>
    %405 = arith.addf %403, %404 : vector<8x128xf32>
    %406 = vector.extract_strided_slice %389 {offsets = [0, 256], sizes = [8, 128], strides = [1, 1]} : vector<8x512xf32> to vector<8x128xf32>
    %407 = math.tanh %406 : vector<8x128xf32>
    %408 = vector.extract_strided_slice %389 {offsets = [0, 384], sizes = [8, 128], strides = [1, 1]} : vector<8x512xf32> to vector<8x128xf32>
    %cst_136 = arith.constant 5.000000e-01 : f32
    %409 = vector.broadcast %cst_136 : f32 to vector<8x128xf32>
    %410 = arith.mulf %409, %408 : vector<8x128xf32>
    %411 = math.tanh %410 : vector<8x128xf32>
    %cst_137 = arith.constant 5.000000e-01 : f32
    %412 = vector.broadcast %cst_137 : f32 to vector<8x128xf32>
    %413 = arith.mulf %412, %411 : vector<8x128xf32>
    %cst_138 = arith.constant 5.000000e-01 : f32
    %414 = vector.broadcast %cst_138 : f32 to vector<8x128xf32>
    %415 = arith.addf %413, %414 : vector<8x128xf32>
    %416 = arith.mulf %405, %343 : vector<8x128xf32>
    %417 = arith.mulf %397, %407 : vector<8x128xf32>
    %418 = arith.addf %416, %417 : vector<8x128xf32>
    %419 = math.tanh %418 : vector<8x128xf32>
    %420 = arith.mulf %415, %419 : vector<8x128xf32>
    %421 = tpu.concatenate %420, %379 in 1 : vector<8x128xf32>, vector<8x128xf32> -> vector<8x256xf32>
    %cst_139 = arith.constant dense<0.000000e+00> : vector<8x512xf32>
    %422 = tpu.matmul %421, %1, %cst_139 {dimension_numbers = #tpu.dot_dimension_numbers<[1], [0], [0], [1], [0, 0, 1, 1], [], []>} : vector<8x256xf32>, vector<256x512xf32>, vector<8x512xf32> -> vector<8x512xf32>
    %423 = arith.addf %422, %7 : vector<8x512xf32>
    %424 = vector.extract_strided_slice %423 {offsets = [0, 0], sizes = [8, 128], strides = [1, 1]} : vector<8x512xf32> to vector<8x128xf32>
    %cst_140 = arith.constant 5.000000e-01 : f32
    %425 = vector.broadcast %cst_140 : f32 to vector<8x128xf32>
    %426 = arith.mulf %425, %424 : vector<8x128xf32>
    %427 = math.tanh %426 : vector<8x128xf32>
    %cst_141 = arith.constant 5.000000e-01 : f32
    %428 = vector.broadcast %cst_141 : f32 to vector<8x128xf32>
    %429 = arith.mulf %428, %427 : vector<8x128xf32>
    %cst_142 = arith.constant 5.000000e-01 : f32
    %430 = vector.broadcast %cst_142 : f32 to vector<8x128xf32>
    %431 = arith.addf %429, %430 : vector<8x128xf32>
    %432 = vector.extract_strided_slice %423 {offsets = [0, 128], sizes = [8, 128], strides = [1, 1]} : vector<8x512xf32> to vector<8x128xf32>
    %cst_143 = arith.constant 5.000000e-01 : f32
    %433 = vector.broadcast %cst_143 : f32 to vector<8x128xf32>
    %434 = arith.mulf %433, %432 : vector<8x128xf32>
    %435 = math.tanh %434 : vector<8x128xf32>
    %cst_144 = arith.constant 5.000000e-01 : f32
    %436 = vector.broadcast %cst_144 : f32 to vector<8x128xf32>
    %437 = arith.mulf %436, %435 : vector<8x128xf32>
    %cst_145 = arith.constant 5.000000e-01 : f32
    %438 = vector.broadcast %cst_145 : f32 to vector<8x128xf32>
    %439 = arith.addf %437, %438 : vector<8x128xf32>
    %440 = vector.extract_strided_slice %423 {offsets = [0, 256], sizes = [8, 128], strides = [1, 1]} : vector<8x512xf32> to vector<8x128xf32>
    %441 = math.tanh %440 : vector<8x128xf32>
    %442 = vector.extract_strided_slice %423 {offsets = [0, 384], sizes = [8, 128], strides = [1, 1]} : vector<8x512xf32> to vector<8x128xf32>
    %cst_146 = arith.constant 5.000000e-01 : f32
    %443 = vector.broadcast %cst_146 : f32 to vector<8x128xf32>
    %444 = arith.mulf %443, %442 : vector<8x128xf32>
    %445 = math.tanh %444 : vector<8x128xf32>
    %cst_147 = arith.constant 5.000000e-01 : f32
    %446 = vector.broadcast %cst_147 : f32 to vector<8x128xf32>
    %447 = arith.mulf %446, %445 : vector<8x128xf32>
    %cst_148 = arith.constant 5.000000e-01 : f32
    %448 = vector.broadcast %cst_148 : f32 to vector<8x128xf32>
    %449 = arith.addf %447, %448 : vector<8x128xf32>
    %450 = arith.mulf %439, %377 : vector<8x128xf32>
    %451 = arith.mulf %431, %441 : vector<8x128xf32>
    %452 = arith.addf %450, %451 : vector<8x128xf32>
    %453 = math.tanh %452 : vector<8x128xf32>
    %454 = arith.mulf %449, %453 : vector<8x128xf32>
    %455 = arith.index_cast %c5_i32 : i32 to index
    %c0_149 = arith.constant 0 : index
    %c0_150 = arith.constant 0 : index
    %456 = vector.load %arg8[%455, %c0_149, %c0_150] : memref<8x8x128xf32, #tpu.memory_space<vmem>>, vector<1x8x128xf32>
    %457 = vector.shape_cast %456 : vector<1x8x128xf32> to vector<8x128xf32>
    %458 = vector.shape_cast %454 : vector<8x128xf32> to vector<1x8x128xf32>
    tpu.vector_store %arg8[%455, %c0_149, %c0_150], %458 {strides = array<i32>} : memref<8x8x128xf32, #tpu.memory_space<vmem>>, vector<1x8x128xf32>,
    %c6_i32 = arith.constant 6 : i32
    %459 = arith.index_cast %c6_i32 : i32 to index
    %c0_151 = arith.constant 0 : index
    %c0_152 = arith.constant 0 : index
    %460 = vector.load %arg0[%459, %c0_151, %c0_152] : memref<8x8x128xf32, #tpu.memory_space<vmem>>, vector<1x8x128xf32>
    %461 = vector.shape_cast %460 : vector<1x8x128xf32> to vector<8x128xf32>
    %462 = tpu.concatenate %461, %420 in 1 : vector<8x128xf32>, vector<8x128xf32> -> vector<8x256xf32>
    %cst_153 = arith.constant dense<0.000000e+00> : vector<8x512xf32>
    %463 = tpu.matmul %462, %0, %cst_153 {dimension_numbers = #tpu.dot_dimension_numbers<[1], [0], [0], [1], [0, 0, 1, 1], [], []>} : vector<8x256xf32>, vector<256x512xf32>, vector<8x512xf32> -> vector<8x512xf32>
    %464 = arith.addf %463, %4 : vector<8x512xf32>
    %465 = vector.extract_strided_slice %464 {offsets = [0, 0], sizes = [8, 128], strides = [1, 1]} : vector<8x512xf32> to vector<8x128xf32>
    %cst_154 = arith.constant 5.000000e-01 : f32
    %466 = vector.broadcast %cst_154 : f32 to vector<8x128xf32>
    %467 = arith.mulf %466, %465 : vector<8x128xf32>
    %468 = math.tanh %467 : vector<8x128xf32>
    %cst_155 = arith.constant 5.000000e-01 : f32
    %469 = vector.broadcast %cst_155 : f32 to vector<8x128xf32>
    %470 = arith.mulf %469, %468 : vector<8x128xf32>
    %cst_156 = arith.constant 5.000000e-01 : f32
    %471 = vector.broadcast %cst_156 : f32 to vector<8x128xf32>
    %472 = arith.addf %470, %471 : vector<8x128xf32>
    %473 = vector.extract_strided_slice %464 {offsets = [0, 128], sizes = [8, 128], strides = [1, 1]} : vector<8x512xf32> to vector<8x128xf32>
    %cst_157 = arith.constant 5.000000e-01 : f32
    %474 = vector.broadcast %cst_157 : f32 to vector<8x128xf32>
    %475 = arith.mulf %474, %473 : vector<8x128xf32>
    %476 = math.tanh %475 : vector<8x128xf32>
    %cst_158 = arith.constant 5.000000e-01 : f32
    %477 = vector.broadcast %cst_158 : f32 to vector<8x128xf32>
    %478 = arith.mulf %477, %476 : vector<8x128xf32>
    %cst_159 = arith.constant 5.000000e-01 : f32
    %479 = vector.broadcast %cst_159 : f32 to vector<8x128xf32>
    %480 = arith.addf %478, %479 : vector<8x128xf32>
    %481 = vector.extract_strided_slice %464 {offsets = [0, 256], sizes = [8, 128], strides = [1, 1]} : vector<8x512xf32> to vector<8x128xf32>
    %482 = math.tanh %481 : vector<8x128xf32>
    %483 = vector.extract_strided_slice %464 {offsets = [0, 384], sizes = [8, 128], strides = [1, 1]} : vector<8x512xf32> to vector<8x128xf32>
    %cst_160 = arith.constant 5.000000e-01 : f32
    %484 = vector.broadcast %cst_160 : f32 to vector<8x128xf32>
    %485 = arith.mulf %484, %483 : vector<8x128xf32>
    %486 = math.tanh %485 : vector<8x128xf32>
    %cst_161 = arith.constant 5.000000e-01 : f32
    %487 = vector.broadcast %cst_161 : f32 to vector<8x128xf32>
    %488 = arith.mulf %487, %486 : vector<8x128xf32>
    %cst_162 = arith.constant 5.000000e-01 : f32
    %489 = vector.broadcast %cst_162 : f32 to vector<8x128xf32>
    %490 = arith.addf %488, %489 : vector<8x128xf32>
    %491 = arith.mulf %480, %418 : vector<8x128xf32>
    %492 = arith.mulf %472, %482 : vector<8x128xf32>
    %493 = arith.addf %491, %492 : vector<8x128xf32>
    %494 = math.tanh %493 : vector<8x128xf32>
    %495 = arith.mulf %490, %494 : vector<8x128xf32>
    %496 = tpu.concatenate %495, %454 in 1 : vector<8x128xf32>, vector<8x128xf32> -> vector<8x256xf32>
    %cst_163 = arith.constant dense<0.000000e+00> : vector<8x512xf32>
    %497 = tpu.matmul %496, %1, %cst_163 {dimension_numbers = #tpu.dot_dimension_numbers<[1], [0], [0], [1], [0, 0, 1, 1], [], []>} : vector<8x256xf32>, vector<256x512xf32>, vector<8x512xf32> -> vector<8x512xf32>
    %498 = arith.addf %497, %7 : vector<8x512xf32>
    %499 = vector.extract_strided_slice %498 {offsets = [0, 0], sizes = [8, 128], strides = [1, 1]} : vector<8x512xf32> to vector<8x128xf32>
    %cst_164 = arith.constant 5.000000e-01 : f32
    %500 = vector.broadcast %cst_164 : f32 to vector<8x128xf32>
    %501 = arith.mulf %500, %499 : vector<8x128xf32>
    %502 = math.tanh %501 : vector<8x128xf32>
    %cst_165 = arith.constant 5.000000e-01 : f32
    %503 = vector.broadcast %cst_165 : f32 to vector<8x128xf32>
    %504 = arith.mulf %503, %502 : vector<8x128xf32>
    %cst_166 = arith.constant 5.000000e-01 : f32
    %505 = vector.broadcast %cst_166 : f32 to vector<8x128xf32>
    %506 = arith.addf %504, %505 : vector<8x128xf32>
    %507 = vector.extract_strided_slice %498 {offsets = [0, 128], sizes = [8, 128], strides = [1, 1]} : vector<8x512xf32> to vector<8x128xf32>
    %cst_167 = arith.constant 5.000000e-01 : f32
    %508 = vector.broadcast %cst_167 : f32 to vector<8x128xf32>
    %509 = arith.mulf %508, %507 : vector<8x128xf32>
    %510 = math.tanh %509 : vector<8x128xf32>
    %cst_168 = arith.constant 5.000000e-01 : f32
    %511 = vector.broadcast %cst_168 : f32 to vector<8x128xf32>
    %512 = arith.mulf %511, %510 : vector<8x128xf32>
    %cst_169 = arith.constant 5.000000e-01 : f32
    %513 = vector.broadcast %cst_169 : f32 to vector<8x128xf32>
    %514 = arith.addf %512, %513 : vector<8x128xf32>
    %515 = vector.extract_strided_slice %498 {offsets = [0, 256], sizes = [8, 128], strides = [1, 1]} : vector<8x512xf32> to vector<8x128xf32>
    %516 = math.tanh %515 : vector<8x128xf32>
    %517 = vector.extract_strided_slice %498 {offsets = [0, 384], sizes = [8, 128], strides = [1, 1]} : vector<8x512xf32> to vector<8x128xf32>
    %cst_170 = arith.constant 5.000000e-01 : f32
    %518 = vector.broadcast %cst_170 : f32 to vector<8x128xf32>
    %519 = arith.mulf %518, %517 : vector<8x128xf32>
    %520 = math.tanh %519 : vector<8x128xf32>
    %cst_171 = arith.constant 5.000000e-01 : f32
    %521 = vector.broadcast %cst_171 : f32 to vector<8x128xf32>
    %522 = arith.mulf %521, %520 : vector<8x128xf32>
    %cst_172 = arith.constant 5.000000e-01 : f32
    %523 = vector.broadcast %cst_172 : f32 to vector<8x128xf32>
    %524 = arith.addf %522, %523 : vector<8x128xf32>
    %525 = arith.mulf %514, %452 : vector<8x128xf32>
    %526 = arith.mulf %506, %516 : vector<8x128xf32>
    %527 = arith.addf %525, %526 : vector<8x128xf32>
    %528 = math.tanh %527 : vector<8x128xf32>
    %529 = arith.mulf %524, %528 : vector<8x128xf32>
    %530 = arith.index_cast %c6_i32 : i32 to index
    %c0_173 = arith.constant 0 : index
    %c0_174 = arith.constant 0 : index
    %531 = vector.load %arg8[%530, %c0_173, %c0_174] : memref<8x8x128xf32, #tpu.memory_space<vmem>>, vector<1x8x128xf32>
    %532 = vector.shape_cast %531 : vector<1x8x128xf32> to vector<8x128xf32>
    %533 = vector.shape_cast %529 : vector<8x128xf32> to vector<1x8x128xf32>
    tpu.vector_store %arg8[%530, %c0_173, %c0_174], %533 {strides = array<i32>} : memref<8x8x128xf32, #tpu.memory_space<vmem>>, vector<1x8x128xf32>,
    %c7_i32 = arith.constant 7 : i32
    %534 = arith.index_cast %c7_i32 : i32 to index
    %c0_175 = arith.constant 0 : index
    %c0_176 = arith.constant 0 : index
    %535 = vector.load %arg0[%534, %c0_175, %c0_176] : memref<8x8x128xf32, #tpu.memory_space<vmem>>, vector<1x8x128xf32>
    %536 = vector.shape_cast %535 : vector<1x8x128xf32> to vector<8x128xf32>
    %537 = tpu.concatenate %536, %495 in 1 : vector<8x128xf32>, vector<8x128xf32> -> vector<8x256xf32>
    %cst_177 = arith.constant dense<0.000000e+00> : vector<8x512xf32>
    %538 = tpu.matmul %537, %0, %cst_177 {dimension_numbers = #tpu.dot_dimension_numbers<[1], [0], [0], [1], [0, 0, 1, 1], [], []>} : vector<8x256xf32>, vector<256x512xf32>, vector<8x512xf32> -> vector<8x512xf32>
    %539 = arith.addf %538, %4 : vector<8x512xf32>
    %540 = vector.extract_strided_slice %539 {offsets = [0, 0], sizes = [8, 128], strides = [1, 1]} : vector<8x512xf32> to vector<8x128xf32>
    %cst_178 = arith.constant 5.000000e-01 : f32
    %541 = vector.broadcast %cst_178 : f32 to vector<8x128xf32>
    %542 = arith.mulf %541, %540 : vector<8x128xf32>
    %543 = math.tanh %542 : vector<8x128xf32>
    %cst_179 = arith.constant 5.000000e-01 : f32
    %544 = vector.broadcast %cst_179 : f32 to vector<8x128xf32>
    %545 = arith.mulf %544, %543 : vector<8x128xf32>
    %cst_180 = arith.constant 5.000000e-01 : f32
    %546 = vector.broadcast %cst_180 : f32 to vector<8x128xf32>
    %547 = arith.addf %545, %546 : vector<8x128xf32>
    %548 = vector.extract_strided_slice %539 {offsets = [0, 128], sizes = [8, 128], strides = [1, 1]} : vector<8x512xf32> to vector<8x128xf32>
    %cst_181 = arith.constant 5.000000e-01 : f32
    %549 = vector.broadcast %cst_181 : f32 to vector<8x128xf32>
    %550 = arith.mulf %549, %548 : vector<8x128xf32>
    %551 = math.tanh %550 : vector<8x128xf32>
    %cst_182 = arith.constant 5.000000e-01 : f32
    %552 = vector.broadcast %cst_182 : f32 to vector<8x128xf32>
    %553 = arith.mulf %552, %551 : vector<8x128xf32>
    %cst_183 = arith.constant 5.000000e-01 : f32
    %554 = vector.broadcast %cst_183 : f32 to vector<8x128xf32>
    %555 = arith.addf %553, %554 : vector<8x128xf32>
    %556 = vector.extract_strided_slice %539 {offsets = [0, 256], sizes = [8, 128], strides = [1, 1]} : vector<8x512xf32> to vector<8x128xf32>
    %557 = math.tanh %556 : vector<8x128xf32>
    %558 = vector.extract_strided_slice %539 {offsets = [0, 384], sizes = [8, 128], strides = [1, 1]} : vector<8x512xf32> to vector<8x128xf32>
    %cst_184 = arith.constant 5.000000e-01 : f32
    %559 = vector.broadcast %cst_184 : f32 to vector<8x128xf32>
    %560 = arith.mulf %559, %558 : vector<8x128xf32>
    %561 = math.tanh %560 : vector<8x128xf32>
    %cst_185 = arith.constant 5.000000e-01 : f32
    %562 = vector.broadcast %cst_185 : f32 to vector<8x128xf32>
    %563 = arith.mulf %562, %561 : vector<8x128xf32>
    %cst_186 = arith.constant 5.000000e-01 : f32
    %564 = vector.broadcast %cst_186 : f32 to vector<8x128xf32>
    %565 = arith.addf %563, %564 : vector<8x128xf32>
    %566 = arith.mulf %555, %493 : vector<8x128xf32>
    %567 = arith.mulf %547, %557 : vector<8x128xf32>
    %568 = arith.addf %566, %567 : vector<8x128xf32>
    %569 = math.tanh %568 : vector<8x128xf32>
    %570 = arith.mulf %565, %569 : vector<8x128xf32>
    %571 = tpu.concatenate %570, %529 in 1 : vector<8x128xf32>, vector<8x128xf32> -> vector<8x256xf32>
    %cst_187 = arith.constant dense<0.000000e+00> : vector<8x512xf32>
    %572 = tpu.matmul %571, %1, %cst_187 {dimension_numbers = #tpu.dot_dimension_numbers<[1], [0], [0], [1], [0, 0, 1, 1], [], []>} : vector<8x256xf32>, vector<256x512xf32>, vector<8x512xf32> -> vector<8x512xf32>
    %573 = arith.addf %572, %7 : vector<8x512xf32>
    %574 = vector.extract_strided_slice %573 {offsets = [0, 0], sizes = [8, 128], strides = [1, 1]} : vector<8x512xf32> to vector<8x128xf32>
    %cst_188 = arith.constant 5.000000e-01 : f32
    %575 = vector.broadcast %cst_188 : f32 to vector<8x128xf32>
    %576 = arith.mulf %575, %574 : vector<8x128xf32>
    %577 = math.tanh %576 : vector<8x128xf32>
    %cst_189 = arith.constant 5.000000e-01 : f32
    %578 = vector.broadcast %cst_189 : f32 to vector<8x128xf32>
    %579 = arith.mulf %578, %577 : vector<8x128xf32>
    %cst_190 = arith.constant 5.000000e-01 : f32
    %580 = vector.broadcast %cst_190 : f32 to vector<8x128xf32>
    %581 = arith.addf %579, %580 : vector<8x128xf32>
    %582 = vector.extract_strided_slice %573 {offsets = [0, 128], sizes = [8, 128], strides = [1, 1]} : vector<8x512xf32> to vector<8x128xf32>
    %cst_191 = arith.constant 5.000000e-01 : f32
    %583 = vector.broadcast %cst_191 : f32 to vector<8x128xf32>
    %584 = arith.mulf %583, %582 : vector<8x128xf32>
    %585 = math.tanh %584 : vector<8x128xf32>
    %cst_192 = arith.constant 5.000000e-01 : f32
    %586 = vector.broadcast %cst_192 : f32 to vector<8x128xf32>
    %587 = arith.mulf %586, %585 : vector<8x128xf32>
    %cst_193 = arith.constant 5.000000e-01 : f32
    %588 = vector.broadcast %cst_193 : f32 to vector<8x128xf32>
    %589 = arith.addf %587, %588 : vector<8x128xf32>
    %590 = vector.extract_strided_slice %573 {offsets = [0, 256], sizes = [8, 128], strides = [1, 1]} : vector<8x512xf32> to vector<8x128xf32>
    %591 = math.tanh %590 : vector<8x128xf32>
    %592 = vector.extract_strided_slice %573 {offsets = [0, 384], sizes = [8, 128], strides = [1, 1]} : vector<8x512xf32> to vector<8x128xf32>
    %cst_194 = arith.constant 5.000000e-01 : f32
    %593 = vector.broadcast %cst_194 : f32 to vector<8x128xf32>
    %594 = arith.mulf %593, %592 : vector<8x128xf32>
    %595 = math.tanh %594 : vector<8x128xf32>
    %cst_195 = arith.constant 5.000000e-01 : f32
    %596 = vector.broadcast %cst_195 : f32 to vector<8x128xf32>
    %597 = arith.mulf %596, %595 : vector<8x128xf32>
    %cst_196 = arith.constant 5.000000e-01 : f32
    %598 = vector.broadcast %cst_196 : f32 to vector<8x128xf32>
    %599 = arith.addf %597, %598 : vector<8x128xf32>
    %600 = arith.mulf %589, %527 : vector<8x128xf32>
    %601 = arith.mulf %581, %591 : vector<8x128xf32>
    %602 = arith.addf %600, %601 : vector<8x128xf32>
    %603 = math.tanh %602 : vector<8x128xf32>
    %604 = arith.mulf %599, %603 : vector<8x128xf32>
    %605 = arith.index_cast %c7_i32 : i32 to index
    %c0_197 = arith.constant 0 : index
    %c0_198 = arith.constant 0 : index
    %606 = vector.load %arg8[%605, %c0_197, %c0_198] : memref<8x8x128xf32, #tpu.memory_space<vmem>>, vector<1x8x128xf32>
    %607 = vector.shape_cast %606 : vector<1x8x128xf32> to vector<8x128xf32>
    %608 = vector.shape_cast %604 : vector<8x128xf32> to vector<1x8x128xf32>
    tpu.vector_store %arg8[%605, %c0_197, %c0_198], %608 {strides = array<i32>} : memref<8x8x128xf32, #tpu.memory_space<vmem>>, vector<1x8x128xf32>,
    %c8_i32 = arith.constant 8 : i32
    %c0_199 = arith.constant 0 : index
    %c0_200 = arith.constant 0 : index
    %c0_201 = arith.constant 0 : index
    %609 = vector.load %arg8[%c0_199, %c0_200, %c0_201] : memref<8x8x128xf32, #tpu.memory_space<vmem>>, vector<8x8x128xf32>
    %610 = vector.shape_cast %609 : vector<8x8x128xf32> to vector<64x128xf32>
    %c0_202 = arith.constant 0 : index
    %c0_203 = arith.constant 0 : index
    %611 = vector.load %arg5[%c0_202, %c0_203] : memref<128x128xf32, #tpu.memory_space<vmem>>, vector<128x128xf32>
    %cst_204 = arith.constant dense<0.000000e+00> : vector<64x128xf32>
    %612 = tpu.matmul %610, %611, %cst_204 {dimension_numbers = #tpu.dot_dimension_numbers<[1], [0], [0], [1], [0, 0, 1, 1], [], []>} : vector<64x128xf32>, vector<128x128xf32>, vector<64x128xf32> -> vector<64x128xf32>
    %c0_205 = arith.constant 0 : index
    %c0_206 = arith.constant 0 : index
    %613 = vector.load %arg6[%c0_205, %c0_206] : memref<1x128xf32, #tpu.memory_space<vmem>>, vector<1x128xf32>
    %614 = vector.broadcast %613 : vector<1x128xf32> to vector<64x128xf32>
    %615 = arith.addf %612, %614 : vector<64x128xf32>
    %616 = vector.shape_cast %615 : vector<64x128xf32> to vector<8x8x128xf32>
    %c0_207 = arith.constant 0 : index
    %c0_208 = arith.constant 0 : index
    %c0_209 = arith.constant 0 : index
    %617 = vector.load %arg7[%c0_207, %c0_208, %c0_209] : memref<8x8x128xf32, #tpu.memory_space<vmem>>, vector<8x8x128xf32>
    tpu.vector_store %arg7[%c0_207, %c0_208, %c0_209], %616 {strides = array<i32>} : memref<8x8x128xf32, #tpu.memory_space<vmem>>, vector<8x8x128xf32>,
    return
  }
}

</mosaic_0001>

<llo_original>
// kernel: tpu_custom_call.1
$region0: #{tpu_custom_call.1}
  #allocation0 [shape = 'u32[]', space=smem, size = 0x4, offset = 0x4, fixed_abs, tag = 'smem constant byte address 0x4 - core index']
  #allocation1 [shape = 'u32[144,128]{1,0:T(1,128)}', space=vmem, size = 0x12000, scoped, tag = 'internal scratch']
  #allocation2 [shape = 'f32[8,8,128]{2,1,0:T(8,128)}', space=vmem, size = 0x8000, scoped, tag = 'scratch operand']
  %s0 = inlined_call_operand.hbm [shape: f32[8,8,128], index: 0, kind: input, shape index: {}]
  %s1 = inlined_call_operand.hbm [shape: f32[256,512], index: 1, kind: input, shape index: {}]
  %s2 = inlined_call_operand.vmem [shape: f32[1,512], index: 2, kind: input, shape index: {}]
  %s3 = inlined_call_operand.hbm [shape: f32[256,512], index: 3, kind: input, shape index: {}]
  %s4 = inlined_call_operand.vmem [shape: f32[1,512], index: 4, kind: input, shape index: {}]
  %s5 = inlined_call_operand.hbm [shape: f32[128,128], index: 5, kind: input, shape index: {}]
  %s6 = inlined_call_operand.vmem [shape: f32[1,128], index: 6, kind: input, shape index: {}]
  %s7 = inlined_call_operand.hbm [shape: f32[8,8,128], index: 7, kind: output, shape index: {}]
  %s8 = sld [smem:[#allocation0]]
  $region54: #{tpu_custom_call.1} parent=0
    _
  %s10 = ssub.s32 1, %s8
  %s11 = scalar_select 0, %s10, %s8
  $region1: #{tpu_custom_call.1} parent=0
    #allocation3 [shape = 'u8[32768]{0}', space=vmem, size = 0x8000, scoped, tag = 'input window, operand 0, single buffered']
    #allocation4 [shape = 's32[1]{0}', space=sflag, size = 0x4, scoped, tag = 'scoped memory for tpu_custom_call.1']
    #allocation5 [shape = 's32[1]{0}', space=sflag, size = 0x4, scoped, tag = 'scoped memory for tpu_custom_call.1']
    #allocation6 [shape = 'u8[524288]{0}', space=vmem, size = 0x80000, scoped, tag = 'input window, operand 1, single buffered']
    #allocation7 [shape = 's32[1]{0}', space=sflag, size = 0x4, scoped, tag = 'scoped memory for tpu_custom_call.1']
    #allocation8 [shape = 'u8[524288]{0}', space=vmem, size = 0x80000, scoped, tag = 'input window, operand 3, single buffered']
    #allocation9 [shape = 'u8[65536]{0}', space=vmem, size = 0x10000, scoped, tag = 'input window, operand 5, single buffered']
    #allocation10 [shape = 's32[1]{0}', space=sflag, size = 0x4, scoped, tag = 'scoped memory for tpu_custom_call.1']
    #allocation11 [shape = 'u8[32768]{0}', space=vmem, size = 0x8000, scoped, tag = 'output window, operand 0, single buffered']
    %12 = vsyncpa [#allocation4], 0
    %13 = vsyncpa [#allocation7], 0
    %14 = vsyncpa [#allocation10], 0
    %15 = vsyncpa [#allocation5], 0
    // Predicated region
    $region2: #{tpu_custom_call.1} parent=1 // pred_check
      _
    $region3: #{tpu_custom_call.1} parent=1 // pred_check_branch
      %17 = sbr.rel (0) target = $region5
    $region4: #{tpu_custom_call.1} parent=1 // pred_region
      %s19 = ssub.s32 1024, 1024
      %20 = vsyncadd [#allocation4], %s19
      %s21 = sshll.u32 [#allocation3], 4
      %s22 = int_to_ptr.vmem [resolvable:$true] %s21
      %27 = dma.hbm_to_vmem [thread:$0]  %s0, 1024, %s22, [#allocation4], 128, 128, 8
    $region5: #{tpu_custom_call.1} parent=1 // pred_fallthru
      _
    // Predicated region
    $region6: #{tpu_custom_call.1} parent=1 // pred_check
      _
    $region7: #{tpu_custom_call.1} parent=1 // pred_check_branch
      %29 = sbr.rel (0) target = $region9
    $region8: #{tpu_custom_call.1} parent=1 // pred_region
      %s31 = ssub.s32 16384, 16384
      %32 = vsyncadd [#allocation7], %s31
      %s33 = sshll.u32 [#allocation6], 4
      %s34 = int_to_ptr.vmem [resolvable:$true] %s33
      %39 = dma.hbm_to_vmem [thread:$0]  %s1, 16384, %s34, [#allocation7], 512, 512, 32
    $region9: #{tpu_custom_call.1} parent=1 // pred_fallthru
      _
    // Predicated region
    $region10: #{tpu_custom_call.1} parent=1 // pred_check
      _
    $region11: #{tpu_custom_call.1} parent=1 // pred_check_branch
      %41 = sbr.rel (0) target = $region13
    $region12: #{tpu_custom_call.1} parent=1 // pred_region
      _
    $region13: #{tpu_custom_call.1} parent=1 // pred_fallthru
      _
    // Predicated region
    $region14: #{tpu_custom_call.1} parent=1 // pred_check
      _
    $region15: #{tpu_custom_call.1} parent=1 // pred_check_branch
      %43 = sbr.rel (0) target = $region17
    $region16: #{tpu_custom_call.1} parent=1 // pred_region
      %s45 = ssub.s32 16384, 16384
      %46 = vsyncadd [#allocation7], %s45
      %s47 = sshll.u32 [#allocation8], 4
      %s48 = int_to_ptr.vmem [resolvable:$true] %s47
      %53 = dma.hbm_to_vmem [thread:$0]  %s3, 16384, %s48, [#allocation7], 512, 512, 32
    $region17: #{tpu_custom_call.1} parent=1 // pred_fallthru
      _
    // Predicated region
    $region18: #{tpu_custom_call.1} parent=1 // pred_check
      _
    $region19: #{tpu_custom_call.1} parent=1 // pred_check_branch
      %55 = sbr.rel (0) target = $region21
    $region20: #{tpu_custom_call.1} parent=1 // pred_region
      _
    $region21: #{tpu_custom_call.1} parent=1 // pred_fallthru
      _
    // Predicated region
    $region22: #{tpu_custom_call.1} parent=1 // pred_check
      _
    $region23: #{tpu_custom_call.1} parent=1 // pred_check_branch
      %57 = sbr.rel (0) target = $region25
    $region24: #{tpu_custom_call.1} parent=1 // pred_region
      %s59 = ssub.s32 2048, 2048
      %60 = vsyncadd [#allocation10], %s59
      %s61 = sshll.u32 [#allocation9], 4
      %s62 = int_to_ptr.vmem [resolvable:$true] %s61
      %67 = dma.hbm_to_vmem [thread:$0]  %s5, 2048, %s62, [#allocation10], 128, 128, 8
    $region25: #{tpu_custom_call.1} parent=1 // pred_fallthru
      _
    // Predicated region
    $region26: #{tpu_custom_call.1} parent=1 // pred_check
      _
    $region27: #{tpu_custom_call.1} parent=1 // pred_check_branch
      %69 = sbr.rel (0) target = $region29
    $region28: #{tpu_custom_call.1} parent=1 // pred_region
      _
    $region29: #{tpu_custom_call.1} parent=1 // pred_fallthru
      _
    // Predicated region
    $region30: #{tpu_custom_call.1} parent=1 // pred_check
      _
    $region31: #{tpu_custom_call.1} parent=1 // pred_check_branch
      %71 = sbr.rel (0) target = $region33
    $region32: #{tpu_custom_call.1} parent=1 // pred_region
      %72 = dma.done [#allocation4], 1024
    $region33: #{tpu_custom_call.1} parent=1 // pred_fallthru
      _
    // Predicated region
    $region34: #{tpu_custom_call.1} parent=1 // pred_check
      _
    $region35: #{tpu_custom_call.1} parent=1 // pred_check_branch
      %74 = sbr.rel (0) target = $region37
    $region36: #{tpu_custom_call.1} parent=1 // pred_region
      %75 = dma.done [#allocation7], 16384
    $region37: #{tpu_custom_call.1} parent=1 // pred_fallthru
      _
    // Predicated region
    $region38: #{tpu_custom_call.1} parent=1 // pred_check
      _
    $region39: #{tpu_custom_call.1} parent=1 // pred_check_branch
      %77 = sbr.rel (0) target = $region41
    $region40: #{tpu_custom_call.1} parent=1 // pred_region
      %78 = dma.done [#allocation7], 16384
    $region41: #{tpu_custom_call.1} parent=1 // pred_fallthru
      _
    // Predicated region
    $region42: #{tpu_custom_call.1} parent=1 // pred_check
      _
    $region43: #{tpu_custom_call.1} parent=1 // pred_check_branch
      %80 = sbr.rel (0) target = $region45
    $region44: #{tpu_custom_call.1} parent=1 // pred_region
      %81 = dma.done [#allocation10], 2048
    $region45: #{tpu_custom_call.1} parent=1 // pred_fallthru
      _
    %v82 = vld [vmem:[#allocation6] sm:$0xff]
    %v83 = vld [vmem:[#allocation6 + $0x8] sm:$0xff]
    %v84 = vld [vmem:[#allocation6 + $0x10] sm:$0xff]
    %v85 = vld [vmem:[#allocation6 + $0x18] sm:$0xff]
    %v86 = vld [vmem:[#allocation6 + $0x20] sm:$0xff]
    %v87 = vld [vmem:[#allocation6 + $0x28] sm:$0xff]
    %v88 = vld [vmem:[#allocation6 + $0x30] sm:$0xff]
    %v89 = vld [vmem:[#allocation6 + $0x38] sm:$0xff]
    %v90 = vld [vmem:[#allocation6 + $0x40] sm:$0xff]
    %v91 = vld [vmem:[#allocation6 + $0x48] sm:$0xff]
    %v92 = vld [vmem:[#allocation6 + $0x50] sm:$0xff]
    %v93 = vld [vmem:[#allocation6 + $0x58] sm:$0xff]
    %v94 = vld [vmem:[#allocation6 + $0x60] sm:$0xff]
    %v95 = vld [vmem:[#allocation6 + $0x68] sm:$0xff]
    %v96 = vld [vmem:[#allocation6 + $0x70] sm:$0xff]
    %v97 = vld [vmem:[#allocation6 + $0x78] sm:$0xff]
    %v98 = vld [vmem:[#allocation6 + $0x80] sm:$0xff]
    %v99 = vld [vmem:[#allocation6 + $0x88] sm:$0xff]
    %v100 = vld [vmem:[#allocation6 + $0x90] sm:$0xff]
    %v101 = vld [vmem:[#allocation6 + $0x98] sm:$0xff]
    %v102 = vld [vmem:[#allocation6 + $0xa0] sm:$0xff]
    %v103 = vld [vmem:[#allocation6 + $0xa8] sm:$0xff]
    %v104 = vld [vmem:[#allocation6 + $0xb0] sm:$0xff]
    %v105 = vld [vmem:[#allocation6 + $0xb8] sm:$0xff]
    %v106 = vld [vmem:[#allocation6 + $0xc0] sm:$0xff]
    %v107 = vld [vmem:[#allocation6 + $0xc8] sm:$0xff]
    %v108 = vld [vmem:[#allocation6 + $0xd0] sm:$0xff]
    %v109 = vld [vmem:[#allocation6 + $0xd8] sm:$0xff]
    %v110 = vld [vmem:[#allocation6 + $0xe0] sm:$0xff]
    %v111 = vld [vmem:[#allocation6 + $0xe8] sm:$0xff]
    %v112 = vld [vmem:[#allocation6 + $0xf0] sm:$0xff]
    %v113 = vld [vmem:[#allocation6 + $0xf8] sm:$0xff]
    %v114 = vld [vmem:[#allocation6 + $0x100] sm:$0xff]
    %v115 = vld [vmem:[#allocation6 + $0x108] sm:$0xff]
    %v116 = vld [vmem:[#allocation6 + $0x110] sm:$0xff]
    %v117 = vld [vmem:[#allocation6 + $0x118] sm:$0xff]
    %v118 = vld [vmem:[#allocation6 + $0x120] sm:$0xff]
    %v119 = vld [vmem:[#allocation6 + $0x128] sm:$0xff]
    %v120 = vld [vmem:[#allocation6 + $0x130] sm:$0xff]
    %v121 = vld [vmem:[#allocation6 + $0x138] sm:$0xff]
    %v122 = vld [vmem:[#allocation6 + $0x140] sm:$0xff]
    %v123 = vld [vmem:[#allocation6 + $0x148] sm:$0xff]
    %v124 = vld [vmem:[#allocation6 + $0x150] sm:$0xff]
    %v125 = vld [vmem:[#allocation6 + $0x158] sm:$0xff]
    %v126 = vld [vmem:[#allocation6 + $0x160] sm:$0xff]
    %v127 = vld [vmem:[#allocation6 + $0x168] sm:$0xff]
    %v128 = vld [vmem:[#allocation6 + $0x170] sm:$0xff]
    %v129 = vld [vmem:[#allocation6 + $0x178] sm:$0xff]
    %v130 = vld [vmem:[#allocation6 + $0x180] sm:$0xff]
    %v131 = vld [vmem:[#allocation6 + $0x188] sm:$0xff]
    %v132 = vld [vmem:[#allocation6 + $0x190] sm:$0xff]
    %v133 = vld [vmem:[#allocation6 + $0x198] sm:$0xff]
    %v134 = vld [vmem:[#allocation6 + $0x1a0] sm:$0xff]
    %v135 = vld [vmem:[#allocation6 + $0x1a8] sm:$0xff]
    %v136 = vld [vmem:[#allocation6 + $0x1b0] sm:$0xff]
    %v137 = vld [vmem:[#allocation6 + $0x1b8] sm:$0xff]
    %v138 = vld [vmem:[#allocation6 + $0x1c0] sm:$0xff]
    %v139 = vld [vmem:[#allocation6 + $0x1c8] sm:$0xff]
    %v140 = vld [vmem:[#allocation6 + $0x1d0] sm:$0xff]
    %v141 = vld [vmem:[#allocation6 + $0x1d8] sm:$0xff]
    %v142 = vld [vmem:[#allocation6 + $0x1e0] sm:$0xff]
    %v143 = vld [vmem:[#allocation6 + $0x1e8] sm:$0xff]
    %v144 = vld [vmem:[#allocation6 + $0x1f0] sm:$0xff]
    %v145 = vld [vmem:[#allocation6 + $0x1f8] sm:$0xff]
    %v146 = vld [vmem:[#allocation6 + $0x200] sm:$0xff]
    %v147 = vld [vmem:[#allocation6 + $0x208] sm:$0xff]
    %v148 = vld [vmem:[#allocation6 + $0x210] sm:$0xff]
    %v149 = vld [vmem:[#allocation6 + $0x218] sm:$0xff]
    %v150 = vld [vmem:[#allocation6 + $0x220] sm:$0xff]
    %v151 = vld [vmem:[#allocation6 + $0x228] sm:$0xff]
    %v152 = vld [vmem:[#allocation6 + $0x230] sm:$0xff]
    %v153 = vld [vmem:[#allocation6 + $0x238] sm:$0xff]
    %v154 = vld [vmem:[#allocation6 + $0x240] sm:$0xff]
    %v155 = vld [vmem:[#allocation6 + $0x248] sm:$0xff]
    %v156 = vld [vmem:[#allocation6 + $0x250] sm:$0xff]
    %v157 = vld [vmem:[#allocation6 + $0x258] sm:$0xff]
    %v158 = vld [vmem:[#allocation6 + $0x260] sm:$0xff]
    %v159 = vld [vmem:[#allocation6 + $0x268] sm:$0xff]
    %v160 = vld [vmem:[#allocation6 + $0x270] sm:$0xff]
    %v161 = vld [vmem:[#allocation6 + $0x278] sm:$0xff]
    %v162 = vld [vmem:[#allocation6 + $0x280] sm:$0xff]
    %v163 = vld [vmem:[#allocation6 + $0x288] sm:$0xff]
    %v164 = vld [vmem:[#allocation6 + $0x290] sm:$0xff]
    %v165 = vld [vmem:[#allocation6 + $0x298] sm:$0xff]
    %v166 = vld [vmem:[#allocation6 + $0x2a0] sm:$0xff]
    %v167 = vld [vmem:[#allocation6 + $0x2a8] sm:$0xff]
    %v168 = vld [vmem:[#allocation6 + $0x2b0] sm:$0xff]
    %v169 = vld [vmem:[#allocation6 + $0x2b8] sm:$0xff]
    %v170 = vld [vmem:[#allocation6 + $0x2c0] sm:$0xff]
    %v171 = vld [vmem:[#allocation6 + $0x2c8] sm:$0xff]
    %v172 = vld [vmem:[#allocation6 + $0x2d0] sm:$0xff]
    %v173 = vld [vmem:[#allocation6 + $0x2d8] sm:$0xff]
    %v174 = vld [vmem:[#allocation6 + $0x2e0] sm:$0xff]
    %v175 = vld [vmem:[#allocation6 + $0x2e8] sm:$0xff]
    %v176 = vld [vmem:[#allocation6 + $0x2f0] sm:$0xff]
    %v177 = vld [vmem:[#allocation6 + $0x2f8] sm:$0xff]
    %v178 = vld [vmem:[#allocation6 + $0x300] sm:$0xff]
    %v179 = vld [vmem:[#allocation6 + $0x308] sm:$0xff]
    %v180 = vld [vmem:[#allocation6 + $0x310] sm:$0xff]
    %v181 = vld [vmem:[#allocation6 + $0x318] sm:$0xff]
    %v182 = vld [vmem:[#allocation6 + $0x320] sm:$0xff]
    %v183 = vld [vmem:[#allocation6 + $0x328] sm:$0xff]
    %v184 = vld [vmem:[#allocation6 + $0x330] sm:$0xff]
    %v185 = vld [vmem:[#allocation6 + $0x338] sm:$0xff]
    %v186 = vld [vmem:[#allocation6 + $0x340] sm:$0xff]
    %v187 = vld [vmem:[#allocation6 + $0x348] sm:$0xff]
    %v188 = vld [vmem:[#allocation6 + $0x350] sm:$0xff]
    %v189 = vld [vmem:[#allocation6 + $0x358] sm:$0xff]
    %v190 = vld [vmem:[#allocation6 + $0x360] sm:$0xff]
    %v191 = vld [vmem:[#allocation6 + $0x368] sm:$0xff]
    %v192 = vld [vmem:[#allocation6 + $0x370] sm:$0xff]
    %v193 = vld [vmem:[#allocation6 + $0x378] sm:$0xff]
    %v194 = vld [vmem:[#allocation6 + $0x380] sm:$0xff]
    %v195 = vld [vmem:[#allocation6 + $0x388] sm:$0xff]
    %v196 = vld [vmem:[#allocation6 + $0x390] sm:$0xff]
    %v197 = vld [vmem:[#allocation6 + $0x398] sm:$0xff]
    %v198 = vld [vmem:[#allocation6 + $0x3a0] sm:$0xff]
    %v199 = vld [vmem:[#allocation6 + $0x3a8] sm:$0xff]
    %v200 = vld [vmem:[#allocation6 + $0x3b0] sm:$0xff]
    %v201 = vld [vmem:[#allocation6 + $0x3b8] sm:$0xff]
    %v202 = vld [vmem:[#allocation6 + $0x3c0] sm:$0xff]
    %v203 = vld [vmem:[#allocation6 + $0x3c8] sm:$0xff]
    %v204 = vld [vmem:[#allocation6 + $0x3d0] sm:$0xff]
    %v205 = vld [vmem:[#allocation6 + $0x3d8] sm:$0xff]
    %v206 = vld [vmem:[#allocation6 + $0x3e0] sm:$0xff]
    %v207 = vld [vmem:[#allocation6 + $0x3e8] sm:$0xff]
    %v208 = vld [vmem:[#allocation6 + $0x3f0] sm:$0xff]
    %v209 = vld [vmem:[#allocation6 + $0x3f8] sm:$0xff]
    %v210 = vld [vmem:[#allocation8] sm:$0xff]
    %v211 = vld [vmem:[#allocation8 + $0x8] sm:$0xff]
    %v212 = vld [vmem:[#allocation8 + $0x10] sm:$0xff]
    %v213 = vld [vmem:[#allocation8 + $0x18] sm:$0xff]
    %v214 = vld [vmem:[#allocation8 + $0x20] sm:$0xff]
    %v215 = vld [vmem:[#allocation8 + $0x28] sm:$0xff]
    %v216 = vld [vmem:[#allocation8 + $0x30] sm:$0xff]
    %v217 = vld [vmem:[#allocation8 + $0x38] sm:$0xff]
    %v218 = vld [vmem:[#allocation8 + $0x40] sm:$0xff]
    %v219 = vld [vmem:[#allocation8 + $0x48] sm:$0xff]
    %v220 = vld [vmem:[#allocation8 + $0x50] sm:$0xff]
    %v221 = vld [vmem:[#allocation8 + $0x58] sm:$0xff]
    %v222 = vld [vmem:[#allocation8 + $0x60] sm:$0xff]
    %v223 = vld [vmem:[#allocation8 + $0x68] sm:$0xff]
    %v224 = vld [vmem:[#allocation8 + $0x70] sm:$0xff]
    %v225 = vld [vmem:[#allocation8 + $0x78] sm:$0xff]
    %v226 = vld [vmem:[#allocation8 + $0x80] sm:$0xff]
    %v227 = vld [vmem:[#allocation8 + $0x88] sm:$0xff]
    %v228 = vld [vmem:[#allocation8 + $0x90] sm:$0xff]
    %v229 = vld [vmem:[#allocation8 + $0x98] sm:$0xff]
    %v230 = vld [vmem:[#allocation8 + $0xa0] sm:$0xff]
    %v231 = vld [vmem:[#allocation8 + $0xa8] sm:$0xff]
    %v232 = vld [vmem:[#allocation8 + $0xb0] sm:$0xff]
    %v233 = vld [vmem:[#allocation8 + $0xb8] sm:$0xff]
    %v234 = vld [vmem:[#allocation8 + $0xc0] sm:$0xff]
    %v235 = vld [vmem:[#allocation8 + $0xc8] sm:$0xff]
    %v236 = vld [vmem:[#allocation8 + $0xd0] sm:$0xff]
    %v237 = vld [vmem:[#allocation8 + $0xd8] sm:$0xff]
    %v238 = vld [vmem:[#allocation8 + $0xe0] sm:$0xff]
    %v239 = vld [vmem:[#allocation8 + $0xe8] sm:$0xff]
    %v240 = vld [vmem:[#allocation8 + $0xf0] sm:$0xff]
    %v241 = vld [vmem:[#allocation8 + $0xf8] sm:$0xff]
    %v242 = vld [vmem:[#allocation8 + $0x100] sm:$0xff]
    %v243 = vld [vmem:[#allocation8 + $0x108] sm:$0xff]
    %v244 = vld [vmem:[#allocation8 + $0x110] sm:$0xff]
    %v245 = vld [vmem:[#allocation8 + $0x118] sm:$0xff]
    %v246 = vld [vmem:[#allocation8 + $0x120] sm:$0xff]
    %v247 = vld [vmem:[#allocation8 + $0x128] sm:$0xff]
    %v248 = vld [vmem:[#allocation8 + $0x130] sm:$0xff]
    %v249 = vld [vmem:[#allocation8 + $0x138] sm:$0xff]
    %v250 = vld [vmem:[#allocation8 + $0x140] sm:$0xff]
    %v251 = vld [vmem:[#allocation8 + $0x148] sm:$0xff]
    %v252 = vld [vmem:[#allocation8 + $0x150] sm:$0xff]
    %v253 = vld [vmem:[#allocation8 + $0x158] sm:$0xff]
    %v254 = vld [vmem:[#allocation8 + $0x160] sm:$0xff]
    %v255 = vld [vmem:[#allocation8 + $0x168] sm:$0xff]
    %v256 = vld [vmem:[#allocation8 + $0x170] sm:$0xff]
    %v257 = vld [vmem:[#allocation8 + $0x178] sm:$0xff]
    %v258 = vld [vmem:[#allocation8 + $0x180] sm:$0xff]
    %v259 = vld [vmem:[#allocation8 + $0x188] sm:$0xff]
    %v260 = vld [vmem:[#allocation8 + $0x190] sm:$0xff]
    %v261 = vld [vmem:[#allocation8 + $0x198] sm:$0xff]
    %v262 = vld [vmem:[#allocation8 + $0x1a0] sm:$0xff]
    %v263 = vld [vmem:[#allocation8 + $0x1a8] sm:$0xff]
    %v264 = vld [vmem:[#allocation8 + $0x1b0] sm:$0xff]
    %v265 = vld [vmem:[#allocation8 + $0x1b8] sm:$0xff]
    %v266 = vld [vmem:[#allocation8 + $0x1c0] sm:$0xff]
    %v267 = vld [vmem:[#allocation8 + $0x1c8] sm:$0xff]
    %v268 = vld [vmem:[#allocation8 + $0x1d0] sm:$0xff]
    %v269 = vld [vmem:[#allocation8 + $0x1d8] sm:$0xff]
    %v270 = vld [vmem:[#allocation8 + $0x1e0] sm:$0xff]
    %v271 = vld [vmem:[#allocation8 + $0x1e8] sm:$0xff]
    %v272 = vld [vmem:[#allocation8 + $0x1f0] sm:$0xff]
    %v273 = vld [vmem:[#allocation8 + $0x1f8] sm:$0xff]
    %v274 = vld [vmem:[#allocation8 + $0x200] sm:$0xff]
    %v275 = vld [vmem:[#allocation8 + $0x208] sm:$0xff]
    %v276 = vld [vmem:[#allocation8 + $0x210] sm:$0xff]
    %v277 = vld [vmem:[#allocation8 + $0x218] sm:$0xff]
    %v278 = vld [vmem:[#allocation8 + $0x220] sm:$0xff]
    %v279 = vld [vmem:[#allocation8 + $0x228] sm:$0xff]
    %v280 = vld [vmem:[#allocation8 + $0x230] sm:$0xff]
    %v281 = vld [vmem:[#allocation8 + $0x238] sm:$0xff]
    %v282 = vld [vmem:[#allocation8 + $0x240] sm:$0xff]
    %v283 = vld [vmem:[#allocation8 + $0x248] sm:$0xff]
    %v284 = vld [vmem:[#allocation8 + $0x250] sm:$0xff]
    %v285 = vld [vmem:[#allocation8 + $0x258] sm:$0xff]
    %v286 = vld [vmem:[#allocation8 + $0x260] sm:$0xff]
    %v287 = vld [vmem:[#allocation8 + $0x268] sm:$0xff]
    %v288 = vld [vmem:[#allocation8 + $0x270] sm:$0xff]
    %v289 = vld [vmem:[#allocation8 + $0x278] sm:$0xff]
    %v290 = vld [vmem:[#allocation8 + $0x280] sm:$0xff]
    %v291 = vld [vmem:[#allocation8 + $0x288] sm:$0xff]
    %v292 = vld [vmem:[#allocation8 + $0x290] sm:$0xff]
    %v293 = vld [vmem:[#allocation8 + $0x298] sm:$0xff]
    %v294 = vld [vmem:[#allocation8 + $0x2a0] sm:$0xff]
    %v295 = vld [vmem:[#allocation8 + $0x2a8] sm:$0xff]
    %v296 = vld [vmem:[#allocation8 + $0x2b0] sm:$0xff]
    %v297 = vld [vmem:[#allocation8 + $0x2b8] sm:$0xff]
    %v298 = vld [vmem:[#allocation8 + $0x2c0] sm:$0xff]
    %v299 = vld [vmem:[#allocation8 + $0x2c8] sm:$0xff]
    %v300 = vld [vmem:[#allocation8 + $0x2d0] sm:$0xff]
    %v301 = vld [vmem:[#allocation8 + $0x2d8] sm:$0xff]
    %v302 = vld [vmem:[#allocation8 + $0x2e0] sm:$0xff]
    %v303 = vld [vmem:[#allocation8 + $0x2e8] sm:$0xff]
    %v304 = vld [vmem:[#allocation8 + $0x2f0] sm:$0xff]
    %v305 = vld [vmem:[#allocation8 + $0x2f8] sm:$0xff]
    %v306 = vld [vmem:[#allocation8 + $0x300] sm:$0xff]
    %v307 = vld [vmem:[#allocation8 + $0x308] sm:$0xff]
    %v308 = vld [vmem:[#allocation8 + $0x310] sm:$0xff]
    %v309 = vld [vmem:[#allocation8 + $0x318] sm:$0xff]
    %v310 = vld [vmem:[#allocation8 + $0x320] sm:$0xff]
    %v311 = vld [vmem:[#allocation8 + $0x328] sm:$0xff]
    %v312 = vld [vmem:[#allocation8 + $0x330] sm:$0xff]
    %v313 = vld [vmem:[#allocation8 + $0x338] sm:$0xff]
    %v314 = vld [vmem:[#allocation8 + $0x340] sm:$0xff]
    %v315 = vld [vmem:[#allocation8 + $0x348] sm:$0xff]
    %v316 = vld [vmem:[#allocation8 + $0x350] sm:$0xff]
    %v317 = vld [vmem:[#allocation8 + $0x358] sm:$0xff]
    %v318 = vld [vmem:[#allocation8 + $0x360] sm:$0xff]
    %v319 = vld [vmem:[#allocation8 + $0x368] sm:$0xff]
    %v320 = vld [vmem:[#allocation8 + $0x370] sm:$0xff]
    %v321 = vld [vmem:[#allocation8 + $0x378] sm:$0xff]
    %v322 = vld [vmem:[#allocation8 + $0x380] sm:$0xff]
    %v323 = vld [vmem:[#allocation8 + $0x388] sm:$0xff]
    %v324 = vld [vmem:[#allocation8 + $0x390] sm:$0xff]
    %v325 = vld [vmem:[#allocation8 + $0x398] sm:$0xff]
    %v326 = vld [vmem:[#allocation8 + $0x3a0] sm:$0xff]
    %v327 = vld [vmem:[#allocation8 + $0x3a8] sm:$0xff]
    %v328 = vld [vmem:[#allocation8 + $0x3b0] sm:$0xff]
    %v329 = vld [vmem:[#allocation8 + $0x3b8] sm:$0xff]
    %v330 = vld [vmem:[#allocation8 + $0x3c0] sm:$0xff]
    %v331 = vld [vmem:[#allocation8 + $0x3c8] sm:$0xff]
    %v332 = vld [vmem:[#allocation8 + $0x3d0] sm:$0xff]
    %v333 = vld [vmem:[#allocation8 + $0x3d8] sm:$0xff]
    %v334 = vld [vmem:[#allocation8 + $0x3e0] sm:$0xff]
    %v335 = vld [vmem:[#allocation8 + $0x3e8] sm:$0xff]
    %v336 = vld [vmem:[#allocation8 + $0x3f0] sm:$0xff]
    %v337 = vld [vmem:[#allocation8 + $0x3f8] sm:$0xff]
    %v338 = vld [vmem:[%s2] sm:$0xf]
    %v340 = vlaneseq
    %v341 = vshrl.u32 %v340, 7
    %v342 = vsub.s32 0, %v341
    %v343 = vrot.slane %v338, %v342
    %v344 = vlaneseq
    %v345 = vshrl.u32 %v344, 7
    %v346 = vsub.s32 1, %v345
    %v347 = vrot.slane %v338, %v346
    %v348 = vlaneseq
    %v349 = vshrl.u32 %v348, 7
    %v350 = vsub.s32 2, %v349
    %v351 = vrot.slane %v338, %v350
    %v352 = vlaneseq
    %v353 = vshrl.u32 %v352, 7
    %v354 = vsub.s32 3, %v353
    %v355 = vrot.slane %v338, %v354
    %v360 = vld [vmem:[%s4] sm:$0xf]
    %v362 = vlaneseq
    %v363 = vshrl.u32 %v362, 7
    %v364 = vsub.s32 0, %v363
    %v365 = vrot.slane %v360, %v364
    %v366 = vlaneseq
    %v367 = vshrl.u32 %v366, 7
    %v368 = vsub.s32 1, %v367
    %v369 = vrot.slane %v360, %v368
    %v370 = vlaneseq
    %v371 = vshrl.u32 %v370, 7
    %v372 = vsub.s32 2, %v371
    %v373 = vrot.slane %v360, %v372
    %v374 = vlaneseq
    %v375 = vshrl.u32 %v374, 7
    %v376 = vsub.s32 3, %v375
    %v377 = vrot.slane %v360, %v376
    %v382 = vld [vmem:[#allocation3] sm:$0xff]
    %383 = vmatprep.subr.mxu0 %v83
    %384 = vmatpush1.msra.mxu0 %v82
    %385 = vmatprep.subr.mxu0 %v87
    %386 = vmatpush1.msra.mxu0 %v86
    %387 = vmatprep.subr.mxu0 %v91
    %388 = vmatpush1.msra.mxu0 %v90
    %389 = vmatprep.subr.mxu0 %v95
    %390 = vmatpush1.msra.mxu0 %v94
    %391 = vmatprep.subr.mxu0 %v99
    %392 = vmatpush1.msra.mxu0 %v98
    %393 = vmatprep.subr.mxu0 %v103
    %394 = vmatpush1.msra.mxu0 %v102
    %395 = vmatprep.subr.mxu0 %v107
    %396 = vmatpush1.msra.mxu0 %v106
    %397 = vmatprep.subr.mxu0 %v111
    %398 = vmatpush1.msra.mxu0 %v110
    %399 = vmatprep.subr.mxu0 %v115
    %400 = vmatpush1.msra.mxu0 %v114
    %401 = vmatprep.subr.mxu0 %v119
    %402 = vmatpush1.msra.mxu0 %v118
    %403 = vmatprep.subr.mxu0 %v123
    %404 = vmatpush1.msra.mxu0 %v122
    %405 = vmatprep.subr.mxu0 %v127
    %406 = vmatpush1.msra.mxu0 %v126
    %407 = vmatprep.subr.mxu0 %v131
    %408 = vmatpush1.msra.mxu0 %v130
    %409 = vmatprep.subr.mxu0 %v135
    %410 = vmatpush1.msra.mxu0 %v134
    %411 = vmatprep.subr.mxu0 %v139
    %412 = vmatpush1.msra.mxu0 %v138
    %413 = vmatprep.subr.mxu0 %v143
    %414 = vmatpush1.msra.mxu0 %v142
    %415 = vmatprep.subr.mxu0 %v147
    %416 = vmatpush1.msra.mxu0 %v146
    %417 = vmatprep.subr.mxu0 %v151
    %418 = vmatpush1.msra.mxu0 %v150
    %419 = vmatprep.subr.mxu0 %v155
    %420 = vmatpush1.msra.mxu0 %v154
    %421 = vmatprep.subr.mxu0 %v159
    %422 = vmatpush1.msra.mxu0 %v158
    %423 = vmatprep.subr.mxu0 %v163
    %424 = vmatpush1.msra.mxu0 %v162
    %425 = vmatprep.subr.mxu0 %v167
    %426 = vmatpush1.msra.mxu0 %v166
    %427 = vmatprep.subr.mxu0 %v171
    %428 = vmatpush1.msra.mxu0 %v170
    %429 = vmatprep.subr.mxu0 %v175
    %430 = vmatpush1.msra.mxu0 %v174
    %431 = vmatprep.subr.mxu0 %v179
    %432 = vmatpush1.msra.mxu0 %v178
    %433 = vmatprep.subr.mxu0 %v183
    %434 = vmatpush1.msra.mxu0 %v182
    %435 = vmatprep.subr.mxu0 %v187
    %436 = vmatpush1.msra.mxu0 %v186
    %437 = vmatprep.subr.mxu0 %v191
    %438 = vmatpush1.msra.mxu0 %v190
    %439 = vmatprep.subr.mxu0 %v195
    %440 = vmatpush1.msra.mxu0 %v194
    %441 = vmatprep.subr.mxu0 %v199
    %442 = vmatpush1.msra.mxu0 %v198
    %443 = vmatprep.subr.mxu0 %v203
    %444 = vmatpush1.msra.mxu0 %v202
    %445 = vmatprep.subr.mxu0 %v207
    %446 = vmatpush1.msra.mxu0 %v206
    %447 = vmatprep.mubr.f32.mxu0 0.0
    %448 = vmatmul.mubr.f32.gmra.mrb[0].mxu0 %v382
    %v449 = vpop.f32.mrb[0].mxu0
    %v450 = vadd.f32 %v343, %v449
    %v451 = vpop.f32.mrb[0].mxu0
    %v452 = vadd.f32 %v347, %v451
    %453 = vdwg.mxu0
    %454 = vmatprep.subr.mxu0 %v85
    %455 = vmatpush1.msra.mxu0 %v84
    %456 = vmatprep.subr.mxu0 %v89
    %457 = vmatpush1.msra.mxu0 %v88
    %458 = vmatprep.subr.mxu0 %v93
    %459 = vmatpush1.msra.mxu0 %v92
    %460 = vmatprep.subr.mxu0 %v97
    %461 = vmatpush1.msra.mxu0 %v96
    %462 = vmatprep.subr.mxu0 %v101
    %463 = vmatpush1.msra.mxu0 %v100
    %464 = vmatprep.subr.mxu0 %v105
    %465 = vmatpush1.msra.mxu0 %v104
    %466 = vmatprep.subr.mxu0 %v109
    %467 = vmatpush1.msra.mxu0 %v108
    %468 = vmatprep.subr.mxu0 %v113
    %469 = vmatpush1.msra.mxu0 %v112
    %470 = vmatprep.subr.mxu0 %v117
    %471 = vmatpush1.msra.mxu0 %v116
    %472 = vmatprep.subr.mxu0 %v121
    %473 = vmatpush1.msra.mxu0 %v120
    %474 = vmatprep.subr.mxu0 %v125
    %475 = vmatpush1.msra.mxu0 %v124
    %476 = vmatprep.subr.mxu0 %v129
    %477 = vmatpush1.msra.mxu0 %v128
    %478 = vmatprep.subr.mxu0 %v133
    %479 = vmatpush1.msra.mxu0 %v132
    %480 = vmatprep.subr.mxu0 %v137
    %481 = vmatpush1.msra.mxu0 %v136
    %482 = vmatprep.subr.mxu0 %v141
    %483 = vmatpush1.msra.mxu0 %v140
    %484 = vmatprep.subr.mxu0 %v145
    %485 = vmatpush1.msra.mxu0 %v144
    %486 = vmatprep.subr.mxu0 %v149
    %487 = vmatpush1.msra.mxu0 %v148
    %488 = vmatprep.subr.mxu0 %v153
    %489 = vmatpush1.msra.mxu0 %v152
    %490 = vmatprep.subr.mxu0 %v157
    %491 = vmatpush1.msra.mxu0 %v156
    %492 = vmatprep.subr.mxu0 %v161
    %493 = vmatpush1.msra.mxu0 %v160
    %494 = vmatprep.subr.mxu0 %v165
    %495 = vmatpush1.msra.mxu0 %v164
    %496 = vmatprep.subr.mxu0 %v169
    %497 = vmatpush1.msra.mxu0 %v168
    %498 = vmatprep.subr.mxu0 %v173
    %499 = vmatpush1.msra.mxu0 %v172
    %500 = vmatprep.subr.mxu0 %v177
    %501 = vmatpush1.msra.mxu0 %v176
    %502 = vmatprep.subr.mxu0 %v181
    %503 = vmatpush1.msra.mxu0 %v180
    %504 = vmatprep.subr.mxu0 %v185
    %505 = vmatpush1.msra.mxu0 %v184
    %506 = vmatprep.subr.mxu0 %v189
    %507 = vmatpush1.msra.mxu0 %v188
    %508 = vmatprep.subr.mxu0 %v193
    %509 = vmatpush1.msra.mxu0 %v192
    %510 = vmatprep.subr.mxu0 %v197
    %511 = vmatpush1.msra.mxu0 %v196
    %512 = vmatprep.subr.mxu0 %v201
    %513 = vmatpush1.msra.mxu0 %v200
    %514 = vmatprep.subr.mxu0 %v205
    %515 = vmatpush1.msra.mxu0 %v204
    %516 = vmatprep.subr.mxu0 %v209
    %517 = vmatpush1.msra.mxu0 %v208
    %518 = vmatprep.mubr.f32.mxu0 0.0
    %519 = vmatmul.mubr.f32.gmra.mrb[0].mxu0 %v382
    %v520 = vpop.f32.mrb[0].mxu0
    %v521 = vadd.f32 %v351, %v520
    %v522 = vpop.f32.mrb[0].mxu0
    %v523 = vadd.f32 %v355, %v522
    %524 = vdwg.mxu0
    %v525 = vmul.f32 %v450, 0.5
    %v526 = vtanh.pop %v525
    %v527 = vmul.f32 %v526, 0.5
    %v528 = vadd.f32 %v527, 0.5
    %v529 = vmul.f32 %v452, 0.5
    %v530 = vtanh.pop %v529
    %v531 = vmul.f32 %v530, 0.5
    %v532 = vadd.f32 %v531, 0.5
    %v533 = vtanh.pop %v521
    %v534 = vmul.f32 %v523, 0.5
    %v535 = vtanh.pop %v534
    %v536 = vmul.f32 %v535, 0.5
    %v537 = vadd.f32 %v536, 0.5
    %v538 = vmul.f32 %v532, 0.0
    %v539 = vmul.f32 %v528, %v533
    %v540 = vadd.f32 %v538, %v539
    %v541 = vtanh.pop %v540
    %v542 = vmul.f32 %v537, %v541
    %543 = vmatprep.subr.mxu0 %v211
    %544 = vmatpush1.msra.mxu0 %v210
    %545 = vmatprep.subr.mxu0 %v215
    %546 = vmatpush1.msra.mxu0 %v214
    %547 = vmatprep.subr.mxu0 %v219
    %548 = vmatpush1.msra.mxu0 %v218
    %549 = vmatprep.subr.mxu0 %v223
    %550 = vmatpush1.msra.mxu0 %v222
    %551 = vmatprep.subr.mxu0 %v227
    %552 = vmatpush1.msra.mxu0 %v226
    %553 = vmatprep.subr.mxu0 %v231
    %554 = vmatpush1.msra.mxu0 %v230
    %555 = vmatprep.subr.mxu0 %v235
    %556 = vmatpush1.msra.mxu0 %v234
    %557 = vmatprep.subr.mxu0 %v239
    %558 = vmatpush1.msra.mxu0 %v238
    %559 = vmatprep.subr.mxu0 %v243
    %560 = vmatpush1.msra.mxu0 %v242
    %561 = vmatprep.subr.mxu0 %v247
    %562 = vmatpush1.msra.mxu0 %v246
    %563 = vmatprep.subr.mxu0 %v251
    %564 = vmatpush1.msra.mxu0 %v250
    %565 = vmatprep.subr.mxu0 %v255
    %566 = vmatpush1.msra.mxu0 %v254
    %567 = vmatprep.subr.mxu0 %v259
    %568 = vmatpush1.msra.mxu0 %v258
    %569 = vmatprep.subr.mxu0 %v263
    %570 = vmatpush1.msra.mxu0 %v262
    %571 = vmatprep.subr.mxu0 %v267
    %572 = vmatpush1.msra.mxu0 %v266
    %573 = vmatprep.subr.mxu0 %v271
    %574 = vmatpush1.msra.mxu0 %v270
    %575 = vmatprep.subr.mxu0 %v275
    %576 = vmatpush1.msra.mxu0 %v274
    %577 = vmatprep.subr.mxu0 %v279
    %578 = vmatpush1.msra.mxu0 %v278
    %579 = vmatprep.subr.mxu0 %v283
    %580 = vmatpush1.msra.mxu0 %v282
    %581 = vmatprep.subr.mxu0 %v287
    %582 = vmatpush1.msra.mxu0 %v286
    %583 = vmatprep.subr.mxu0 %v291
    %584 = vmatpush1.msra.mxu0 %v290
    %585 = vmatprep.subr.mxu0 %v295
    %586 = vmatpush1.msra.mxu0 %v294
    %587 = vmatprep.subr.mxu0 %v299
    %588 = vmatpush1.msra.mxu0 %v298
    %589 = vmatprep.subr.mxu0 %v303
    %590 = vmatpush1.msra.mxu0 %v302
    %591 = vmatprep.subr.mxu0 %v307
    %592 = vmatpush1.msra.mxu0 %v306
    %593 = vmatprep.subr.mxu0 %v311
    %594 = vmatpush1.msra.mxu0 %v310
    %595 = vmatprep.subr.mxu0 %v315
    %596 = vmatpush1.msra.mxu0 %v314
    %597 = vmatprep.subr.mxu0 %v319
    %598 = vmatpush1.msra.mxu0 %v318
    %599 = vmatprep.subr.mxu0 %v323
    %600 = vmatpush1.msra.mxu0 %v322
    %601 = vmatprep.subr.mxu0 %v327
    %602 = vmatpush1.msra.mxu0 %v326
    %603 = vmatprep.subr.mxu0 %v331
    %604 = vmatpush1.msra.mxu0 %v330
    %605 = vmatprep.subr.mxu0 %v335
    %606 = vmatpush1.msra.mxu0 %v334
    %607 = vmatprep.mubr.f32.mxu0 0.0
    %608 = vmatmul.mubr.f32.gmra.mrb[0].mxu0 %v542
    %v609 = vpop.f32.mrb[0].mxu0
    %v610 = vadd.f32 %v365, %v609
    %v611 = vpop.f32.mrb[0].mxu0
    %v612 = vadd.f32 %v369, %v611
    %613 = vdwg.mxu0
    %614 = vmatprep.subr.mxu0 %v213
    %615 = vmatpush1.msra.mxu0 %v212
    %616 = vmatprep.subr.mxu0 %v217
    %617 = vmatpush1.msra.mxu0 %v216
    %618 = vmatprep.subr.mxu0 %v221
    %619 = vmatpush1.msra.mxu0 %v220
    %620 = vmatprep.subr.mxu0 %v225
    %621 = vmatpush1.msra.mxu0 %v224
    %622 = vmatprep.subr.mxu0 %v229
    %623 = vmatpush1.msra.mxu0 %v228
    %624 = vmatprep.subr.mxu0 %v233
    %625 = vmatpush1.msra.mxu0 %v232
    %626 = vmatprep.subr.mxu0 %v237
    %627 = vmatpush1.msra.mxu0 %v236
    %628 = vmatprep.subr.mxu0 %v241
    %629 = vmatpush1.msra.mxu0 %v240
    %630 = vmatprep.subr.mxu0 %v245
    %631 = vmatpush1.msra.mxu0 %v244
    %632 = vmatprep.subr.mxu0 %v249
    %633 = vmatpush1.msra.mxu0 %v248
    %634 = vmatprep.subr.mxu0 %v253
    %635 = vmatpush1.msra.mxu0 %v252
    %636 = vmatprep.subr.mxu0 %v257
    %637 = vmatpush1.msra.mxu0 %v256
    %638 = vmatprep.subr.mxu0 %v261
    %639 = vmatpush1.msra.mxu0 %v260
    %640 = vmatprep.subr.mxu0 %v265
    %641 = vmatpush1.msra.mxu0 %v264
    %642 = vmatprep.subr.mxu0 %v269
    %643 = vmatpush1.msra.mxu0 %v268
    %644 = vmatprep.subr.mxu0 %v273
    %645 = vmatpush1.msra.mxu0 %v272
    %646 = vmatprep.subr.mxu0 %v277
    %647 = vmatpush1.msra.mxu0 %v276
    %648 = vmatprep.subr.mxu0 %v281
    %649 = vmatpush1.msra.mxu0 %v280
    %650 = vmatprep.subr.mxu0 %v285
    %651 = vmatpush1.msra.mxu0 %v284
    %652 = vmatprep.subr.mxu0 %v289
    %653 = vmatpush1.msra.mxu0 %v288
    %654 = vmatprep.subr.mxu0 %v293
    %655 = vmatpush1.msra.mxu0 %v292
    %656 = vmatprep.subr.mxu0 %v297
    %657 = vmatpush1.msra.mxu0 %v296
    %658 = vmatprep.subr.mxu0 %v301
    %659 = vmatpush1.msra.mxu0 %v300
    %660 = vmatprep.subr.mxu0 %v305
    %661 = vmatpush1.msra.mxu0 %v304
    %662 = vmatprep.subr.mxu0 %v309
    %663 = vmatpush1.msra.mxu0 %v308
    %664 = vmatprep.subr.mxu0 %v313
    %665 = vmatpush1.msra.mxu0 %v312
    %666 = vmatprep.subr.mxu0 %v317
    %667 = vmatpush1.msra.mxu0 %v316
    %668 = vmatprep.subr.mxu0 %v321
    %669 = vmatpush1.msra.mxu0 %v320
    %670 = vmatprep.subr.mxu0 %v325
    %671 = vmatpush1.msra.mxu0 %v324
    %672 = vmatprep.subr.mxu0 %v329
    %673 = vmatpush1.msra.mxu0 %v328
    %674 = vmatprep.subr.mxu0 %v333
    %675 = vmatpush1.msra.mxu0 %v332
    %676 = vmatprep.subr.mxu0 %v337
    %677 = vmatpush1.msra.mxu0 %v336
    %678 = vmatprep.mubr.f32.mxu0 0.0
    %679 = vmatmul.mubr.f32.gmra.mrb[0].mxu0 %v542
    %v680 = vpop.f32.mrb[0].mxu0
    %v681 = vadd.f32 %v373, %v680
    %v682 = vpop.f32.mrb[0].mxu0
    %v683 = vadd.f32 %v377, %v682
    %684 = vdwg.mxu0
    %v685 = vmul.f32 %v610, 0.5
    %v686 = vtanh.pop %v685
    %v687 = vmul.f32 %v686, 0.5
    %v688 = vadd.f32 %v687, 0.5
    %v689 = vmul.f32 %v612, 0.5
    %v690 = vtanh.pop %v689
    %v691 = vmul.f32 %v690, 0.5
    %v692 = vadd.f32 %v691, 0.5
    %v693 = vtanh.pop %v681
    %v694 = vmul.f32 %v683, 0.5
    %v695 = vtanh.pop %v694
    %v696 = vmul.f32 %v695, 0.5
    %v697 = vadd.f32 %v696, 0.5
    %v698 = vmul.f32 %v692, 0.0
    %v699 = vmul.f32 %v688, %v693
    %v700 = vadd.f32 %v698, %v699
    %v701 = vtanh.pop %v700
    %v702 = vmul.f32 %v697, %v701
    %703 = vst [vmem:[#allocation2] sm:$0xff] %v702
    %s704 = scalar_lea.vmem [#allocation3], 8
    %v705 = vld [vmem:[%s704] sm:$0xff]
    %706 = vmatprep.subr.mxu0 %v83
    %707 = vmatpush1.msra.mxu0 %v82
    %708 = vmatprep.subr.mxu0 %v87
    %709 = vmatpush1.msra.mxu0 %v86
    %710 = vmatprep.subr.mxu0 %v91
    %711 = vmatpush1.msra.mxu0 %v90
    %712 = vmatprep.subr.mxu0 %v95
    %713 = vmatpush1.msra.mxu0 %v94
    %714 = vmatprep.subr.mxu0 %v99
    %715 = vmatpush1.msra.mxu0 %v98
    %716 = vmatprep.subr.mxu0 %v103
    %717 = vmatpush1.msra.mxu0 %v102
    %718 = vmatprep.subr.mxu0 %v107
    %719 = vmatpush1.msra.mxu0 %v106
    %720 = vmatprep.subr.mxu0 %v111
    %721 = vmatpush1.msra.mxu0 %v110
    %722 = vmatprep.subr.mxu0 %v115
    %723 = vmatpush1.msra.mxu0 %v114
    %724 = vmatprep.subr.mxu0 %v119
    %725 = vmatpush1.msra.mxu0 %v118
    %726 = vmatprep.subr.mxu0 %v123
    %727 = vmatpush1.msra.mxu0 %v122
    %728 = vmatprep.subr.mxu0 %v127
    %729 = vmatpush1.msra.mxu0 %v126
    %730 = vmatprep.subr.mxu0 %v131
    %731 = vmatpush1.msra.mxu0 %v130
    %732 = vmatprep.subr.mxu0 %v135
    %733 = vmatpush1.msra.mxu0 %v134
    %734 = vmatprep.subr.mxu0 %v139
    %735 = vmatpush1.msra.mxu0 %v138
    %736 = vmatprep.subr.mxu0 %v143
    %737 = vmatpush1.msra.mxu0 %v142
    %738 = vmatprep.subr.mxu0 %v147
    %739 = vmatpush1.msra.mxu0 %v146
    %740 = vmatprep.subr.mxu0 %v151
    %741 = vmatpush1.msra.mxu0 %v150
    %742 = vmatprep.subr.mxu0 %v155
    %743 = vmatpush1.msra.mxu0 %v154
    %744 = vmatprep.subr.mxu0 %v159
    %745 = vmatpush1.msra.mxu0 %v158
    %746 = vmatprep.subr.mxu0 %v163
    %747 = vmatpush1.msra.mxu0 %v162
    %748 = vmatprep.subr.mxu0 %v167
    %749 = vmatpush1.msra.mxu0 %v166
    %750 = vmatprep.subr.mxu0 %v171
    %751 = vmatpush1.msra.mxu0 %v170
    %752 = vmatprep.subr.mxu0 %v175
    %753 = vmatpush1.msra.mxu0 %v174
    %754 = vmatprep.subr.mxu0 %v179
    %755 = vmatpush1.msra.mxu0 %v178
    %756 = vmatprep.subr.mxu0 %v183
    %757 = vmatpush1.msra.mxu0 %v182
    %758 = vmatprep.subr.mxu0 %v187
    %759 = vmatpush1.msra.mxu0 %v186
    %760 = vmatprep.subr.mxu0 %v191
    %761 = vmatpush1.msra.mxu0 %v190
    %762 = vmatprep.subr.mxu0 %v195
    %763 = vmatpush1.msra.mxu0 %v194
    %764 = vmatprep.subr.mxu0 %v199
    %765 = vmatpush1.msra.mxu0 %v198
    %766 = vmatprep.subr.mxu0 %v203
    %767 = vmatpush1.msra.mxu0 %v202
    %768 = vmatprep.subr.mxu0 %v207
    %769 = vmatpush1.msra.mxu0 %v206
    %770 = vmatprep.mubr.f32.mxu0 %v542
    %771 = vmatmul.mubr.f32.gmra.mrb[0].mxu0 %v705
    %v772 = vpop.f32.mrb[0].mxu0
    %v773 = vadd.f32 %v343, %v772
    %v774 = vpop.f32.mrb[0].mxu0
    %v775 = vadd.f32 %v347, %v774
    %776 = vdwg.mxu0
    %777 = vmatprep.subr.mxu0 %v85
    %778 = vmatpush1.msra.mxu0 %v84
    %779 = vmatprep.subr.mxu0 %v89
    %780 = vmatpush1.msra.mxu0 %v88
    %781 = vmatprep.subr.mxu0 %v93
    %782 = vmatpush1.msra.mxu0 %v92
    %783 = vmatprep.subr.mxu0 %v97
    %784 = vmatpush1.msra.mxu0 %v96
    %785 = vmatprep.subr.mxu0 %v101
    %786 = vmatpush1.msra.mxu0 %v100
    %787 = vmatprep.subr.mxu0 %v105
    %788 = vmatpush1.msra.mxu0 %v104
    %789 = vmatprep.subr.mxu0 %v109
    %790 = vmatpush1.msra.mxu0 %v108
    %791 = vmatprep.subr.mxu0 %v113
    %792 = vmatpush1.msra.mxu0 %v112
    %793 = vmatprep.subr.mxu0 %v117
    %794 = vmatpush1.msra.mxu0 %v116
    %795 = vmatprep.subr.mxu0 %v121
    %796 = vmatpush1.msra.mxu0 %v120
    %797 = vmatprep.subr.mxu0 %v125
    %798 = vmatpush1.msra.mxu0 %v124
    %799 = vmatprep.subr.mxu0 %v129
    %800 = vmatpush1.msra.mxu0 %v128
    %801 = vmatprep.subr.mxu0 %v133
    %802 = vmatpush1.msra.mxu0 %v132
    %803 = vmatprep.subr.mxu0 %v137
    %804 = vmatpush1.msra.mxu0 %v136
    %805 = vmatprep.subr.mxu0 %v141
    %806 = vmatpush1.msra.mxu0 %v140
    %807 = vmatprep.subr.mxu0 %v145
    %808 = vmatpush1.msra.mxu0 %v144
    %809 = vmatprep.subr.mxu0 %v149
    %810 = vmatpush1.msra.mxu0 %v148
    %811 = vmatprep.subr.mxu0 %v153
    %812 = vmatpush1.msra.mxu0 %v152
    %813 = vmatprep.subr.mxu0 %v157
    %814 = vmatpush1.msra.mxu0 %v156
    %815 = vmatprep.subr.mxu0 %v161
    %816 = vmatpush1.msra.mxu0 %v160
    %817 = vmatprep.subr.mxu0 %v165
    %818 = vmatpush1.msra.mxu0 %v164
    %819 = vmatprep.subr.mxu0 %v169
    %820 = vmatpush1.msra.mxu0 %v168
    %821 = vmatprep.subr.mxu0 %v173
    %822 = vmatpush1.msra.mxu0 %v172
    %823 = vmatprep.subr.mxu0 %v177
    %824 = vmatpush1.msra.mxu0 %v176
    %825 = vmatprep.subr.mxu0 %v181
    %826 = vmatpush1.msra.mxu0 %v180
    %827 = vmatprep.subr.mxu0 %v185
    %828 = vmatpush1.msra.mxu0 %v184
    %829 = vmatprep.subr.mxu0 %v189
    %830 = vmatpush1.msra.mxu0 %v188
    %831 = vmatprep.subr.mxu0 %v193
    %832 = vmatpush1.msra.mxu0 %v192
    %833 = vmatprep.subr.mxu0 %v197
    %834 = vmatpush1.msra.mxu0 %v196
    %835 = vmatprep.subr.mxu0 %v201
    %836 = vmatpush1.msra.mxu0 %v200
    %837 = vmatprep.subr.mxu0 %v205
    %838 = vmatpush1.msra.mxu0 %v204
    %839 = vmatprep.subr.mxu0 %v209
    %840 = vmatpush1.msra.mxu0 %v208
    %841 = vmatprep.mubr.f32.mxu0 %v542
    %842 = vmatmul.mubr.f32.gmra.mrb[0].mxu0 %v705
    %v843 = vpop.f32.mrb[0].mxu0
    %v844 = vadd.f32 %v351, %v843
    %v845 = vpop.f32.mrb[0].mxu0
    %v846 = vadd.f32 %v355, %v845
    %847 = vdwg.mxu0
    %v848 = vmul.f32 %v773, 0.5
    %v849 = vtanh.pop %v848
    %v850 = vmul.f32 %v849, 0.5
    %v851 = vadd.f32 %v850, 0.5
    %v852 = vmul.f32 %v775, 0.5
    %v853 = vtanh.pop %v852
    %v854 = vmul.f32 %v853, 0.5
    %v855 = vadd.f32 %v854, 0.5
    %v856 = vtanh.pop %v844
    %v857 = vmul.f32 %v846, 0.5
    %v858 = vtanh.pop %v857
    %v859 = vmul.f32 %v858, 0.5
    %v860 = vadd.f32 %v859, 0.5
    %v861 = vmul.f32 %v855, %v540
    %v862 = vmul.f32 %v851, %v856
    %v863 = vadd.f32 %v861, %v862
    %v864 = vtanh.pop %v863
    %v865 = vmul.f32 %v860, %v864
    %866 = vmatprep.subr.mxu0 %v211
    %867 = vmatpush1.msra.mxu0 %v210
    %868 = vmatprep.subr.mxu0 %v215
    %869 = vmatpush1.msra.mxu0 %v214
    %870 = vmatprep.subr.mxu0 %v219
    %871 = vmatpush1.msra.mxu0 %v218
    %872 = vmatprep.subr.mxu0 %v223
    %873 = vmatpush1.msra.mxu0 %v222
    %874 = vmatprep.subr.mxu0 %v227
    %875 = vmatpush1.msra.mxu0 %v226
    %876 = vmatprep.subr.mxu0 %v231
    %877 = vmatpush1.msra.mxu0 %v230
    %878 = vmatprep.subr.mxu0 %v235
    %879 = vmatpush1.msra.mxu0 %v234
    %880 = vmatprep.subr.mxu0 %v239
    %881 = vmatpush1.msra.mxu0 %v238
    %882 = vmatprep.subr.mxu0 %v243
    %883 = vmatpush1.msra.mxu0 %v242
    %884 = vmatprep.subr.mxu0 %v247
    %885 = vmatpush1.msra.mxu0 %v246
    %886 = vmatprep.subr.mxu0 %v251
    %887 = vmatpush1.msra.mxu0 %v250
    %888 = vmatprep.subr.mxu0 %v255
    %889 = vmatpush1.msra.mxu0 %v254
    %890 = vmatprep.subr.mxu0 %v259
    %891 = vmatpush1.msra.mxu0 %v258
    %892 = vmatprep.subr.mxu0 %v263
    %893 = vmatpush1.msra.mxu0 %v262
    %894 = vmatprep.subr.mxu0 %v267
    %895 = vmatpush1.msra.mxu0 %v266
    %896 = vmatprep.subr.mxu0 %v271
    %897 = vmatpush1.msra.mxu0 %v270
    %898 = vmatprep.subr.mxu0 %v275
    %899 = vmatpush1.msra.mxu0 %v274
    %900 = vmatprep.subr.mxu0 %v279
    %901 = vmatpush1.msra.mxu0 %v278
    %902 = vmatprep.subr.mxu0 %v283
    %903 = vmatpush1.msra.mxu0 %v282
    %904 = vmatprep.subr.mxu0 %v287
    %905 = vmatpush1.msra.mxu0 %v286
    %906 = vmatprep.subr.mxu0 %v291
    %907 = vmatpush1.msra.mxu0 %v290
    %908 = vmatprep.subr.mxu0 %v295
    %909 = vmatpush1.msra.mxu0 %v294
    %910 = vmatprep.subr.mxu0 %v299
    %911 = vmatpush1.msra.mxu0 %v298
    %912 = vmatprep.subr.mxu0 %v303
    %913 = vmatpush1.msra.mxu0 %v302
    %914 = vmatprep.subr.mxu0 %v307
    %915 = vmatpush1.msra.mxu0 %v306
    %916 = vmatprep.subr.mxu0 %v311
    %917 = vmatpush1.msra.mxu0 %v310
    %918 = vmatprep.subr.mxu0 %v315
    %919 = vmatpush1.msra.mxu0 %v314
    %920 = vmatprep.subr.mxu0 %v319
    %921 = vmatpush1.msra.mxu0 %v318
    %922 = vmatprep.subr.mxu0 %v323
    %923 = vmatpush1.msra.mxu0 %v322
    %924 = vmatprep.subr.mxu0 %v327
    %925 = vmatpush1.msra.mxu0 %v326
    %926 = vmatprep.subr.mxu0 %v331
    %927 = vmatpush1.msra.mxu0 %v330
    %928 = vmatprep.subr.mxu0 %v335
    %929 = vmatpush1.msra.mxu0 %v334
    %930 = vmatprep.mubr.f32.mxu0 %v702
    %931 = vmatmul.mubr.f32.gmra.mrb[0].mxu0 %v865
    %v932 = vpop.f32.mrb[0].mxu0
    %v933 = vadd.f32 %v365, %v932
    %v934 = vpop.f32.mrb[0].mxu0
    %v935 = vadd.f32 %v369, %v934
    %936 = vdwg.mxu0
    %937 = vmatprep.subr.mxu0 %v213
    %938 = vmatpush1.msra.mxu0 %v212
    %939 = vmatprep.subr.mxu0 %v217
    %940 = vmatpush1.msra.mxu0 %v216
    %941 = vmatprep.subr.mxu0 %v221
    %942 = vmatpush1.msra.mxu0 %v220
    %943 = vmatprep.subr.mxu0 %v225
    %944 = vmatpush1.msra.mxu0 %v224
    %945 = vmatprep.subr.mxu0 %v229
    %946 = vmatpush1.msra.mxu0 %v228
    %947 = vmatprep.subr.mxu0 %v233
    %948 = vmatpush1.msra.mxu0 %v232
    %949 = vmatprep.subr.mxu0 %v237
    %950 = vmatpush1.msra.mxu0 %v236
    %951 = vmatprep.subr.mxu0 %v241
    %952 = vmatpush1.msra.mxu0 %v240
    %953 = vmatprep.subr.mxu0 %v245
    %954 = vmatpush1.msra.mxu0 %v244
    %955 = vmatprep.subr.mxu0 %v249
    %956 = vmatpush1.msra.mxu0 %v248
    %957 = vmatprep.subr.mxu0 %v253
    %958 = vmatpush1.msra.mxu0 %v252
    %959 = vmatprep.subr.mxu0 %v257
    %960 = vmatpush1.msra.mxu0 %v256
    %961 = vmatprep.subr.mxu0 %v261
    %962 = vmatpush1.msra.mxu0 %v260
    %963 = vmatprep.subr.mxu0 %v265
    %964 = vmatpush1.msra.mxu0 %v264
    %965 = vmatprep.subr.mxu0 %v269
    %966 = vmatpush1.msra.mxu0 %v268
    %967 = vmatprep.subr.mxu0 %v273
    %968 = vmatpush1.msra.mxu0 %v272
    %969 = vmatprep.subr.mxu0 %v277
    %970 = vmatpush1.msra.mxu0 %v276
    %971 = vmatprep.subr.mxu0 %v281
    %972 = vmatpush1.msra.mxu0 %v280
    %973 = vmatprep.subr.mxu0 %v285
    %974 = vmatpush1.msra.mxu0 %v284
    %975 = vmatprep.subr.mxu0 %v289
    %976 = vmatpush1.msra.mxu0 %v288
    %977 = vmatprep.subr.mxu0 %v293
    %978 = vmatpush1.msra.mxu0 %v292
    %979 = vmatprep.subr.mxu0 %v297
    %980 = vmatpush1.msra.mxu0 %v296
    %981 = vmatprep.subr.mxu0 %v301
    %982 = vmatpush1.msra.mxu0 %v300
    %983 = vmatprep.subr.mxu0 %v305
    %984 = vmatpush1.msra.mxu0 %v304
    %985 = vmatprep.subr.mxu0 %v309
    %986 = vmatpush1.msra.mxu0 %v308
    %987 = vmatprep.subr.mxu0 %v313
    %988 = vmatpush1.msra.mxu0 %v312
    %989 = vmatprep.subr.mxu0 %v317
    %990 = vmatpush1.msra.mxu0 %v316
    %991 = vmatprep.subr.mxu0 %v321
    %992 = vmatpush1.msra.mxu0 %v320
    %993 = vmatprep.subr.mxu0 %v325
    %994 = vmatpush1.msra.mxu0 %v324
    %995 = vmatprep.subr.mxu0 %v329
    %996 = vmatpush1.msra.mxu0 %v328
    %997 = vmatprep.subr.mxu0 %v333
    %998 = vmatpush1.msra.mxu0 %v332
    %999 = vmatprep.subr.mxu0 %v337
    %1000 = vmatpush1.msra.mxu0 %v336
    %1001 = vmatprep.mubr.f32.mxu0 %v702
    %1002 = vmatmul.mubr.f32.gmra.mrb[0].mxu0 %v865
    %v1003 = vpop.f32.mrb[0].mxu0
    %v1004 = vadd.f32 %v373, %v1003
    %v1005 = vpop.f32.mrb[0].mxu0
    %v1006 = vadd.f32 %v377, %v1005
    %1007 = vdwg.mxu0
    %v1008 = vmul.f32 %v933, 0.5
    %v1009 = vtanh.pop %v1008
    %v1010 = vmul.f32 %v1009, 0.5
    %v1011 = vadd.f32 %v1010, 0.5
    %v1012 = vmul.f32 %v935, 0.5
    %v1013 = vtanh.pop %v1012
    %v1014 = vmul.f32 %v1013, 0.5
    %v1015 = vadd.f32 %v1014, 0.5
    %v1016 = vtanh.pop %v1004
    %v1017 = vmul.f32 %v1006, 0.5
    %v1018 = vtanh.pop %v1017
    %v1019 = vmul.f32 %v1018, 0.5
    %v1020 = vadd.f32 %v1019, 0.5
    %v1021 = vmul.f32 %v1015, %v700
    %v1022 = vmul.f32 %v1011, %v1016
    %v1023 = vadd.f32 %v1021, %v1022
    %v1024 = vtanh.pop %v1023
    %v1025 = vmul.f32 %v1020, %v1024
    %s1026 = scalar_lea.vmem [#allocation2], 8
    %1027 = vst [vmem:[%s1026] sm:$0xff] %v1025
    %s1028 = scalar_lea.vmem [#allocation3], 16
    %v1029 = vld [vmem:[%s1028] sm:$0xff]
    %1030 = vmatprep.subr.mxu0 %v83
    %1031 = vmatpush1.msra.mxu0 %v82
    %1032 = vmatprep.subr.mxu0 %v87
    %1033 = vmatpush1.msra.mxu0 %v86
    %1034 = vmatprep.subr.mxu0 %v91
    %1035 = vmatpush1.msra.mxu0 %v90
    %1036 = vmatprep.subr.mxu0 %v95
    %1037 = vmatpush1.msra.mxu0 %v94
    %1038 = vmatprep.subr.mxu0 %v99
    %1039 = vmatpush1.msra.mxu0 %v98
    %1040 = vmatprep.subr.mxu0 %v103
    %1041 = vmatpush1.msra.mxu0 %v102
    %1042 = vmatprep.subr.mxu0 %v107
    %1043 = vmatpush1.msra.mxu0 %v106
    %1044 = vmatprep.subr.mxu0 %v111
    %1045 = vmatpush1.msra.mxu0 %v110
    %1046 = vmatprep.subr.mxu0 %v115
    %1047 = vmatpush1.msra.mxu0 %v114
    %1048 = vmatprep.subr.mxu0 %v119
    %1049 = vmatpush1.msra.mxu0 %v118
    %1050 = vmatprep.subr.mxu0 %v123
    %1051 = vmatpush1.msra.mxu0 %v122
    %1052 = vmatprep.subr.mxu0 %v127
    %1053 = vmatpush1.msra.mxu0 %v126
    %1054 = vmatprep.subr.mxu0 %v131
    %1055 = vmatpush1.msra.mxu0 %v130
    %1056 = vmatprep.subr.mxu0 %v135
    %1057 = vmatpush1.msra.mxu0 %v134
    %1058 = vmatprep.subr.mxu0 %v139
    %1059 = vmatpush1.msra.mxu0 %v138
    %1060 = vmatprep.subr.mxu0 %v143
    %1061 = vmatpush1.msra.mxu0 %v142
    %1062 = vmatprep.subr.mxu0 %v147
    %1063 = vmatpush1.msra.mxu0 %v146
    %1064 = vmatprep.subr.mxu0 %v151
    %1065 = vmatpush1.msra.mxu0 %v150
    %1066 = vmatprep.subr.mxu0 %v155
    %1067 = vmatpush1.msra.mxu0 %v154
    %1068 = vmatprep.subr.mxu0 %v159
    %1069 = vmatpush1.msra.mxu0 %v158
    %1070 = vmatprep.subr.mxu0 %v163
    %1071 = vmatpush1.msra.mxu0 %v162
    %1072 = vmatprep.subr.mxu0 %v167
    %1073 = vmatpush1.msra.mxu0 %v166
    %1074 = vmatprep.subr.mxu0 %v171
    %1075 = vmatpush1.msra.mxu0 %v170
    %1076 = vmatprep.subr.mxu0 %v175
    %1077 = vmatpush1.msra.mxu0 %v174
    %1078 = vmatprep.subr.mxu0 %v179
    %1079 = vmatpush1.msra.mxu0 %v178
    %1080 = vmatprep.subr.mxu0 %v183
    %1081 = vmatpush1.msra.mxu0 %v182
    %1082 = vmatprep.subr.mxu0 %v187
    %1083 = vmatpush1.msra.mxu0 %v186
    %1084 = vmatprep.subr.mxu0 %v191
    %1085 = vmatpush1.msra.mxu0 %v190
    %1086 = vmatprep.subr.mxu0 %v195
    %1087 = vmatpush1.msra.mxu0 %v194
    %1088 = vmatprep.subr.mxu0 %v199
    %1089 = vmatpush1.msra.mxu0 %v198
    %1090 = vmatprep.subr.mxu0 %v203
    %1091 = vmatpush1.msra.mxu0 %v202
    %1092 = vmatprep.subr.mxu0 %v207
    %1093 = vmatpush1.msra.mxu0 %v206
    %1094 = vmatprep.mubr.f32.mxu0 %v865
    %1095 = vmatmul.mubr.f32.gmra.mrb[0].mxu0 %v1029
    %v1096 = vpop.f32.mrb[0].mxu0
    %v1097 = vadd.f32 %v343, %v1096
    %v1098 = vpop.f32.mrb[0].mxu0
    %v1099 = vadd.f32 %v347, %v1098
    %1100 = vdwg.mxu0
    %1101 = vmatprep.subr.mxu0 %v85
    %1102 = vmatpush1.msra.mxu0 %v84
    %1103 = vmatprep.subr.mxu0 %v89
    %1104 = vmatpush1.msra.mxu0 %v88
    %1105 = vmatprep.subr.mxu0 %v93
    %1106 = vmatpush1.msra.mxu0 %v92
    %1107 = vmatprep.subr.mxu0 %v97
    %1108 = vmatpush1.msra.mxu0 %v96
    %1109 = vmatprep.subr.mxu0 %v101
    %1110 = vmatpush1.msra.mxu0 %v100
    %1111 = vmatprep.subr.mxu0 %v105
    %1112 = vmatpush1.msra.mxu0 %v104
    %1113 = vmatprep.subr.mxu0 %v109
    %1114 = vmatpush1.msra.mxu0 %v108
    %1115 = vmatprep.subr.mxu0 %v113
    %1116 = vmatpush1.msra.mxu0 %v112
    %1117 = vmatprep.subr.mxu0 %v117
    %1118 = vmatpush1.msra.mxu0 %v116
    %1119 = vmatprep.subr.mxu0 %v121
    %1120 = vmatpush1.msra.mxu0 %v120
    %1121 = vmatprep.subr.mxu0 %v125
    %1122 = vmatpush1.msra.mxu0 %v124
    %1123 = vmatprep.subr.mxu0 %v129
    %1124 = vmatpush1.msra.mxu0 %v128
    %1125 = vmatprep.subr.mxu0 %v133
    %1126 = vmatpush1.msra.mxu0 %v132
    %1127 = vmatprep.subr.mxu0 %v137
    %1128 = vmatpush1.msra.mxu0 %v136
    %1129 = vmatprep.subr.mxu0 %v141
    %1130 = vmatpush1.msra.mxu0 %v140
    %1131 = vmatprep.subr.mxu0 %v145
    %1132 = vmatpush1.msra.mxu0 %v144
    %1133 = vmatprep.subr.mxu0 %v149
    %1134 = vmatpush1.msra.mxu0 %v148
    %1135 = vmatprep.subr.mxu0 %v153
    %1136 = vmatpush1.msra.mxu0 %v152
    %1137 = vmatprep.subr.mxu0 %v157
    %1138 = vmatpush1.msra.mxu0 %v156
    %1139 = vmatprep.subr.mxu0 %v161
    %1140 = vmatpush1.msra.mxu0 %v160
    %1141 = vmatprep.subr.mxu0 %v165
    %1142 = vmatpush1.msra.mxu0 %v164
    %1143 = vmatprep.subr.mxu0 %v169
    %1144 = vmatpush1.msra.mxu0 %v168
    %1145 = vmatprep.subr.mxu0 %v173
    %1146 = vmatpush1.msra.mxu0 %v172
    %1147 = vmatprep.subr.mxu0 %v177
    %1148 = vmatpush1.msra.mxu0 %v176
    %1149 = vmatprep.subr.mxu0 %v181
    %1150 = vmatpush1.msra.mxu0 %v180
    %1151 = vmatprep.subr.mxu0 %v185
    %1152 = vmatpush1.msra.mxu0 %v184
    %1153 = vmatprep.subr.mxu0 %v189
    %1154 = vmatpush1.msra.mxu0 %v188
    %1155 = vmatprep.subr.mxu0 %v193
    %1156 = vmatpush1.msra.mxu0 %v192
    %1157 = vmatprep.subr.mxu0 %v197
    %1158 = vmatpush1.msra.mxu0 %v196
    %1159 = vmatprep.subr.mxu0 %v201
    %1160 = vmatpush1.msra.mxu0 %v200
    %1161 = vmatprep.subr.mxu0 %v205
    %1162 = vmatpush1.msra.mxu0 %v204
    %1163 = vmatprep.subr.mxu0 %v209
    %1164 = vmatpush1.msra.mxu0 %v208
    %1165 = vmatprep.mubr.f32.mxu0 %v865
    %1166 = vmatmul.mubr.f32.gmra.mrb[0].mxu0 %v1029
    %v1167 = vpop.f32.mrb[0].mxu0
    %v1168 = vadd.f32 %v351, %v1167
    %v1169 = vpop.f32.mrb[0].mxu0
    %v1170 = vadd.f32 %v355, %v1169
    %1171 = vdwg.mxu0
    %v1172 = vmul.f32 %v1097, 0.5
    %v1173 = vtanh.pop %v1172
    %v1174 = vmul.f32 %v1173, 0.5
    %v1175 = vadd.f32 %v1174, 0.5
    %v1176 = vmul.f32 %v1099, 0.5
    %v1177 = vtanh.pop %v1176
    %v1178 = vmul.f32 %v1177, 0.5
    %v1179 = vadd.f32 %v1178, 0.5
    %v1180 = vtanh.pop %v1168
    %v1181 = vmul.f32 %v1170, 0.5
    %v1182 = vtanh.pop %v1181
    %v1183 = vmul.f32 %v1182, 0.5
    %v1184 = vadd.f32 %v1183, 0.5
    %v1185 = vmul.f32 %v1179, %v863
    %v1186 = vmul.f32 %v1175, %v1180
    %v1187 = vadd.f32 %v1185, %v1186
    %v1188 = vtanh.pop %v1187
    %v1189 = vmul.f32 %v1184, %v1188
    %1190 = vmatprep.subr.mxu0 %v211
    %1191 = vmatpush1.msra.mxu0 %v210
    %1192 = vmatprep.subr.mxu0 %v215
    %1193 = vmatpush1.msra.mxu0 %v214
    %1194 = vmatprep.subr.mxu0 %v219
    %1195 = vmatpush1.msra.mxu0 %v218
    %1196 = vmatprep.subr.mxu0 %v223
    %1197 = vmatpush1.msra.mxu0 %v222
    %1198 = vmatprep.subr.mxu0 %v227
    %1199 = vmatpush1.msra.mxu0 %v226
    %1200 = vmatprep.subr.mxu0 %v231
    %1201 = vmatpush1.msra.mxu0 %v230
    %1202 = vmatprep.subr.mxu0 %v235
    %1203 = vmatpush1.msra.mxu0 %v234
    %1204 = vmatprep.subr.mxu0 %v239
    %1205 = vmatpush1.msra.mxu0 %v238
    %1206 = vmatprep.subr.mxu0 %v243
    %1207 = vmatpush1.msra.mxu0 %v242
    %1208 = vmatprep.subr.mxu0 %v247
    %1209 = vmatpush1.msra.mxu0 %v246
    %1210 = vmatprep.subr.mxu0 %v251
    %1211 = vmatpush1.msra.mxu0 %v250
    %1212 = vmatprep.subr.mxu0 %v255
    %1213 = vmatpush1.msra.mxu0 %v254
    %1214 = vmatprep.subr.mxu0 %v259
    %1215 = vmatpush1.msra.mxu0 %v258
    %1216 = vmatprep.subr.mxu0 %v263
    %1217 = vmatpush1.msra.mxu0 %v262
    %1218 = vmatprep.subr.mxu0 %v267
    %1219 = vmatpush1.msra.mxu0 %v266
    %1220 = vmatprep.subr.mxu0 %v271
    %1221 = vmatpush1.msra.mxu0 %v270
    %1222 = vmatprep.subr.mxu0 %v275
    %1223 = vmatpush1.msra.mxu0 %v274
    %1224 = vmatprep.subr.mxu0 %v279
    %1225 = vmatpush1.msra.mxu0 %v278
    %1226 = vmatprep.subr.mxu0 %v283
    %1227 = vmatpush1.msra.mxu0 %v282
    %1228 = vmatprep.subr.mxu0 %v287
    %1229 = vmatpush1.msra.mxu0 %v286
    %1230 = vmatprep.subr.mxu0 %v291
    %1231 = vmatpush1.msra.mxu0 %v290
    %1232 = vmatprep.subr.mxu0 %v295
    %1233 = vmatpush1.msra.mxu0 %v294
    %1234 = vmatprep.subr.mxu0 %v299
    %1235 = vmatpush1.msra.mxu0 %v298
    %1236 = vmatprep.subr.mxu0 %v303
    %1237 = vmatpush1.msra.mxu0 %v302
    %1238 = vmatprep.subr.mxu0 %v307
    %1239 = vmatpush1.msra.mxu0 %v306
    %1240 = vmatprep.subr.mxu0 %v311
    %1241 = vmatpush1.msra.mxu0 %v310
    %1242 = vmatprep.subr.mxu0 %v315
    %1243 = vmatpush1.msra.mxu0 %v314
    %1244 = vmatprep.subr.mxu0 %v319
    %1245 = vmatpush1.msra.mxu0 %v318
    %1246 = vmatprep.subr.mxu0 %v323
    %1247 = vmatpush1.msra.mxu0 %v322
    %1248 = vmatprep.subr.mxu0 %v327
    %1249 = vmatpush1.msra.mxu0 %v326
    %1250 = vmatprep.subr.mxu0 %v331
    %1251 = vmatpush1.msra.mxu0 %v330
    %1252 = vmatprep.subr.mxu0 %v335
    %1253 = vmatpush1.msra.mxu0 %v334
    %1254 = vmatprep.mubr.f32.mxu0 %v1025
    %1255 = vmatmul.mubr.f32.gmra.mrb[0].mxu0 %v1189
    %v1256 = vpop.f32.mrb[0].mxu0
    %v1257 = vadd.f32 %v365, %v1256
    %v1258 = vpop.f32.mrb[0].mxu0
    %v1259 = vadd.f32 %v369, %v1258
    %1260 = vdwg.mxu0
    %1261 = vmatprep.subr.mxu0 %v213
    %1262 = vmatpush1.msra.mxu0 %v212
    %1263 = vmatprep.subr.mxu0 %v217
    %1264 = vmatpush1.msra.mxu0 %v216
    %1265 = vmatprep.subr.mxu0 %v221
    %1266 = vmatpush1.msra.mxu0 %v220
    %1267 = vmatprep.subr.mxu0 %v225
    %1268 = vmatpush1.msra.mxu0 %v224
    %1269 = vmatprep.subr.mxu0 %v229
    %1270 = vmatpush1.msra.mxu0 %v228
    %1271 = vmatprep.subr.mxu0 %v233
    %1272 = vmatpush1.msra.mxu0 %v232
    %1273 = vmatprep.subr.mxu0 %v237
    %1274 = vmatpush1.msra.mxu0 %v236
    %1275 = vmatprep.subr.mxu0 %v241
    %1276 = vmatpush1.msra.mxu0 %v240
    %1277 = vmatprep.subr.mxu0 %v245
    %1278 = vmatpush1.msra.mxu0 %v244
    %1279 = vmatprep.subr.mxu0 %v249
    %1280 = vmatpush1.msra.mxu0 %v248
    %1281 = vmatprep.subr.mxu0 %v253
    %1282 = vmatpush1.msra.mxu0 %v252
    %1283 = vmatprep.subr.mxu0 %v257
    %1284 = vmatpush1.msra.mxu0 %v256
    %1285 = vmatprep.subr.mxu0 %v261
    %1286 = vmatpush1.msra.mxu0 %v260
    %1287 = vmatprep.subr.mxu0 %v265
    %1288 = vmatpush1.msra.mxu0 %v264
    %1289 = vmatprep.subr.mxu0 %v269
    %1290 = vmatpush1.msra.mxu0 %v268
    %1291 = vmatprep.subr.mxu0 %v273
    %1292 = vmatpush1.msra.mxu0 %v272
    %1293 = vmatprep.subr.mxu0 %v277
    %1294 = vmatpush1.msra.mxu0 %v276
    %1295 = vmatprep.subr.mxu0 %v281
    %1296 = vmatpush1.msra.mxu0 %v280
    %1297 = vmatprep.subr.mxu0 %v285
    %1298 = vmatpush1.msra.mxu0 %v284
    %1299 = vmatprep.subr.mxu0 %v289
    %1300 = vmatpush1.msra.mxu0 %v288
    %1301 = vmatprep.subr.mxu0 %v293
    %1302 = vmatpush1.msra.mxu0 %v292
    %1303 = vmatprep.subr.mxu0 %v297
    %1304 = vmatpush1.msra.mxu0 %v296
    %1305 = vmatprep.subr.mxu0 %v301
    %1306 = vmatpush1.msra.mxu0 %v300
    %1307 = vmatprep.subr.mxu0 %v305
    %1308 = vmatpush1.msra.mxu0 %v304
    %1309 = vmatprep.subr.mxu0 %v309
    %1310 = vmatpush1.msra.mxu0 %v308
    %1311 = vmatprep.subr.mxu0 %v313
    %1312 = vmatpush1.msra.mxu0 %v312
    %1313 = vmatprep.subr.mxu0 %v317
    %1314 = vmatpush1.msra.mxu0 %v316
    %1315 = vmatprep.subr.mxu0 %v321
    %1316 = vmatpush1.msra.mxu0 %v320
    %1317 = vmatprep.subr.mxu0 %v325
    %1318 = vmatpush1.msra.mxu0 %v324
    %1319 = vmatprep.subr.mxu0 %v329
    %1320 = vmatpush1.msra.mxu0 %v328
    %1321 = vmatprep.subr.mxu0 %v333
    %1322 = vmatpush1.msra.mxu0 %v332
    %1323 = vmatprep.subr.mxu0 %v337
    %1324 = vmatpush1.msra.mxu0 %v336
    %1325 = vmatprep.mubr.f32.mxu0 %v1025
    %1326 = vmatmul.mubr.f32.gmra.mrb[0].mxu0 %v1189
    %v1327 = vpop.f32.mrb[0].mxu0
    %v1328 = vadd.f32 %v373, %v1327
    %v1329 = vpop.f32.mrb[0].mxu0
    %v1330 = vadd.f32 %v377, %v1329
    %1331 = vdwg.mxu0
    %v1332 = vmul.f32 %v1257, 0.5
    %v1333 = vtanh.pop %v1332
    %v1334 = vmul.f32 %v1333, 0.5
    %v1335 = vadd.f32 %v1334, 0.5
    %v1336 = vmul.f32 %v1259, 0.5
    %v1337 = vtanh.pop %v1336
    %v1338 = vmul.f32 %v1337, 0.5
    %v1339 = vadd.f32 %v1338, 0.5
    %v1340 = vtanh.pop %v1328
    %v1341 = vmul.f32 %v1330, 0.5
    %v1342 = vtanh.pop %v1341
    %v1343 = vmul.f32 %v1342, 0.5
    %v1344 = vadd.f32 %v1343, 0.5
    %v1345 = vmul.f32 %v1339, %v1023
    %v1346 = vmul.f32 %v1335, %v1340
    %v1347 = vadd.f32 %v1345, %v1346
    %v1348 = vtanh.pop %v1347
    %v1349 = vmul.f32 %v1344, %v1348
    %s1350 = scalar_lea.vmem [#allocation2], 16
    %1351 = vst [vmem:[%s1350] sm:$0xff] %v1349
    %s1352 = scalar_lea.vmem [#allocation3], 24
    %v1353 = vld [vmem:[%s1352] sm:$0xff]
    %1354 = vmatprep.subr.mxu0 %v83
    %1355 = vmatpush1.msra.mxu0 %v82
    %1356 = vmatprep.subr.mxu0 %v87
    %1357 = vmatpush1.msra.mxu0 %v86
    %1358 = vmatprep.subr.mxu0 %v91
    %1359 = vmatpush1.msra.mxu0 %v90
    %1360 = vmatprep.subr.mxu0 %v95
    %1361 = vmatpush1.msra.mxu0 %v94
    %1362 = vmatprep.subr.mxu0 %v99
    %1363 = vmatpush1.msra.mxu0 %v98
    %1364 = vmatprep.subr.mxu0 %v103
    %1365 = vmatpush1.msra.mxu0 %v102
    %1366 = vmatprep.subr.mxu0 %v107
    %1367 = vmatpush1.msra.mxu0 %v106
    %1368 = vmatprep.subr.mxu0 %v111
    %1369 = vmatpush1.msra.mxu0 %v110
    %1370 = vmatprep.subr.mxu0 %v115
    %1371 = vmatpush1.msra.mxu0 %v114
    %1372 = vmatprep.subr.mxu0 %v119
    %1373 = vmatpush1.msra.mxu0 %v118
    %1374 = vmatprep.subr.mxu0 %v123
    %1375 = vmatpush1.msra.mxu0 %v122
    %1376 = vmatprep.subr.mxu0 %v127
    %1377 = vmatpush1.msra.mxu0 %v126
    %1378 = vmatprep.subr.mxu0 %v131
    %1379 = vmatpush1.msra.mxu0 %v130
    %1380 = vmatprep.subr.mxu0 %v135
    %1381 = vmatpush1.msra.mxu0 %v134
    %1382 = vmatprep.subr.mxu0 %v139
    %1383 = vmatpush1.msra.mxu0 %v138
    %1384 = vmatprep.subr.mxu0 %v143
    %1385 = vmatpush1.msra.mxu0 %v142
    %1386 = vmatprep.subr.mxu0 %v147
    %1387 = vmatpush1.msra.mxu0 %v146
    %1388 = vmatprep.subr.mxu0 %v151
    %1389 = vmatpush1.msra.mxu0 %v150
    %1390 = vmatprep.subr.mxu0 %v155
    %1391 = vmatpush1.msra.mxu0 %v154
    %1392 = vmatprep.subr.mxu0 %v159
    %1393 = vmatpush1.msra.mxu0 %v158
    %1394 = vmatprep.subr.mxu0 %v163
    %1395 = vmatpush1.msra.mxu0 %v162
    %1396 = vmatprep.subr.mxu0 %v167
    %1397 = vmatpush1.msra.mxu0 %v166
    %1398 = vmatprep.subr.mxu0 %v171
    %1399 = vmatpush1.msra.mxu0 %v170
    %1400 = vmatprep.subr.mxu0 %v175
    %1401 = vmatpush1.msra.mxu0 %v174
    %1402 = vmatprep.subr.mxu0 %v179
    %1403 = vmatpush1.msra.mxu0 %v178
    %1404 = vmatprep.subr.mxu0 %v183
    %1405 = vmatpush1.msra.mxu0 %v182
    %1406 = vmatprep.subr.mxu0 %v187
    %1407 = vmatpush1.msra.mxu0 %v186
    %1408 = vmatprep.subr.mxu0 %v191
    %1409 = vmatpush1.msra.mxu0 %v190
    %1410 = vmatprep.subr.mxu0 %v195
    %1411 = vmatpush1.msra.mxu0 %v194
    %1412 = vmatprep.subr.mxu0 %v199
    %1413 = vmatpush1.msra.mxu0 %v198
    %1414 = vmatprep.subr.mxu0 %v203
    %1415 = vmatpush1.msra.mxu0 %v202
    %1416 = vmatprep.subr.mxu0 %v207
    %1417 = vmatpush1.msra.mxu0 %v206
    %1418 = vmatprep.mubr.f32.mxu0 %v1189
    %1419 = vmatmul.mubr.f32.gmra.mrb[0].mxu0 %v1353
    %v1420 = vpop.f32.mrb[0].mxu0
    %v1421 = vadd.f32 %v343, %v1420
    %v1422 = vpop.f32.mrb[0].mxu0
    %v1423 = vadd.f32 %v347, %v1422
    %1424 = vdwg.mxu0
    %1425 = vmatprep.subr.mxu0 %v85
    %1426 = vmatpush1.msra.mxu0 %v84
    %1427 = vmatprep.subr.mxu0 %v89
    %1428 = vmatpush1.msra.mxu0 %v88
    %1429 = vmatprep.subr.mxu0 %v93
    %1430 = vmatpush1.msra.mxu0 %v92
    %1431 = vmatprep.subr.mxu0 %v97
    %1432 = vmatpush1.msra.mxu0 %v96
    %1433 = vmatprep.subr.mxu0 %v101
    %1434 = vmatpush1.msra.mxu0 %v100
    %1435 = vmatprep.subr.mxu0 %v105
    %1436 = vmatpush1.msra.mxu0 %v104
    %1437 = vmatprep.subr.mxu0 %v109
    %1438 = vmatpush1.msra.mxu0 %v108
    %1439 = vmatprep.subr.mxu0 %v113
    %1440 = vmatpush1.msra.mxu0 %v112
    %1441 = vmatprep.subr.mxu0 %v117
    %1442 = vmatpush1.msra.mxu0 %v116
    %1443 = vmatprep.subr.mxu0 %v121
    %1444 = vmatpush1.msra.mxu0 %v120
    %1445 = vmatprep.subr.mxu0 %v125
    %1446 = vmatpush1.msra.mxu0 %v124
    %1447 = vmatprep.subr.mxu0 %v129
    %1448 = vmatpush1.msra.mxu0 %v128
    %1449 = vmatprep.subr.mxu0 %v133
    %1450 = vmatpush1.msra.mxu0 %v132
    %1451 = vmatprep.subr.mxu0 %v137
    %1452 = vmatpush1.msra.mxu0 %v136
    %1453 = vmatprep.subr.mxu0 %v141
    %1454 = vmatpush1.msra.mxu0 %v140
    %1455 = vmatprep.subr.mxu0 %v145
    %1456 = vmatpush1.msra.mxu0 %v144
    %1457 = vmatprep.subr.mxu0 %v149
    %1458 = vmatpush1.msra.mxu0 %v148
    %1459 = vmatprep.subr.mxu0 %v153
    %1460 = vmatpush1.msra.mxu0 %v152
    %1461 = vmatprep.subr.mxu0 %v157
    %1462 = vmatpush1.msra.mxu0 %v156
    %1463 = vmatprep.subr.mxu0 %v161
    %1464 = vmatpush1.msra.mxu0 %v160
    %1465 = vmatprep.subr.mxu0 %v165
    %1466 = vmatpush1.msra.mxu0 %v164
    %1467 = vmatprep.subr.mxu0 %v169
    %1468 = vmatpush1.msra.mxu0 %v168
    %1469 = vmatprep.subr.mxu0 %v173
    %1470 = vmatpush1.msra.mxu0 %v172
    %1471 = vmatprep.subr.mxu0 %v177
    %1472 = vmatpush1.msra.mxu0 %v176
    %1473 = vmatprep.subr.mxu0 %v181
    %1474 = vmatpush1.msra.mxu0 %v180
    %1475 = vmatprep.subr.mxu0 %v185
    %1476 = vmatpush1.msra.mxu0 %v184
    %1477 = vmatprep.subr.mxu0 %v189
    %1478 = vmatpush1.msra.mxu0 %v188
    %1479 = vmatprep.subr.mxu0 %v193
    %1480 = vmatpush1.msra.mxu0 %v192
    %1481 = vmatprep.subr.mxu0 %v197
    %1482 = vmatpush1.msra.mxu0 %v196
    %1483 = vmatprep.subr.mxu0 %v201
    %1484 = vmatpush1.msra.mxu0 %v200
    %1485 = vmatprep.subr.mxu0 %v205
    %1486 = vmatpush1.msra.mxu0 %v204
    %1487 = vmatprep.subr.mxu0 %v209
    %1488 = vmatpush1.msra.mxu0 %v208
    %1489 = vmatprep.mubr.f32.mxu0 %v1189
    %1490 = vmatmul.mubr.f32.gmra.mrb[0].mxu0 %v1353
    %v1491 = vpop.f32.mrb[0].mxu0
    %v1492 = vadd.f32 %v351, %v1491
    %v1493 = vpop.f32.mrb[0].mxu0
    %v1494 = vadd.f32 %v355, %v1493
    %1495 = vdwg.mxu0
    %v1496 = vmul.f32 %v1421, 0.5
    %v1497 = vtanh.pop %v1496
    %v1498 = vmul.f32 %v1497, 0.5
    %v1499 = vadd.f32 %v1498, 0.5
    %v1500 = vmul.f32 %v1423, 0.5
    %v1501 = vtanh.pop %v1500
    %v1502 = vmul.f32 %v1501, 0.5
    %v1503 = vadd.f32 %v1502, 0.5
    %v1504 = vtanh.pop %v1492
    %v1505 = vmul.f32 %v1494, 0.5
    %v1506 = vtanh.pop %v1505
    %v1507 = vmul.f32 %v1506, 0.5
    %v1508 = vadd.f32 %v1507, 0.5
    %v1509 = vmul.f32 %v1503, %v1187
    %v1510 = vmul.f32 %v1499, %v1504
    %v1511 = vadd.f32 %v1509, %v1510
    %v1512 = vtanh.pop %v1511
    %v1513 = vmul.f32 %v1508, %v1512
    %1514 = vmatprep.subr.mxu0 %v211
    %1515 = vmatpush1.msra.mxu0 %v210
    %1516 = vmatprep.subr.mxu0 %v215
    %1517 = vmatpush1.msra.mxu0 %v214
    %1518 = vmatprep.subr.mxu0 %v219
    %1519 = vmatpush1.msra.mxu0 %v218
    %1520 = vmatprep.subr.mxu0 %v223
    %1521 = vmatpush1.msra.mxu0 %v222
    %1522 = vmatprep.subr.mxu0 %v227
    %1523 = vmatpush1.msra.mxu0 %v226
    %1524 = vmatprep.subr.mxu0 %v231
    %1525 = vmatpush1.msra.mxu0 %v230
    %1526 = vmatprep.subr.mxu0 %v235
    %1527 = vmatpush1.msra.mxu0 %v234
    %1528 = vmatprep.subr.mxu0 %v239
    %1529 = vmatpush1.msra.mxu0 %v238
    %1530 = vmatprep.subr.mxu0 %v243
    %1531 = vmatpush1.msra.mxu0 %v242
    %1532 = vmatprep.subr.mxu0 %v247
    %1533 = vmatpush1.msra.mxu0 %v246
    %1534 = vmatprep.subr.mxu0 %v251
    %1535 = vmatpush1.msra.mxu0 %v250
    %1536 = vmatprep.subr.mxu0 %v255
    %1537 = vmatpush1.msra.mxu0 %v254
    %1538 = vmatprep.subr.mxu0 %v259
    %1539 = vmatpush1.msra.mxu0 %v258
    %1540 = vmatprep.subr.mxu0 %v263
    %1541 = vmatpush1.msra.mxu0 %v262
    %1542 = vmatprep.subr.mxu0 %v267
    %1543 = vmatpush1.msra.mxu0 %v266
    %1544 = vmatprep.subr.mxu0 %v271
    %1545 = vmatpush1.msra.mxu0 %v270
    %1546 = vmatprep.subr.mxu0 %v275
    %1547 = vmatpush1.msra.mxu0 %v274
    %1548 = vmatprep.subr.mxu0 %v279
    %1549 = vmatpush1.msra.mxu0 %v278
    %1550 = vmatprep.subr.mxu0 %v283
    %1551 = vmatpush1.msra.mxu0 %v282
    %1552 = vmatprep.subr.mxu0 %v287
    %1553 = vmatpush1.msra.mxu0 %v286
    %1554 = vmatprep.subr.mxu0 %v291
    %1555 = vmatpush1.msra.mxu0 %v290
    %1556 = vmatprep.subr.mxu0 %v295
    %1557 = vmatpush1.msra.mxu0 %v294
    %1558 = vmatprep.subr.mxu0 %v299
    %1559 = vmatpush1.msra.mxu0 %v298
    %1560 = vmatprep.subr.mxu0 %v303
    %1561 = vmatpush1.msra.mxu0 %v302
    %1562 = vmatprep.subr.mxu0 %v307
    %1563 = vmatpush1.msra.mxu0 %v306
    %1564 = vmatprep.subr.mxu0 %v311
    %1565 = vmatpush1.msra.mxu0 %v310
    %1566 = vmatprep.subr.mxu0 %v315
    %1567 = vmatpush1.msra.mxu0 %v314
    %1568 = vmatprep.subr.mxu0 %v319
    %1569 = vmatpush1.msra.mxu0 %v318
    %1570 = vmatprep.subr.mxu0 %v323
    %1571 = vmatpush1.msra.mxu0 %v322
    %1572 = vmatprep.subr.mxu0 %v327
    %1573 = vmatpush1.msra.mxu0 %v326
    %1574 = vmatprep.subr.mxu0 %v331
    %1575 = vmatpush1.msra.mxu0 %v330
    %1576 = vmatprep.subr.mxu0 %v335
    %1577 = vmatpush1.msra.mxu0 %v334
    %1578 = vmatprep.mubr.f32.mxu0 %v1349
    %1579 = vmatmul.mubr.f32.gmra.mrb[0].mxu0 %v1513
    %v1580 = vpop.f32.mrb[0].mxu0
    %v1581 = vadd.f32 %v365, %v1580
    %v1582 = vpop.f32.mrb[0].mxu0
    %v1583 = vadd.f32 %v369, %v1582
    %1584 = vdwg.mxu0
    %1585 = vmatprep.subr.mxu0 %v213
    %1586 = vmatpush1.msra.mxu0 %v212
    %1587 = vmatprep.subr.mxu0 %v217
    %1588 = vmatpush1.msra.mxu0 %v216
    %1589 = vmatprep.subr.mxu0 %v221
    %1590 = vmatpush1.msra.mxu0 %v220
    %1591 = vmatprep.subr.mxu0 %v225
    %1592 = vmatpush1.msra.mxu0 %v224
    %1593 = vmatprep.subr.mxu0 %v229
    %1594 = vmatpush1.msra.mxu0 %v228
    %1595 = vmatprep.subr.mxu0 %v233
    %1596 = vmatpush1.msra.mxu0 %v232
    %1597 = vmatprep.subr.mxu0 %v237
    %1598 = vmatpush1.msra.mxu0 %v236
    %1599 = vmatprep.subr.mxu0 %v241
    %1600 = vmatpush1.msra.mxu0 %v240
    %1601 = vmatprep.subr.mxu0 %v245
    %1602 = vmatpush1.msra.mxu0 %v244
    %1603 = vmatprep.subr.mxu0 %v249
    %1604 = vmatpush1.msra.mxu0 %v248
    %1605 = vmatprep.subr.mxu0 %v253
    %1606 = vmatpush1.msra.mxu0 %v252
    %1607 = vmatprep.subr.mxu0 %v257
    %1608 = vmatpush1.msra.mxu0 %v256
    %1609 = vmatprep.subr.mxu0 %v261
    %1610 = vmatpush1.msra.mxu0 %v260
    %1611 = vmatprep.subr.mxu0 %v265
    %1612 = vmatpush1.msra.mxu0 %v264
    %1613 = vmatprep.subr.mxu0 %v269
    %1614 = vmatpush1.msra.mxu0 %v268
    %1615 = vmatprep.subr.mxu0 %v273
    %1616 = vmatpush1.msra.mxu0 %v272
    %1617 = vmatprep.subr.mxu0 %v277
    %1618 = vmatpush1.msra.mxu0 %v276
    %1619 = vmatprep.subr.mxu0 %v281
    %1620 = vmatpush1.msra.mxu0 %v280
    %1621 = vmatprep.subr.mxu0 %v285
    %1622 = vmatpush1.msra.mxu0 %v284
    %1623 = vmatprep.subr.mxu0 %v289
    %1624 = vmatpush1.msra.mxu0 %v288
    %1625 = vmatprep.subr.mxu0 %v293
    %1626 = vmatpush1.msra.mxu0 %v292
    %1627 = vmatprep.subr.mxu0 %v297
    %1628 = vmatpush1.msra.mxu0 %v296
    %1629 = vmatprep.subr.mxu0 %v301
    %1630 = vmatpush1.msra.mxu0 %v300
    %1631 = vmatprep.subr.mxu0 %v305
    %1632 = vmatpush1.msra.mxu0 %v304
    %1633 = vmatprep.subr.mxu0 %v309
    %1634 = vmatpush1.msra.mxu0 %v308
    %1635 = vmatprep.subr.mxu0 %v313
    %1636 = vmatpush1.msra.mxu0 %v312
    %1637 = vmatprep.subr.mxu0 %v317
    %1638 = vmatpush1.msra.mxu0 %v316
    %1639 = vmatprep.subr.mxu0 %v321
    %1640 = vmatpush1.msra.mxu0 %v320
    %1641 = vmatprep.subr.mxu0 %v325
    %1642 = vmatpush1.msra.mxu0 %v324
    %1643 = vmatprep.subr.mxu0 %v329
    %1644 = vmatpush1.msra.mxu0 %v328
    %1645 = vmatprep.subr.mxu0 %v333
    %1646 = vmatpush1.msra.mxu0 %v332
    %1647 = vmatprep.subr.mxu0 %v337
    %1648 = vmatpush1.msra.mxu0 %v336
    %1649 = vmatprep.mubr.f32.mxu0 %v1349
    %1650 = vmatmul.mubr.f32.gmra.mrb[0].mxu0 %v1513
    %v1651 = vpop.f32.mrb[0].mxu0
    %v1652 = vadd.f32 %v373, %v1651
    %v1653 = vpop.f32.mrb[0].mxu0
    %v1654 = vadd.f32 %v377, %v1653
    %1655 = vdwg.mxu0
    %v1656 = vmul.f32 %v1581, 0.5
    %v1657 = vtanh.pop %v1656
    %v1658 = vmul.f32 %v1657, 0.5
    %v1659 = vadd.f32 %v1658, 0.5
    %v1660 = vmul.f32 %v1583, 0.5
    %v1661 = vtanh.pop %v1660
    %v1662 = vmul.f32 %v1661, 0.5
    %v1663 = vadd.f32 %v1662, 0.5
    %v1664 = vtanh.pop %v1652
    %v1665 = vmul.f32 %v1654, 0.5
    %v1666 = vtanh.pop %v1665
    %v1667 = vmul.f32 %v1666, 0.5
    %v1668 = vadd.f32 %v1667, 0.5
    %v1669 = vmul.f32 %v1663, %v1347
    %v1670 = vmul.f32 %v1659, %v1664
    %v1671 = vadd.f32 %v1669, %v1670
    %v1672 = vtanh.pop %v1671
    %v1673 = vmul.f32 %v1668, %v1672
    %s1674 = scalar_lea.vmem [#allocation2], 24
    %1675 = vst [vmem:[%s1674] sm:$0xff] %v1673
    %s1676 = scalar_lea.vmem [#allocation3], 32
    %v1677 = vld [vmem:[%s1676] sm:$0xff]
    %1678 = vmatprep.subr.mxu0 %v83
    %1679 = vmatpush1.msra.mxu0 %v82
    %1680 = vmatprep.subr.mxu0 %v87
    %1681 = vmatpush1.msra.mxu0 %v86
    %1682 = vmatprep.subr.mxu0 %v91
    %1683 = vmatpush1.msra.mxu0 %v90
    %1684 = vmatprep.subr.mxu0 %v95
    %1685 = vmatpush1.msra.mxu0 %v94
    %1686 = vmatprep.subr.mxu0 %v99
    %1687 = vmatpush1.msra.mxu0 %v98
    %1688 = vmatprep.subr.mxu0 %v103
    %1689 = vmatpush1.msra.mxu0 %v102
    %1690 = vmatprep.subr.mxu0 %v107
    %1691 = vmatpush1.msra.mxu0 %v106
    %1692 = vmatprep.subr.mxu0 %v111
    %1693 = vmatpush1.msra.mxu0 %v110
    %1694 = vmatprep.subr.mxu0 %v115
    %1695 = vmatpush1.msra.mxu0 %v114
    %1696 = vmatprep.subr.mxu0 %v119
    %1697 = vmatpush1.msra.mxu0 %v118
    %1698 = vmatprep.subr.mxu0 %v123
    %1699 = vmatpush1.msra.mxu0 %v122
    %1700 = vmatprep.subr.mxu0 %v127
    %1701 = vmatpush1.msra.mxu0 %v126
    %1702 = vmatprep.subr.mxu0 %v131
    %1703 = vmatpush1.msra.mxu0 %v130
    %1704 = vmatprep.subr.mxu0 %v135
    %1705 = vmatpush1.msra.mxu0 %v134
    %1706 = vmatprep.subr.mxu0 %v139
    %1707 = vmatpush1.msra.mxu0 %v138
    %1708 = vmatprep.subr.mxu0 %v143
    %1709 = vmatpush1.msra.mxu0 %v142
    %1710 = vmatprep.subr.mxu0 %v147
    %1711 = vmatpush1.msra.mxu0 %v146
    %1712 = vmatprep.subr.mxu0 %v151
    %1713 = vmatpush1.msra.mxu0 %v150
    %1714 = vmatprep.subr.mxu0 %v155
    %1715 = vmatpush1.msra.mxu0 %v154
    %1716 = vmatprep.subr.mxu0 %v159
    %1717 = vmatpush1.msra.mxu0 %v158
    %1718 = vmatprep.subr.mxu0 %v163
    %1719 = vmatpush1.msra.mxu0 %v162
    %1720 = vmatprep.subr.mxu0 %v167
    %1721 = vmatpush1.msra.mxu0 %v166
    %1722 = vmatprep.subr.mxu0 %v171
    %1723 = vmatpush1.msra.mxu0 %v170
    %1724 = vmatprep.subr.mxu0 %v175
    %1725 = vmatpush1.msra.mxu0 %v174
    %1726 = vmatprep.subr.mxu0 %v179
    %1727 = vmatpush1.msra.mxu0 %v178
    %1728 = vmatprep.subr.mxu0 %v183
    %1729 = vmatpush1.msra.mxu0 %v182
    %1730 = vmatprep.subr.mxu0 %v187
    %1731 = vmatpush1.msra.mxu0 %v186
    %1732 = vmatprep.subr.mxu0 %v191
    %1733 = vmatpush1.msra.mxu0 %v190
    %1734 = vmatprep.subr.mxu0 %v195
    %1735 = vmatpush1.msra.mxu0 %v194
    %1736 = vmatprep.subr.mxu0 %v199
    %1737 = vmatpush1.msra.mxu0 %v198
    %1738 = vmatprep.subr.mxu0 %v203
    %1739 = vmatpush1.msra.mxu0 %v202
    %1740 = vmatprep.subr.mxu0 %v207
    %1741 = vmatpush1.msra.mxu0 %v206
    %1742 = vmatprep.mubr.f32.mxu0 %v1513
    %1743 = vmatmul.mubr.f32.gmra.mrb[0].mxu0 %v1677
    %v1744 = vpop.f32.mrb[0].mxu0
    %v1745 = vadd.f32 %v343, %v1744
    %v1746 = vpop.f32.mrb[0].mxu0
    %v1747 = vadd.f32 %v347, %v1746
    %1748 = vdwg.mxu0
    %1749 = vmatprep.subr.mxu0 %v85
    %1750 = vmatpush1.msra.mxu0 %v84
    %1751 = vmatprep.subr.mxu0 %v89
    %1752 = vmatpush1.msra.mxu0 %v88
    %1753 = vmatprep.subr.mxu0 %v93
    %1754 = vmatpush1.msra.mxu0 %v92
    %1755 = vmatprep.subr.mxu0 %v97
    %1756 = vmatpush1.msra.mxu0 %v96
    %1757 = vmatprep.subr.mxu0 %v101
    %1758 = vmatpush1.msra.mxu0 %v100
    %1759 = vmatprep.subr.mxu0 %v105
    %1760 = vmatpush1.msra.mxu0 %v104
    %1761 = vmatprep.subr.mxu0 %v109
    %1762 = vmatpush1.msra.mxu0 %v108
    %1763 = vmatprep.subr.mxu0 %v113
    %1764 = vmatpush1.msra.mxu0 %v112
    %1765 = vmatprep.subr.mxu0 %v117
    %1766 = vmatpush1.msra.mxu0 %v116
    %1767 = vmatprep.subr.mxu0 %v121
    %1768 = vmatpush1.msra.mxu0 %v120
    %1769 = vmatprep.subr.mxu0 %v125
    %1770 = vmatpush1.msra.mxu0 %v124
    %1771 = vmatprep.subr.mxu0 %v129
    %1772 = vmatpush1.msra.mxu0 %v128
    %1773 = vmatprep.subr.mxu0 %v133
    %1774 = vmatpush1.msra.mxu0 %v132
    %1775 = vmatprep.subr.mxu0 %v137
    %1776 = vmatpush1.msra.mxu0 %v136
    %1777 = vmatprep.subr.mxu0 %v141
    %1778 = vmatpush1.msra.mxu0 %v140
    %1779 = vmatprep.subr.mxu0 %v145
    %1780 = vmatpush1.msra.mxu0 %v144
    %1781 = vmatprep.subr.mxu0 %v149
    %1782 = vmatpush1.msra.mxu0 %v148
    %1783 = vmatprep.subr.mxu0 %v153
    %1784 = vmatpush1.msra.mxu0 %v152
    %1785 = vmatprep.subr.mxu0 %v157
    %1786 = vmatpush1.msra.mxu0 %v156
    %1787 = vmatprep.subr.mxu0 %v161
    %1788 = vmatpush1.msra.mxu0 %v160
    %1789 = vmatprep.subr.mxu0 %v165
    %1790 = vmatpush1.msra.mxu0 %v164
    %1791 = vmatprep.subr.mxu0 %v169
    %1792 = vmatpush1.msra.mxu0 %v168
    %1793 = vmatprep.subr.mxu0 %v173
    %1794 = vmatpush1.msra.mxu0 %v172
    %1795 = vmatprep.subr.mxu0 %v177
    %1796 = vmatpush1.msra.mxu0 %v176
    %1797 = vmatprep.subr.mxu0 %v181
    %1798 = vmatpush1.msra.mxu0 %v180
    %1799 = vmatprep.subr.mxu0 %v185
    %1800 = vmatpush1.msra.mxu0 %v184
    %1801 = vmatprep.subr.mxu0 %v189
    %1802 = vmatpush1.msra.mxu0 %v188
    %1803 = vmatprep.subr.mxu0 %v193
    %1804 = vmatpush1.msra.mxu0 %v192
    %1805 = vmatprep.subr.mxu0 %v197
    %1806 = vmatpush1.msra.mxu0 %v196
    %1807 = vmatprep.subr.mxu0 %v201
    %1808 = vmatpush1.msra.mxu0 %v200
    %1809 = vmatprep.subr.mxu0 %v205
    %1810 = vmatpush1.msra.mxu0 %v204
    %1811 = vmatprep.subr.mxu0 %v209
    %1812 = vmatpush1.msra.mxu0 %v208
    %1813 = vmatprep.mubr.f32.mxu0 %v1513
    %1814 = vmatmul.mubr.f32.gmra.mrb[0].mxu0 %v1677
    %v1815 = vpop.f32.mrb[0].mxu0
    %v1816 = vadd.f32 %v351, %v1815
    %v1817 = vpop.f32.mrb[0].mxu0
    %v1818 = vadd.f32 %v355, %v1817
    %1819 = vdwg.mxu0
    %v1820 = vmul.f32 %v1745, 0.5
    %v1821 = vtanh.pop %v1820
    %v1822 = vmul.f32 %v1821, 0.5
    %v1823 = vadd.f32 %v1822, 0.5
    %v1824 = vmul.f32 %v1747, 0.5
    %v1825 = vtanh.pop %v1824
    %v1826 = vmul.f32 %v1825, 0.5
    %v1827 = vadd.f32 %v1826, 0.5
    %v1828 = vtanh.pop %v1816
    %v1829 = vmul.f32 %v1818, 0.5
    %v1830 = vtanh.pop %v1829
    %v1831 = vmul.f32 %v1830, 0.5
    %v1832 = vadd.f32 %v1831, 0.5
    %v1833 = vmul.f32 %v1827, %v1511
    %v1834 = vmul.f32 %v1823, %v1828
    %v1835 = vadd.f32 %v1833, %v1834
    %v1836 = vtanh.pop %v1835
    %v1837 = vmul.f32 %v1832, %v1836
    %1838 = vmatprep.subr.mxu0 %v211
    %1839 = vmatpush1.msra.mxu0 %v210
    %1840 = vmatprep.subr.mxu0 %v215
    %1841 = vmatpush1.msra.mxu0 %v214
    %1842 = vmatprep.subr.mxu0 %v219
    %1843 = vmatpush1.msra.mxu0 %v218
    %1844 = vmatprep.subr.mxu0 %v223
    %1845 = vmatpush1.msra.mxu0 %v222
    %1846 = vmatprep.subr.mxu0 %v227
    %1847 = vmatpush1.msra.mxu0 %v226
    %1848 = vmatprep.subr.mxu0 %v231
    %1849 = vmatpush1.msra.mxu0 %v230
    %1850 = vmatprep.subr.mxu0 %v235
    %1851 = vmatpush1.msra.mxu0 %v234
    %1852 = vmatprep.subr.mxu0 %v239
    %1853 = vmatpush1.msra.mxu0 %v238
    %1854 = vmatprep.subr.mxu0 %v243
    %1855 = vmatpush1.msra.mxu0 %v242
    %1856 = vmatprep.subr.mxu0 %v247
    %1857 = vmatpush1.msra.mxu0 %v246
    %1858 = vmatprep.subr.mxu0 %v251
    %1859 = vmatpush1.msra.mxu0 %v250
    %1860 = vmatprep.subr.mxu0 %v255
    %1861 = vmatpush1.msra.mxu0 %v254
    %1862 = vmatprep.subr.mxu0 %v259
    %1863 = vmatpush1.msra.mxu0 %v258
    %1864 = vmatprep.subr.mxu0 %v263
    %1865 = vmatpush1.msra.mxu0 %v262
    %1866 = vmatprep.subr.mxu0 %v267
    %1867 = vmatpush1.msra.mxu0 %v266
    %1868 = vmatprep.subr.mxu0 %v271
    %1869 = vmatpush1.msra.mxu0 %v270
    %1870 = vmatprep.subr.mxu0 %v275
    %1871 = vmatpush1.msra.mxu0 %v274
    %1872 = vmatprep.subr.mxu0 %v279
    %1873 = vmatpush1.msra.mxu0 %v278
    %1874 = vmatprep.subr.mxu0 %v283
    %1875 = vmatpush1.msra.mxu0 %v282
    %1876 = vmatprep.subr.mxu0 %v287
    %1877 = vmatpush1.msra.mxu0 %v286
    %1878 = vmatprep.subr.mxu0 %v291
    %1879 = vmatpush1.msra.mxu0 %v290
    %1880 = vmatprep.subr.mxu0 %v295
    %1881 = vmatpush1.msra.mxu0 %v294
    %1882 = vmatprep.subr.mxu0 %v299
    %1883 = vmatpush1.msra.mxu0 %v298
    %1884 = vmatprep.subr.mxu0 %v303
    %1885 = vmatpush1.msra.mxu0 %v302
    %1886 = vmatprep.subr.mxu0 %v307
    %1887 = vmatpush1.msra.mxu0 %v306
    %1888 = vmatprep.subr.mxu0 %v311
    %1889 = vmatpush1.msra.mxu0 %v310
    %1890 = vmatprep.subr.mxu0 %v315
    %1891 = vmatpush1.msra.mxu0 %v314
    %1892 = vmatprep.subr.mxu0 %v319
    %1893 = vmatpush1.msra.mxu0 %v318
    %1894 = vmatprep.subr.mxu0 %v323
    %1895 = vmatpush1.msra.mxu0 %v322
    %1896 = vmatprep.subr.mxu0 %v327
    %1897 = vmatpush1.msra.mxu0 %v326
    %1898 = vmatprep.subr.mxu0 %v331
    %1899 = vmatpush1.msra.mxu0 %v330
    %1900 = vmatprep.subr.mxu0 %v335
    %1901 = vmatpush1.msra.mxu0 %v334
    %1902 = vmatprep.mubr.f32.mxu0 %v1673
    %1903 = vmatmul.mubr.f32.gmra.mrb[0].mxu0 %v1837
    %v1904 = vpop.f32.mrb[0].mxu0
    %v1905 = vadd.f32 %v365, %v1904
    %v1906 = vpop.f32.mrb[0].mxu0
    %v1907 = vadd.f32 %v369, %v1906
    %1908 = vdwg.mxu0
    %1909 = vmatprep.subr.mxu0 %v213
    %1910 = vmatpush1.msra.mxu0 %v212
    %1911 = vmatprep.subr.mxu0 %v217
    %1912 = vmatpush1.msra.mxu0 %v216
    %1913 = vmatprep.subr.mxu0 %v221
    %1914 = vmatpush1.msra.mxu0 %v220
    %1915 = vmatprep.subr.mxu0 %v225
    %1916 = vmatpush1.msra.mxu0 %v224
    %1917 = vmatprep.subr.mxu0 %v229
    %1918 = vmatpush1.msra.mxu0 %v228
    %1919 = vmatprep.subr.mxu0 %v233
    %1920 = vmatpush1.msra.mxu0 %v232
    %1921 = vmatprep.subr.mxu0 %v237
    %1922 = vmatpush1.msra.mxu0 %v236
    %1923 = vmatprep.subr.mxu0 %v241
    %1924 = vmatpush1.msra.mxu0 %v240
    %1925 = vmatprep.subr.mxu0 %v245
    %1926 = vmatpush1.msra.mxu0 %v244
    %1927 = vmatprep.subr.mxu0 %v249
    %1928 = vmatpush1.msra.mxu0 %v248
    %1929 = vmatprep.subr.mxu0 %v253
    %1930 = vmatpush1.msra.mxu0 %v252
    %1931 = vmatprep.subr.mxu0 %v257
    %1932 = vmatpush1.msra.mxu0 %v256
    %1933 = vmatprep.subr.mxu0 %v261
    %1934 = vmatpush1.msra.mxu0 %v260
    %1935 = vmatprep.subr.mxu0 %v265
    %1936 = vmatpush1.msra.mxu0 %v264
    %1937 = vmatprep.subr.mxu0 %v269
    %1938 = vmatpush1.msra.mxu0 %v268
    %1939 = vmatprep.subr.mxu0 %v273
    %1940 = vmatpush1.msra.mxu0 %v272
    %1941 = vmatprep.subr.mxu0 %v277
    %1942 = vmatpush1.msra.mxu0 %v276
    %1943 = vmatprep.subr.mxu0 %v281
    %1944 = vmatpush1.msra.mxu0 %v280
    %1945 = vmatprep.subr.mxu0 %v285
    %1946 = vmatpush1.msra.mxu0 %v284
    %1947 = vmatprep.subr.mxu0 %v289
    %1948 = vmatpush1.msra.mxu0 %v288
    %1949 = vmatprep.subr.mxu0 %v293
    %1950 = vmatpush1.msra.mxu0 %v292
    %1951 = vmatprep.subr.mxu0 %v297
    %1952 = vmatpush1.msra.mxu0 %v296
    %1953 = vmatprep.subr.mxu0 %v301
    %1954 = vmatpush1.msra.mxu0 %v300
    %1955 = vmatprep.subr.mxu0 %v305
    %1956 = vmatpush1.msra.mxu0 %v304
    %1957 = vmatprep.subr.mxu0 %v309
    %1958 = vmatpush1.msra.mxu0 %v308
    %1959 = vmatprep.subr.mxu0 %v313
    %1960 = vmatpush1.msra.mxu0 %v312
    %1961 = vmatprep.subr.mxu0 %v317
    %1962 = vmatpush1.msra.mxu0 %v316
    %1963 = vmatprep.subr.mxu0 %v321
    %1964 = vmatpush1.msra.mxu0 %v320
    %1965 = vmatprep.subr.mxu0 %v325
    %1966 = vmatpush1.msra.mxu0 %v324
    %1967 = vmatprep.subr.mxu0 %v329
    %1968 = vmatpush1.msra.mxu0 %v328
    %1969 = vmatprep.subr.mxu0 %v333
    %1970 = vmatpush1.msra.mxu0 %v332
    %1971 = vmatprep.subr.mxu0 %v337
    %1972 = vmatpush1.msra.mxu0 %v336
    %1973 = vmatprep.mubr.f32.mxu0 %v1673
    %1974 = vmatmul.mubr.f32.gmra.mrb[0].mxu0 %v1837
    %v1975 = vpop.f32.mrb[0].mxu0
    %v1976 = vadd.f32 %v373, %v1975
    %v1977 = vpop.f32.mrb[0].mxu0
    %v1978 = vadd.f32 %v377, %v1977
    %1979 = vdwg.mxu0
    %v1980 = vmul.f32 %v1905, 0.5
    %v1981 = vtanh.pop %v1980
    %v1982 = vmul.f32 %v1981, 0.5
    %v1983 = vadd.f32 %v1982, 0.5
    %v1984 = vmul.f32 %v1907, 0.5
    %v1985 = vtanh.pop %v1984
    %v1986 = vmul.f32 %v1985, 0.5
    %v1987 = vadd.f32 %v1986, 0.5
    %v1988 = vtanh.pop %v1976
    %v1989 = vmul.f32 %v1978, 0.5
    %v1990 = vtanh.pop %v1989
    %v1991 = vmul.f32 %v1990, 0.5
    %v1992 = vadd.f32 %v1991, 0.5
    %v1993 = vmul.f32 %v1987, %v1671
    %v1994 = vmul.f32 %v1983, %v1988
    %v1995 = vadd.f32 %v1993, %v1994
    %v1996 = vtanh.pop %v1995
    %v1997 = vmul.f32 %v1992, %v1996
    %s1998 = scalar_lea.vmem [#allocation2], 32
    %1999 = vst [vmem:[%s1998] sm:$0xff] %v1997
    %s2000 = scalar_lea.vmem [#allocation3], 40
    %v2001 = vld [vmem:[%s2000] sm:$0xff]
    %2002 = vmatprep.subr.mxu0 %v83
    %2003 = vmatpush1.msra.mxu0 %v82
    %2004 = vmatprep.subr.mxu0 %v87
    %2005 = vmatpush1.msra.mxu0 %v86
    %2006 = vmatprep.subr.mxu0 %v91
    %2007 = vmatpush1.msra.mxu0 %v90
    %2008 = vmatprep.subr.mxu0 %v95
    %2009 = vmatpush1.msra.mxu0 %v94
    %2010 = vmatprep.subr.mxu0 %v99
    %2011 = vmatpush1.msra.mxu0 %v98
    %2012 = vmatprep.subr.mxu0 %v103
    %2013 = vmatpush1.msra.mxu0 %v102
    %2014 = vmatprep.subr.mxu0 %v107
    %2015 = vmatpush1.msra.mxu0 %v106
    %2016 = vmatprep.subr.mxu0 %v111
    %2017 = vmatpush1.msra.mxu0 %v110
    %2018 = vmatprep.subr.mxu0 %v115
    %2019 = vmatpush1.msra.mxu0 %v114
    %2020 = vmatprep.subr.mxu0 %v119
    %2021 = vmatpush1.msra.mxu0 %v118
    %2022 = vmatprep.subr.mxu0 %v123
    %2023 = vmatpush1.msra.mxu0 %v122
    %2024 = vmatprep.subr.mxu0 %v127
    %2025 = vmatpush1.msra.mxu0 %v126
    %2026 = vmatprep.subr.mxu0 %v131
    %2027 = vmatpush1.msra.mxu0 %v130
    %2028 = vmatprep.subr.mxu0 %v135
    %2029 = vmatpush1.msra.mxu0 %v134
    %2030 = vmatprep.subr.mxu0 %v139
    %2031 = vmatpush1.msra.mxu0 %v138
    %2032 = vmatprep.subr.mxu0 %v143
    %2033 = vmatpush1.msra.mxu0 %v142
    %2034 = vmatprep.subr.mxu0 %v147
    %2035 = vmatpush1.msra.mxu0 %v146
    %2036 = vmatprep.subr.mxu0 %v151
    %2037 = vmatpush1.msra.mxu0 %v150
    %2038 = vmatprep.subr.mxu0 %v155
    %2039 = vmatpush1.msra.mxu0 %v154
    %2040 = vmatprep.subr.mxu0 %v159
    %2041 = vmatpush1.msra.mxu0 %v158
    %2042 = vmatprep.subr.mxu0 %v163
    %2043 = vmatpush1.msra.mxu0 %v162
    %2044 = vmatprep.subr.mxu0 %v167
    %2045 = vmatpush1.msra.mxu0 %v166
    %2046 = vmatprep.subr.mxu0 %v171
    %2047 = vmatpush1.msra.mxu0 %v170
    %2048 = vmatprep.subr.mxu0 %v175
    %2049 = vmatpush1.msra.mxu0 %v174
    %2050 = vmatprep.subr.mxu0 %v179
    %2051 = vmatpush1.msra.mxu0 %v178
    %2052 = vmatprep.subr.mxu0 %v183
    %2053 = vmatpush1.msra.mxu0 %v182
    %2054 = vmatprep.subr.mxu0 %v187
    %2055 = vmatpush1.msra.mxu0 %v186
    %2056 = vmatprep.subr.mxu0 %v191
    %2057 = vmatpush1.msra.mxu0 %v190
    %2058 = vmatprep.subr.mxu0 %v195
    %2059 = vmatpush1.msra.mxu0 %v194
    %2060 = vmatprep.subr.mxu0 %v199
    %2061 = vmatpush1.msra.mxu0 %v198
    %2062 = vmatprep.subr.mxu0 %v203
    %2063 = vmatpush1.msra.mxu0 %v202
    %2064 = vmatprep.subr.mxu0 %v207
    %2065 = vmatpush1.msra.mxu0 %v206
    %2066 = vmatprep.mubr.f32.mxu0 %v1837
    %2067 = vmatmul.mubr.f32.gmra.mrb[0].mxu0 %v2001
    %v2068 = vpop.f32.mrb[0].mxu0
    %v2069 = vadd.f32 %v343, %v2068
    %v2070 = vpop.f32.mrb[0].mxu0
    %v2071 = vadd.f32 %v347, %v2070
    %2072 = vdwg.mxu0
    %2073 = vmatprep.subr.mxu0 %v85
    %2074 = vmatpush1.msra.mxu0 %v84
    %2075 = vmatprep.subr.mxu0 %v89
    %2076 = vmatpush1.msra.mxu0 %v88
    %2077 = vmatprep.subr.mxu0 %v93
    %2078 = vmatpush1.msra.mxu0 %v92
    %2079 = vmatprep.subr.mxu0 %v97
    %2080 = vmatpush1.msra.mxu0 %v96
    %2081 = vmatprep.subr.mxu0 %v101
    %2082 = vmatpush1.msra.mxu0 %v100
    %2083 = vmatprep.subr.mxu0 %v105
    %2084 = vmatpush1.msra.mxu0 %v104
    %2085 = vmatprep.subr.mxu0 %v109
    %2086 = vmatpush1.msra.mxu0 %v108
    %2087 = vmatprep.subr.mxu0 %v113
    %2088 = vmatpush1.msra.mxu0 %v112
    %2089 = vmatprep.subr.mxu0 %v117
    %2090 = vmatpush1.msra.mxu0 %v116
    %2091 = vmatprep.subr.mxu0 %v121
    %2092 = vmatpush1.msra.mxu0 %v120
    %2093 = vmatprep.subr.mxu0 %v125
    %2094 = vmatpush1.msra.mxu0 %v124
    %2095 = vmatprep.subr.mxu0 %v129
    %2096 = vmatpush1.msra.mxu0 %v128
    %2097 = vmatprep.subr.mxu0 %v133
    %2098 = vmatpush1.msra.mxu0 %v132
    %2099 = vmatprep.subr.mxu0 %v137
    %2100 = vmatpush1.msra.mxu0 %v136
    %2101 = vmatprep.subr.mxu0 %v141
    %2102 = vmatpush1.msra.mxu0 %v140
    %2103 = vmatprep.subr.mxu0 %v145
    %2104 = vmatpush1.msra.mxu0 %v144
    %2105 = vmatprep.subr.mxu0 %v149
    %2106 = vmatpush1.msra.mxu0 %v148
    %2107 = vmatprep.subr.mxu0 %v153
    %2108 = vmatpush1.msra.mxu0 %v152
    %2109 = vmatprep.subr.mxu0 %v157
    %2110 = vmatpush1.msra.mxu0 %v156
    %2111 = vmatprep.subr.mxu0 %v161
    %2112 = vmatpush1.msra.mxu0 %v160
    %2113 = vmatprep.subr.mxu0 %v165
    %2114 = vmatpush1.msra.mxu0 %v164
    %2115 = vmatprep.subr.mxu0 %v169
    %2116 = vmatpush1.msra.mxu0 %v168
    %2117 = vmatprep.subr.mxu0 %v173
    %2118 = vmatpush1.msra.mxu0 %v172
    %2119 = vmatprep.subr.mxu0 %v177
    %2120 = vmatpush1.msra.mxu0 %v176
    %2121 = vmatprep.subr.mxu0 %v181
    %2122 = vmatpush1.msra.mxu0 %v180
    %2123 = vmatprep.subr.mxu0 %v185
    %2124 = vmatpush1.msra.mxu0 %v184
    %2125 = vmatprep.subr.mxu0 %v189
    %2126 = vmatpush1.msra.mxu0 %v188
    %2127 = vmatprep.subr.mxu0 %v193
    %2128 = vmatpush1.msra.mxu0 %v192
    %2129 = vmatprep.subr.mxu0 %v197
    %2130 = vmatpush1.msra.mxu0 %v196
    %2131 = vmatprep.subr.mxu0 %v201
    %2132 = vmatpush1.msra.mxu0 %v200
    %2133 = vmatprep.subr.mxu0 %v205
    %2134 = vmatpush1.msra.mxu0 %v204
    %2135 = vmatprep.subr.mxu0 %v209
    %2136 = vmatpush1.msra.mxu0 %v208
    %2137 = vmatprep.mubr.f32.mxu0 %v1837
    %2138 = vmatmul.mubr.f32.gmra.mrb[0].mxu0 %v2001
    %v2139 = vpop.f32.mrb[0].mxu0
    %v2140 = vadd.f32 %v351, %v2139
    %v2141 = vpop.f32.mrb[0].mxu0
    %v2142 = vadd.f32 %v355, %v2141
    %2143 = vdwg.mxu0
    %v2144 = vmul.f32 %v2069, 0.5
    %v2145 = vtanh.pop %v2144
    %v2146 = vmul.f32 %v2145, 0.5
    %v2147 = vadd.f32 %v2146, 0.5
    %v2148 = vmul.f32 %v2071, 0.5
    %v2149 = vtanh.pop %v2148
    %v2150 = vmul.f32 %v2149, 0.5
    %v2151 = vadd.f32 %v2150, 0.5
    %v2152 = vtanh.pop %v2140
    %v2153 = vmul.f32 %v2142, 0.5
    %v2154 = vtanh.pop %v2153
    %v2155 = vmul.f32 %v2154, 0.5
    %v2156 = vadd.f32 %v2155, 0.5
    %v2157 = vmul.f32 %v2151, %v1835
    %v2158 = vmul.f32 %v2147, %v2152
    %v2159 = vadd.f32 %v2157, %v2158
    %v2160 = vtanh.pop %v2159
    %v2161 = vmul.f32 %v2156, %v2160
    %2162 = vmatprep.subr.mxu0 %v211
    %2163 = vmatpush1.msra.mxu0 %v210
    %2164 = vmatprep.subr.mxu0 %v215
    %2165 = vmatpush1.msra.mxu0 %v214
    %2166 = vmatprep.subr.mxu0 %v219
    %2167 = vmatpush1.msra.mxu0 %v218
    %2168 = vmatprep.subr.mxu0 %v223
    %2169 = vmatpush1.msra.mxu0 %v222
    %2170 = vmatprep.subr.mxu0 %v227
    %2171 = vmatpush1.msra.mxu0 %v226
    %2172 = vmatprep.subr.mxu0 %v231
    %2173 = vmatpush1.msra.mxu0 %v230
    %2174 = vmatprep.subr.mxu0 %v235
    %2175 = vmatpush1.msra.mxu0 %v234
    %2176 = vmatprep.subr.mxu0 %v239
    %2177 = vmatpush1.msra.mxu0 %v238
    %2178 = vmatprep.subr.mxu0 %v243
    %2179 = vmatpush1.msra.mxu0 %v242
    %2180 = vmatprep.subr.mxu0 %v247
    %2181 = vmatpush1.msra.mxu0 %v246
    %2182 = vmatprep.subr.mxu0 %v251
    %2183 = vmatpush1.msra.mxu0 %v250
    %2184 = vmatprep.subr.mxu0 %v255
    %2185 = vmatpush1.msra.mxu0 %v254
    %2186 = vmatprep.subr.mxu0 %v259
    %2187 = vmatpush1.msra.mxu0 %v258
    %2188 = vmatprep.subr.mxu0 %v263
    %2189 = vmatpush1.msra.mxu0 %v262
    %2190 = vmatprep.subr.mxu0 %v267
    %2191 = vmatpush1.msra.mxu0 %v266
    %2192 = vmatprep.subr.mxu0 %v271
    %2193 = vmatpush1.msra.mxu0 %v270
    %2194 = vmatprep.subr.mxu0 %v275
    %2195 = vmatpush1.msra.mxu0 %v274
    %2196 = vmatprep.subr.mxu0 %v279
    %2197 = vmatpush1.msra.mxu0 %v278
    %2198 = vmatprep.subr.mxu0 %v283
    %2199 = vmatpush1.msra.mxu0 %v282
    %2200 = vmatprep.subr.mxu0 %v287
    %2201 = vmatpush1.msra.mxu0 %v286
    %2202 = vmatprep.subr.mxu0 %v291
    %2203 = vmatpush1.msra.mxu0 %v290
    %2204 = vmatprep.subr.mxu0 %v295
    %2205 = vmatpush1.msra.mxu0 %v294
    %2206 = vmatprep.subr.mxu0 %v299
    %2207 = vmatpush1.msra.mxu0 %v298
    %2208 = vmatprep.subr.mxu0 %v303
    %2209 = vmatpush1.msra.mxu0 %v302
    %2210 = vmatprep.subr.mxu0 %v307
    %2211 = vmatpush1.msra.mxu0 %v306
    %2212 = vmatprep.subr.mxu0 %v311
    %2213 = vmatpush1.msra.mxu0 %v310
    %2214 = vmatprep.subr.mxu0 %v315
    %2215 = vmatpush1.msra.mxu0 %v314
    %2216 = vmatprep.subr.mxu0 %v319
    %2217 = vmatpush1.msra.mxu0 %v318
    %2218 = vmatprep.subr.mxu0 %v323
    %2219 = vmatpush1.msra.mxu0 %v322
    %2220 = vmatprep.subr.mxu0 %v327
    %2221 = vmatpush1.msra.mxu0 %v326
    %2222 = vmatprep.subr.mxu0 %v331
    %2223 = vmatpush1.msra.mxu0 %v330
    %2224 = vmatprep.subr.mxu0 %v335
    %2225 = vmatpush1.msra.mxu0 %v334
    %2226 = vmatprep.mubr.f32.mxu0 %v1997
    %2227 = vmatmul.mubr.f32.gmra.mrb[0].mxu0 %v2161
    %v2228 = vpop.f32.mrb[0].mxu0
    %v2229 = vadd.f32 %v365, %v2228
    %v2230 = vpop.f32.mrb[0].mxu0
    %v2231 = vadd.f32 %v369, %v2230
    %2232 = vdwg.mxu0
    %2233 = vmatprep.subr.mxu0 %v213
    %2234 = vmatpush1.msra.mxu0 %v212
    %2235 = vmatprep.subr.mxu0 %v217
    %2236 = vmatpush1.msra.mxu0 %v216
    %2237 = vmatprep.subr.mxu0 %v221
    %2238 = vmatpush1.msra.mxu0 %v220
    %2239 = vmatprep.subr.mxu0 %v225
    %2240 = vmatpush1.msra.mxu0 %v224
    %2241 = vmatprep.subr.mxu0 %v229
    %2242 = vmatpush1.msra.mxu0 %v228
    %2243 = vmatprep.subr.mxu0 %v233
    %2244 = vmatpush1.msra.mxu0 %v232
    %2245 = vmatprep.subr.mxu0 %v237
    %2246 = vmatpush1.msra.mxu0 %v236
    %2247 = vmatprep.subr.mxu0 %v241
    %2248 = vmatpush1.msra.mxu0 %v240
    %2249 = vmatprep.subr.mxu0 %v245
    %2250 = vmatpush1.msra.mxu0 %v244
    %2251 = vmatprep.subr.mxu0 %v249
    %2252 = vmatpush1.msra.mxu0 %v248
    %2253 = vmatprep.subr.mxu0 %v253
    %2254 = vmatpush1.msra.mxu0 %v252
    %2255 = vmatprep.subr.mxu0 %v257
    %2256 = vmatpush1.msra.mxu0 %v256
    %2257 = vmatprep.subr.mxu0 %v261
    %2258 = vmatpush1.msra.mxu0 %v260
    %2259 = vmatprep.subr.mxu0 %v265
    %2260 = vmatpush1.msra.mxu0 %v264
    %2261 = vmatprep.subr.mxu0 %v269
    %2262 = vmatpush1.msra.mxu0 %v268
    %2263 = vmatprep.subr.mxu0 %v273
    %2264 = vmatpush1.msra.mxu0 %v272
    %2265 = vmatprep.subr.mxu0 %v277
    %2266 = vmatpush1.msra.mxu0 %v276
    %2267 = vmatprep.subr.mxu0 %v281
    %2268 = vmatpush1.msra.mxu0 %v280
    %2269 = vmatprep.subr.mxu0 %v285
    %2270 = vmatpush1.msra.mxu0 %v284
    %2271 = vmatprep.subr.mxu0 %v289
    %2272 = vmatpush1.msra.mxu0 %v288
    %2273 = vmatprep.subr.mxu0 %v293
    %2274 = vmatpush1.msra.mxu0 %v292
    %2275 = vmatprep.subr.mxu0 %v297
    %2276 = vmatpush1.msra.mxu0 %v296
    %2277 = vmatprep.subr.mxu0 %v301
    %2278 = vmatpush1.msra.mxu0 %v300
    %2279 = vmatprep.subr.mxu0 %v305
    %2280 = vmatpush1.msra.mxu0 %v304
    %2281 = vmatprep.subr.mxu0 %v309
    %2282 = vmatpush1.msra.mxu0 %v308
    %2283 = vmatprep.subr.mxu0 %v313
    %2284 = vmatpush1.msra.mxu0 %v312
    %2285 = vmatprep.subr.mxu0 %v317
    %2286 = vmatpush1.msra.mxu0 %v316
    %2287 = vmatprep.subr.mxu0 %v321
    %2288 = vmatpush1.msra.mxu0 %v320
    %2289 = vmatprep.subr.mxu0 %v325
    %2290 = vmatpush1.msra.mxu0 %v324
    %2291 = vmatprep.subr.mxu0 %v329
    %2292 = vmatpush1.msra.mxu0 %v328
    %2293 = vmatprep.subr.mxu0 %v333
    %2294 = vmatpush1.msra.mxu0 %v332
    %2295 = vmatprep.subr.mxu0 %v337
    %2296 = vmatpush1.msra.mxu0 %v336
    %2297 = vmatprep.mubr.f32.mxu0 %v1997
    %2298 = vmatmul.mubr.f32.gmra.mrb[0].mxu0 %v2161
    %v2299 = vpop.f32.mrb[0].mxu0
    %v2300 = vadd.f32 %v373, %v2299
    %v2301 = vpop.f32.mrb[0].mxu0
    %v2302 = vadd.f32 %v377, %v2301
    %2303 = vdwg.mxu0
    %v2304 = vmul.f32 %v2229, 0.5
    %v2305 = vtanh.pop %v2304
    %v2306 = vmul.f32 %v2305, 0.5
    %v2307 = vadd.f32 %v2306, 0.5
    %v2308 = vmul.f32 %v2231, 0.5
    %v2309 = vtanh.pop %v2308
    %v2310 = vmul.f32 %v2309, 0.5
    %v2311 = vadd.f32 %v2310, 0.5
    %v2312 = vtanh.pop %v2300
    %v2313 = vmul.f32 %v2302, 0.5
    %v2314 = vtanh.pop %v2313
    %v2315 = vmul.f32 %v2314, 0.5
    %v2316 = vadd.f32 %v2315, 0.5
    %v2317 = vmul.f32 %v2311, %v1995
    %v2318 = vmul.f32 %v2307, %v2312
    %v2319 = vadd.f32 %v2317, %v2318
    %v2320 = vtanh.pop %v2319
    %v2321 = vmul.f32 %v2316, %v2320
    %s2322 = scalar_lea.vmem [#allocation2], 40
    %2323 = vst [vmem:[%s2322] sm:$0xff] %v2321
    %s2324 = scalar_lea.vmem [#allocation3], 48
    %v2325 = vld [vmem:[%s2324] sm:$0xff]
    %2326 = vmatprep.subr.mxu0 %v83
    %2327 = vmatpush1.msra.mxu0 %v82
    %2328 = vmatprep.subr.mxu0 %v87
    %2329 = vmatpush1.msra.mxu0 %v86
    %2330 = vmatprep.subr.mxu0 %v91
    %2331 = vmatpush1.msra.mxu0 %v90
    %2332 = vmatprep.subr.mxu0 %v95
    %2333 = vmatpush1.msra.mxu0 %v94
    %2334 = vmatprep.subr.mxu0 %v99
    %2335 = vmatpush1.msra.mxu0 %v98
    %2336 = vmatprep.subr.mxu0 %v103
    %2337 = vmatpush1.msra.mxu0 %v102
    %2338 = vmatprep.subr.mxu0 %v107
    %2339 = vmatpush1.msra.mxu0 %v106
    %2340 = vmatprep.subr.mxu0 %v111
    %2341 = vmatpush1.msra.mxu0 %v110
    %2342 = vmatprep.subr.mxu0 %v115
    %2343 = vmatpush1.msra.mxu0 %v114
    %2344 = vmatprep.subr.mxu0 %v119
    %2345 = vmatpush1.msra.mxu0 %v118
    %2346 = vmatprep.subr.mxu0 %v123
    %2347 = vmatpush1.msra.mxu0 %v122
    %2348 = vmatprep.subr.mxu0 %v127
    %2349 = vmatpush1.msra.mxu0 %v126
    %2350 = vmatprep.subr.mxu0 %v131
    %2351 = vmatpush1.msra.mxu0 %v130
    %2352 = vmatprep.subr.mxu0 %v135
    %2353 = vmatpush1.msra.mxu0 %v134
    %2354 = vmatprep.subr.mxu0 %v139
    %2355 = vmatpush1.msra.mxu0 %v138
    %2356 = vmatprep.subr.mxu0 %v143
    %2357 = vmatpush1.msra.mxu0 %v142
    %2358 = vmatprep.subr.mxu0 %v147
    %2359 = vmatpush1.msra.mxu0 %v146
    %2360 = vmatprep.subr.mxu0 %v151
    %2361 = vmatpush1.msra.mxu0 %v150
    %2362 = vmatprep.subr.mxu0 %v155
    %2363 = vmatpush1.msra.mxu0 %v154
    %2364 = vmatprep.subr.mxu0 %v159
    %2365 = vmatpush1.msra.mxu0 %v158
    %2366 = vmatprep.subr.mxu0 %v163
    %2367 = vmatpush1.msra.mxu0 %v162
    %2368 = vmatprep.subr.mxu0 %v167
    %2369 = vmatpush1.msra.mxu0 %v166
    %2370 = vmatprep.subr.mxu0 %v171
    %2371 = vmatpush1.msra.mxu0 %v170
    %2372 = vmatprep.subr.mxu0 %v175
    %2373 = vmatpush1.msra.mxu0 %v174
    %2374 = vmatprep.subr.mxu0 %v179
    %2375 = vmatpush1.msra.mxu0 %v178
    %2376 = vmatprep.subr.mxu0 %v183
    %2377 = vmatpush1.msra.mxu0 %v182
    %2378 = vmatprep.subr.mxu0 %v187
    %2379 = vmatpush1.msra.mxu0 %v186
    %2380 = vmatprep.subr.mxu0 %v191
    %2381 = vmatpush1.msra.mxu0 %v190
    %2382 = vmatprep.subr.mxu0 %v195
    %2383 = vmatpush1.msra.mxu0 %v194
    %2384 = vmatprep.subr.mxu0 %v199
    %2385 = vmatpush1.msra.mxu0 %v198
    %2386 = vmatprep.subr.mxu0 %v203
    %2387 = vmatpush1.msra.mxu0 %v202
    %2388 = vmatprep.subr.mxu0 %v207
    %2389 = vmatpush1.msra.mxu0 %v206
    %2390 = vmatprep.mubr.f32.mxu0 %v2161
    %2391 = vmatmul.mubr.f32.gmra.mrb[0].mxu0 %v2325
    %v2392 = vpop.f32.mrb[0].mxu0
    %v2393 = vadd.f32 %v343, %v2392
    %v2394 = vpop.f32.mrb[0].mxu0
    %v2395 = vadd.f32 %v347, %v2394
    %2396 = vdwg.mxu0
    %2397 = vmatprep.subr.mxu0 %v85
    %2398 = vmatpush1.msra.mxu0 %v84
    %2399 = vmatprep.subr.mxu0 %v89
    %2400 = vmatpush1.msra.mxu0 %v88
    %2401 = vmatprep.subr.mxu0 %v93
    %2402 = vmatpush1.msra.mxu0 %v92
    %2403 = vmatprep.subr.mxu0 %v97
    %2404 = vmatpush1.msra.mxu0 %v96
    %2405 = vmatprep.subr.mxu0 %v101
    %2406 = vmatpush1.msra.mxu0 %v100
    %2407 = vmatprep.subr.mxu0 %v105
    %2408 = vmatpush1.msra.mxu0 %v104
    %2409 = vmatprep.subr.mxu0 %v109
    %2410 = vmatpush1.msra.mxu0 %v108
    %2411 = vmatprep.subr.mxu0 %v113
    %2412 = vmatpush1.msra.mxu0 %v112
    %2413 = vmatprep.subr.mxu0 %v117
    %2414 = vmatpush1.msra.mxu0 %v116
    %2415 = vmatprep.subr.mxu0 %v121
    %2416 = vmatpush1.msra.mxu0 %v120
    %2417 = vmatprep.subr.mxu0 %v125
    %2418 = vmatpush1.msra.mxu0 %v124
    %2419 = vmatprep.subr.mxu0 %v129
    %2420 = vmatpush1.msra.mxu0 %v128
    %2421 = vmatprep.subr.mxu0 %v133
    %2422 = vmatpush1.msra.mxu0 %v132
    %2423 = vmatprep.subr.mxu0 %v137
    %2424 = vmatpush1.msra.mxu0 %v136
    %2425 = vmatprep.subr.mxu0 %v141
    %2426 = vmatpush1.msra.mxu0 %v140
    %2427 = vmatprep.subr.mxu0 %v145
    %2428 = vmatpush1.msra.mxu0 %v144
    %2429 = vmatprep.subr.mxu0 %v149
    %2430 = vmatpush1.msra.mxu0 %v148
    %2431 = vmatprep.subr.mxu0 %v153
    %2432 = vmatpush1.msra.mxu0 %v152
    %2433 = vmatprep.subr.mxu0 %v157
    %2434 = vmatpush1.msra.mxu0 %v156
    %2435 = vmatprep.subr.mxu0 %v161
    %2436 = vmatpush1.msra.mxu0 %v160
    %2437 = vmatprep.subr.mxu0 %v165
    %2438 = vmatpush1.msra.mxu0 %v164
    %2439 = vmatprep.subr.mxu0 %v169
    %2440 = vmatpush1.msra.mxu0 %v168
    %2441 = vmatprep.subr.mxu0 %v173
    %2442 = vmatpush1.msra.mxu0 %v172
    %2443 = vmatprep.subr.mxu0 %v177
    %2444 = vmatpush1.msra.mxu0 %v176
    %2445 = vmatprep.subr.mxu0 %v181
    %2446 = vmatpush1.msra.mxu0 %v180
    %2447 = vmatprep.subr.mxu0 %v185
    %2448 = vmatpush1.msra.mxu0 %v184
    %2449 = vmatprep.subr.mxu0 %v189
    %2450 = vmatpush1.msra.mxu0 %v188
    %2451 = vmatprep.subr.mxu0 %v193
    %2452 = vmatpush1.msra.mxu0 %v192
    %2453 = vmatprep.subr.mxu0 %v197
    %2454 = vmatpush1.msra.mxu0 %v196
    %2455 = vmatprep.subr.mxu0 %v201
    %2456 = vmatpush1.msra.mxu0 %v200
    %2457 = vmatprep.subr.mxu0 %v205
    %2458 = vmatpush1.msra.mxu0 %v204
    %2459 = vmatprep.subr.mxu0 %v209
    %2460 = vmatpush1.msra.mxu0 %v208
    %2461 = vmatprep.mubr.f32.mxu0 %v2161
    %2462 = vmatmul.mubr.f32.gmra.mrb[0].mxu0 %v2325
    %v2463 = vpop.f32.mrb[0].mxu0
    %v2464 = vadd.f32 %v351, %v2463
    %v2465 = vpop.f32.mrb[0].mxu0
    %v2466 = vadd.f32 %v355, %v2465
    %2467 = vdwg.mxu0
    %v2468 = vmul.f32 %v2393, 0.5
    %v2469 = vtanh.pop %v2468
    %v2470 = vmul.f32 %v2469, 0.5
    %v2471 = vadd.f32 %v2470, 0.5
    %v2472 = vmul.f32 %v2395, 0.5
    %v2473 = vtanh.pop %v2472
    %v2474 = vmul.f32 %v2473, 0.5
    %v2475 = vadd.f32 %v2474, 0.5
    %v2476 = vtanh.pop %v2464
    %v2477 = vmul.f32 %v2466, 0.5
    %v2478 = vtanh.pop %v2477
    %v2479 = vmul.f32 %v2478, 0.5
    %v2480 = vadd.f32 %v2479, 0.5
    %v2481 = vmul.f32 %v2475, %v2159
    %v2482 = vmul.f32 %v2471, %v2476
    %v2483 = vadd.f32 %v2481, %v2482
    %v2484 = vtanh.pop %v2483
    %v2485 = vmul.f32 %v2480, %v2484
    %2486 = vmatprep.subr.mxu0 %v211
    %2487 = vmatpush1.msra.mxu0 %v210
    %2488 = vmatprep.subr.mxu0 %v215
    %2489 = vmatpush1.msra.mxu0 %v214
    %2490 = vmatprep.subr.mxu0 %v219
    %2491 = vmatpush1.msra.mxu0 %v218
    %2492 = vmatprep.subr.mxu0 %v223
    %2493 = vmatpush1.msra.mxu0 %v222
    %2494 = vmatprep.subr.mxu0 %v227
    %2495 = vmatpush1.msra.mxu0 %v226
    %2496 = vmatprep.subr.mxu0 %v231
    %2497 = vmatpush1.msra.mxu0 %v230
    %2498 = vmatprep.subr.mxu0 %v235
    %2499 = vmatpush1.msra.mxu0 %v234
    %2500 = vmatprep.subr.mxu0 %v239
    %2501 = vmatpush1.msra.mxu0 %v238
    %2502 = vmatprep.subr.mxu0 %v243
    %2503 = vmatpush1.msra.mxu0 %v242
    %2504 = vmatprep.subr.mxu0 %v247
    %2505 = vmatpush1.msra.mxu0 %v246
    %2506 = vmatprep.subr.mxu0 %v251
    %2507 = vmatpush1.msra.mxu0 %v250
    %2508 = vmatprep.subr.mxu0 %v255
    %2509 = vmatpush1.msra.mxu0 %v254
    %2510 = vmatprep.subr.mxu0 %v259
    %2511 = vmatpush1.msra.mxu0 %v258
    %2512 = vmatprep.subr.mxu0 %v263
    %2513 = vmatpush1.msra.mxu0 %v262
    %2514 = vmatprep.subr.mxu0 %v267
    %2515 = vmatpush1.msra.mxu0 %v266
    %2516 = vmatprep.subr.mxu0 %v271
    %2517 = vmatpush1.msra.mxu0 %v270
    %2518 = vmatprep.subr.mxu0 %v275
    %2519 = vmatpush1.msra.mxu0 %v274
    %2520 = vmatprep.subr.mxu0 %v279
    %2521 = vmatpush1.msra.mxu0 %v278
    %2522 = vmatprep.subr.mxu0 %v283
    %2523 = vmatpush1.msra.mxu0 %v282
    %2524 = vmatprep.subr.mxu0 %v287
    %2525 = vmatpush1.msra.mxu0 %v286
    %2526 = vmatprep.subr.mxu0 %v291
    %2527 = vmatpush1.msra.mxu0 %v290
    %2528 = vmatprep.subr.mxu0 %v295
    %2529 = vmatpush1.msra.mxu0 %v294
    %2530 = vmatprep.subr.mxu0 %v299
    %2531 = vmatpush1.msra.mxu0 %v298
    %2532 = vmatprep.subr.mxu0 %v303
    %2533 = vmatpush1.msra.mxu0 %v302
    %2534 = vmatprep.subr.mxu0 %v307
    %2535 = vmatpush1.msra.mxu0 %v306
    %2536 = vmatprep.subr.mxu0 %v311
    %2537 = vmatpush1.msra.mxu0 %v310
    %2538 = vmatprep.subr.mxu0 %v315
    %2539 = vmatpush1.msra.mxu0 %v314
    %2540 = vmatprep.subr.mxu0 %v319
    %2541 = vmatpush1.msra.mxu0 %v318
    %2542 = vmatprep.subr.mxu0 %v323
    %2543 = vmatpush1.msra.mxu0 %v322
    %2544 = vmatprep.subr.mxu0 %v327
    %2545 = vmatpush1.msra.mxu0 %v326
    %2546 = vmatprep.subr.mxu0 %v331
    %2547 = vmatpush1.msra.mxu0 %v330
    %2548 = vmatprep.subr.mxu0 %v335
    %2549 = vmatpush1.msra.mxu0 %v334
    %2550 = vmatprep.mubr.f32.mxu0 %v2321
    %2551 = vmatmul.mubr.f32.gmra.mrb[0].mxu0 %v2485
    %v2552 = vpop.f32.mrb[0].mxu0
    %v2553 = vadd.f32 %v365, %v2552
    %v2554 = vpop.f32.mrb[0].mxu0
    %v2555 = vadd.f32 %v369, %v2554
    %2556 = vdwg.mxu0
    %2557 = vmatprep.subr.mxu0 %v213
    %2558 = vmatpush1.msra.mxu0 %v212
    %2559 = vmatprep.subr.mxu0 %v217
    %2560 = vmatpush1.msra.mxu0 %v216
    %2561 = vmatprep.subr.mxu0 %v221
    %2562 = vmatpush1.msra.mxu0 %v220
    %2563 = vmatprep.subr.mxu0 %v225
    %2564 = vmatpush1.msra.mxu0 %v224
    %2565 = vmatprep.subr.mxu0 %v229
    %2566 = vmatpush1.msra.mxu0 %v228
    %2567 = vmatprep.subr.mxu0 %v233
    %2568 = vmatpush1.msra.mxu0 %v232
    %2569 = vmatprep.subr.mxu0 %v237
    %2570 = vmatpush1.msra.mxu0 %v236
    %2571 = vmatprep.subr.mxu0 %v241
    %2572 = vmatpush1.msra.mxu0 %v240
    %2573 = vmatprep.subr.mxu0 %v245
    %2574 = vmatpush1.msra.mxu0 %v244
    %2575 = vmatprep.subr.mxu0 %v249
    %2576 = vmatpush1.msra.mxu0 %v248
    %2577 = vmatprep.subr.mxu0 %v253
    %2578 = vmatpush1.msra.mxu0 %v252
    %2579 = vmatprep.subr.mxu0 %v257
    %2580 = vmatpush1.msra.mxu0 %v256
    %2581 = vmatprep.subr.mxu0 %v261
    %2582 = vmatpush1.msra.mxu0 %v260
    %2583 = vmatprep.subr.mxu0 %v265
    %2584 = vmatpush1.msra.mxu0 %v264
    %2585 = vmatprep.subr.mxu0 %v269
    %2586 = vmatpush1.msra.mxu0 %v268
    %2587 = vmatprep.subr.mxu0 %v273
    %2588 = vmatpush1.msra.mxu0 %v272
    %2589 = vmatprep.subr.mxu0 %v277
    %2590 = vmatpush1.msra.mxu0 %v276
    %2591 = vmatprep.subr.mxu0 %v281
    %2592 = vmatpush1.msra.mxu0 %v280
    %2593 = vmatprep.subr.mxu0 %v285
    %2594 = vmatpush1.msra.mxu0 %v284
    %2595 = vmatprep.subr.mxu0 %v289
    %2596 = vmatpush1.msra.mxu0 %v288
    %2597 = vmatprep.subr.mxu0 %v293
    %2598 = vmatpush1.msra.mxu0 %v292
    %2599 = vmatprep.subr.mxu0 %v297
    %2600 = vmatpush1.msra.mxu0 %v296
    %2601 = vmatprep.subr.mxu0 %v301
    %2602 = vmatpush1.msra.mxu0 %v300
    %2603 = vmatprep.subr.mxu0 %v305
    %2604 = vmatpush1.msra.mxu0 %v304
    %2605 = vmatprep.subr.mxu0 %v309
    %2606 = vmatpush1.msra.mxu0 %v308
    %2607 = vmatprep.subr.mxu0 %v313
    %2608 = vmatpush1.msra.mxu0 %v312
    %2609 = vmatprep.subr.mxu0 %v317
    %2610 = vmatpush1.msra.mxu0 %v316
    %2611 = vmatprep.subr.mxu0 %v321
    %2612 = vmatpush1.msra.mxu0 %v320
    %2613 = vmatprep.subr.mxu0 %v325
    %2614 = vmatpush1.msra.mxu0 %v324
    %2615 = vmatprep.subr.mxu0 %v329
    %2616 = vmatpush1.msra.mxu0 %v328
    %2617 = vmatprep.subr.mxu0 %v333
    %2618 = vmatpush1.msra.mxu0 %v332
    %2619 = vmatprep.subr.mxu0 %v337
    %2620 = vmatpush1.msra.mxu0 %v336
    %2621 = vmatprep.mubr.f32.mxu0 %v2321
    %2622 = vmatmul.mubr.f32.gmra.mrb[0].mxu0 %v2485
    %v2623 = vpop.f32.mrb[0].mxu0
    %v2624 = vadd.f32 %v373, %v2623
    %v2625 = vpop.f32.mrb[0].mxu0
    %v2626 = vadd.f32 %v377, %v2625
    %2627 = vdwg.mxu0
    %v2628 = vmul.f32 %v2553, 0.5
    %v2629 = vtanh.pop %v2628
    %v2630 = vmul.f32 %v2629, 0.5
    %v2631 = vadd.f32 %v2630, 0.5
    %v2632 = vmul.f32 %v2555, 0.5
    %v2633 = vtanh.pop %v2632
    %v2634 = vmul.f32 %v2633, 0.5
    %v2635 = vadd.f32 %v2634, 0.5
    %v2636 = vtanh.pop %v2624
    %v2637 = vmul.f32 %v2626, 0.5
    %v2638 = vtanh.pop %v2637
    %v2639 = vmul.f32 %v2638, 0.5
    %v2640 = vadd.f32 %v2639, 0.5
    %v2641 = vmul.f32 %v2635, %v2319
    %v2642 = vmul.f32 %v2631, %v2636
    %v2643 = vadd.f32 %v2641, %v2642
    %v2644 = vtanh.pop %v2643
    %v2645 = vmul.f32 %v2640, %v2644
    %s2646 = scalar_lea.vmem [#allocation2], 48
    %2647 = vst [vmem:[%s2646] sm:$0xff] %v2645
    %s2648 = scalar_lea.vmem [#allocation3], 56
    %v2649 = vld [vmem:[%s2648] sm:$0xff]
    %2650 = vmatprep.subr.mxu0 %v83
    %2651 = vmatpush1.msra.mxu0 %v82
    %2652 = vmatprep.subr.mxu0 %v87
    %2653 = vmatpush1.msra.mxu0 %v86
    %2654 = vmatprep.subr.mxu0 %v91
    %2655 = vmatpush1.msra.mxu0 %v90
    %2656 = vmatprep.subr.mxu0 %v95
    %2657 = vmatpush1.msra.mxu0 %v94
    %2658 = vmatprep.subr.mxu0 %v99
    %2659 = vmatpush1.msra.mxu0 %v98
    %2660 = vmatprep.subr.mxu0 %v103
    %2661 = vmatpush1.msra.mxu0 %v102
    %2662 = vmatprep.subr.mxu0 %v107
    %2663 = vmatpush1.msra.mxu0 %v106
    %2664 = vmatprep.subr.mxu0 %v111
    %2665 = vmatpush1.msra.mxu0 %v110
    %2666 = vmatprep.subr.mxu0 %v115
    %2667 = vmatpush1.msra.mxu0 %v114
    %2668 = vmatprep.subr.mxu0 %v119
    %2669 = vmatpush1.msra.mxu0 %v118
    %2670 = vmatprep.subr.mxu0 %v123
    %2671 = vmatpush1.msra.mxu0 %v122
    %2672 = vmatprep.subr.mxu0 %v127
    %2673 = vmatpush1.msra.mxu0 %v126
    %2674 = vmatprep.subr.mxu0 %v131
    %2675 = vmatpush1.msra.mxu0 %v130
    %2676 = vmatprep.subr.mxu0 %v135
    %2677 = vmatpush1.msra.mxu0 %v134
    %2678 = vmatprep.subr.mxu0 %v139
    %2679 = vmatpush1.msra.mxu0 %v138
    %2680 = vmatprep.subr.mxu0 %v143
    %2681 = vmatpush1.msra.mxu0 %v142
    %2682 = vmatprep.subr.mxu0 %v147
    %2683 = vmatpush1.msra.mxu0 %v146
    %2684 = vmatprep.subr.mxu0 %v151
    %2685 = vmatpush1.msra.mxu0 %v150
    %2686 = vmatprep.subr.mxu0 %v155
    %2687 = vmatpush1.msra.mxu0 %v154
    %2688 = vmatprep.subr.mxu0 %v159
    %2689 = vmatpush1.msra.mxu0 %v158
    %2690 = vmatprep.subr.mxu0 %v163
    %2691 = vmatpush1.msra.mxu0 %v162
    %2692 = vmatprep.subr.mxu0 %v167
    %2693 = vmatpush1.msra.mxu0 %v166
    %2694 = vmatprep.subr.mxu0 %v171
    %2695 = vmatpush1.msra.mxu0 %v170
    %2696 = vmatprep.subr.mxu0 %v175
    %2697 = vmatpush1.msra.mxu0 %v174
    %2698 = vmatprep.subr.mxu0 %v179
    %2699 = vmatpush1.msra.mxu0 %v178
    %2700 = vmatprep.subr.mxu0 %v183
    %2701 = vmatpush1.msra.mxu0 %v182
    %2702 = vmatprep.subr.mxu0 %v187
    %2703 = vmatpush1.msra.mxu0 %v186
    %2704 = vmatprep.subr.mxu0 %v191
    %2705 = vmatpush1.msra.mxu0 %v190
    %2706 = vmatprep.subr.mxu0 %v195
    %2707 = vmatpush1.msra.mxu0 %v194
    %2708 = vmatprep.subr.mxu0 %v199
    %2709 = vmatpush1.msra.mxu0 %v198
    %2710 = vmatprep.subr.mxu0 %v203
    %2711 = vmatpush1.msra.mxu0 %v202
    %2712 = vmatprep.subr.mxu0 %v207
    %2713 = vmatpush1.msra.mxu0 %v206
    %2714 = vmatprep.mubr.f32.mxu0 %v2485
    %2715 = vmatmul.mubr.f32.gmra.mrb[0].mxu0 %v2649
    %v2716 = vpop.f32.mrb[0].mxu0
    %v2717 = vadd.f32 %v343, %v2716
    %v2718 = vpop.f32.mrb[0].mxu0
    %v2719 = vadd.f32 %v347, %v2718
    %2720 = vdwg.mxu0
    %2721 = vmatprep.subr.mxu0 %v85
    %2722 = vmatpush1.msra.mxu0 %v84
    %2723 = vmatprep.subr.mxu0 %v89
    %2724 = vmatpush1.msra.mxu0 %v88
    %2725 = vmatprep.subr.mxu0 %v93
    %2726 = vmatpush1.msra.mxu0 %v92
    %2727 = vmatprep.subr.mxu0 %v97
    %2728 = vmatpush1.msra.mxu0 %v96
    %2729 = vmatprep.subr.mxu0 %v101
    %2730 = vmatpush1.msra.mxu0 %v100
    %2731 = vmatprep.subr.mxu0 %v105
    %2732 = vmatpush1.msra.mxu0 %v104
    %2733 = vmatprep.subr.mxu0 %v109
    %2734 = vmatpush1.msra.mxu0 %v108
    %2735 = vmatprep.subr.mxu0 %v113
    %2736 = vmatpush1.msra.mxu0 %v112
    %2737 = vmatprep.subr.mxu0 %v117
    %2738 = vmatpush1.msra.mxu0 %v116
    %2739 = vmatprep.subr.mxu0 %v121
    %2740 = vmatpush1.msra.mxu0 %v120
    %2741 = vmatprep.subr.mxu0 %v125
    %2742 = vmatpush1.msra.mxu0 %v124
    %2743 = vmatprep.subr.mxu0 %v129
    %2744 = vmatpush1.msra.mxu0 %v128
    %2745 = vmatprep.subr.mxu0 %v133
    %2746 = vmatpush1.msra.mxu0 %v132
    %2747 = vmatprep.subr.mxu0 %v137
    %2748 = vmatpush1.msra.mxu0 %v136
    %2749 = vmatprep.subr.mxu0 %v141
    %2750 = vmatpush1.msra.mxu0 %v140
    %2751 = vmatprep.subr.mxu0 %v145
    %2752 = vmatpush1.msra.mxu0 %v144
    %2753 = vmatprep.subr.mxu0 %v149
    %2754 = vmatpush1.msra.mxu0 %v148
    %2755 = vmatprep.subr.mxu0 %v153
    %2756 = vmatpush1.msra.mxu0 %v152
    %2757 = vmatprep.subr.mxu0 %v157
    %2758 = vmatpush1.msra.mxu0 %v156
    %2759 = vmatprep.subr.mxu0 %v161
    %2760 = vmatpush1.msra.mxu0 %v160
    %2761 = vmatprep.subr.mxu0 %v165
    %2762 = vmatpush1.msra.mxu0 %v164
    %2763 = vmatprep.subr.mxu0 %v169
    %2764 = vmatpush1.msra.mxu0 %v168
    %2765 = vmatprep.subr.mxu0 %v173
    %2766 = vmatpush1.msra.mxu0 %v172
    %2767 = vmatprep.subr.mxu0 %v177
    %2768 = vmatpush1.msra.mxu0 %v176
    %2769 = vmatprep.subr.mxu0 %v181
    %2770 = vmatpush1.msra.mxu0 %v180
    %2771 = vmatprep.subr.mxu0 %v185
    %2772 = vmatpush1.msra.mxu0 %v184
    %2773 = vmatprep.subr.mxu0 %v189
    %2774 = vmatpush1.msra.mxu0 %v188
    %2775 = vmatprep.subr.mxu0 %v193
    %2776 = vmatpush1.msra.mxu0 %v192
    %2777 = vmatprep.subr.mxu0 %v197
    %2778 = vmatpush1.msra.mxu0 %v196
    %2779 = vmatprep.subr.mxu0 %v201
    %2780 = vmatpush1.msra.mxu0 %v200
    %2781 = vmatprep.subr.mxu0 %v205
    %2782 = vmatpush1.msra.mxu0 %v204
    %2783 = vmatprep.subr.mxu0 %v209
    %2784 = vmatpush1.msra.mxu0 %v208
    %2785 = vmatprep.mubr.f32.mxu0 %v2485
    %2786 = vmatmul.mubr.f32.gmra.mrb[0].mxu0 %v2649
    %v2787 = vpop.f32.mrb[0].mxu0
    %v2788 = vadd.f32 %v351, %v2787
    %v2789 = vpop.f32.mrb[0].mxu0
    %v2790 = vadd.f32 %v355, %v2789
    %2791 = vdwg.mxu0
    %v2792 = vmul.f32 %v2717, 0.5
    %v2793 = vtanh.pop %v2792
    %v2794 = vmul.f32 %v2793, 0.5
    %v2795 = vadd.f32 %v2794, 0.5
    %v2796 = vmul.f32 %v2719, 0.5
    %v2797 = vtanh.pop %v2796
    %v2798 = vmul.f32 %v2797, 0.5
    %v2799 = vadd.f32 %v2798, 0.5
    %v2800 = vtanh.pop %v2788
    %v2801 = vmul.f32 %v2790, 0.5
    %v2802 = vtanh.pop %v2801
    %v2803 = vmul.f32 %v2802, 0.5
    %v2804 = vadd.f32 %v2803, 0.5
    %v2805 = vmul.f32 %v2799, %v2483
    %v2806 = vmul.f32 %v2795, %v2800
    %v2807 = vadd.f32 %v2805, %v2806
    %v2808 = vtanh.pop %v2807
    %v2809 = vmul.f32 %v2804, %v2808
    %2810 = vmatprep.subr.mxu0 %v211
    %2811 = vmatpush1.msra.mxu0 %v210
    %2812 = vmatprep.subr.mxu0 %v215
    %2813 = vmatpush1.msra.mxu0 %v214
    %2814 = vmatprep.subr.mxu0 %v219
    %2815 = vmatpush1.msra.mxu0 %v218
    %2816 = vmatprep.subr.mxu0 %v223
    %2817 = vmatpush1.msra.mxu0 %v222
    %2818 = vmatprep.subr.mxu0 %v227
    %2819 = vmatpush1.msra.mxu0 %v226
    %2820 = vmatprep.subr.mxu0 %v231
    %2821 = vmatpush1.msra.mxu0 %v230
    %2822 = vmatprep.subr.mxu0 %v235
    %2823 = vmatpush1.msra.mxu0 %v234
    %2824 = vmatprep.subr.mxu0 %v239
    %2825 = vmatpush1.msra.mxu0 %v238
    %2826 = vmatprep.subr.mxu0 %v243
    %2827 = vmatpush1.msra.mxu0 %v242
    %2828 = vmatprep.subr.mxu0 %v247
    %2829 = vmatpush1.msra.mxu0 %v246
    %2830 = vmatprep.subr.mxu0 %v251
    %2831 = vmatpush1.msra.mxu0 %v250
    %2832 = vmatprep.subr.mxu0 %v255
    %2833 = vmatpush1.msra.mxu0 %v254
    %2834 = vmatprep.subr.mxu0 %v259
    %2835 = vmatpush1.msra.mxu0 %v258
    %2836 = vmatprep.subr.mxu0 %v263
    %2837 = vmatpush1.msra.mxu0 %v262
    %2838 = vmatprep.subr.mxu0 %v267
    %2839 = vmatpush1.msra.mxu0 %v266
    %2840 = vmatprep.subr.mxu0 %v271
    %2841 = vmatpush1.msra.mxu0 %v270
    %2842 = vmatprep.subr.mxu0 %v275
    %2843 = vmatpush1.msra.mxu0 %v274
    %2844 = vmatprep.subr.mxu0 %v279
    %2845 = vmatpush1.msra.mxu0 %v278
    %2846 = vmatprep.subr.mxu0 %v283
    %2847 = vmatpush1.msra.mxu0 %v282
    %2848 = vmatprep.subr.mxu0 %v287
    %2849 = vmatpush1.msra.mxu0 %v286
    %2850 = vmatprep.subr.mxu0 %v291
    %2851 = vmatpush1.msra.mxu0 %v290
    %2852 = vmatprep.subr.mxu0 %v295
    %2853 = vmatpush1.msra.mxu0 %v294
    %2854 = vmatprep.subr.mxu0 %v299
    %2855 = vmatpush1.msra.mxu0 %v298
    %2856 = vmatprep.subr.mxu0 %v303
    %2857 = vmatpush1.msra.mxu0 %v302
    %2858 = vmatprep.subr.mxu0 %v307
    %2859 = vmatpush1.msra.mxu0 %v306
    %2860 = vmatprep.subr.mxu0 %v311
    %2861 = vmatpush1.msra.mxu0 %v310
    %2862 = vmatprep.subr.mxu0 %v315
    %2863 = vmatpush1.msra.mxu0 %v314
    %2864 = vmatprep.subr.mxu0 %v319
    %2865 = vmatpush1.msra.mxu0 %v318
    %2866 = vmatprep.subr.mxu0 %v323
    %2867 = vmatpush1.msra.mxu0 %v322
    %2868 = vmatprep.subr.mxu0 %v327
    %2869 = vmatpush1.msra.mxu0 %v326
    %2870 = vmatprep.subr.mxu0 %v331
    %2871 = vmatpush1.msra.mxu0 %v330
    %2872 = vmatprep.subr.mxu0 %v335
    %2873 = vmatpush1.msra.mxu0 %v334
    %2874 = vmatprep.mubr.f32.mxu0 %v2645
    %2875 = vmatmul.mubr.f32.gmra.mrb[0].mxu0 %v2809
    %v2876 = vpop.f32.mrb[0].mxu0
    %v2877 = vadd.f32 %v365, %v2876
    %v2878 = vpop.f32.mrb[0].mxu0
    %v2879 = vadd.f32 %v369, %v2878
    %2880 = vdwg.mxu0
    %2881 = vmatprep.subr.mxu0 %v213
    %2882 = vmatpush1.msra.mxu0 %v212
    %2883 = vmatprep.subr.mxu0 %v217
    %2884 = vmatpush1.msra.mxu0 %v216
    %2885 = vmatprep.subr.mxu0 %v221
    %2886 = vmatpush1.msra.mxu0 %v220
    %2887 = vmatprep.subr.mxu0 %v225
    %2888 = vmatpush1.msra.mxu0 %v224
    %2889 = vmatprep.subr.mxu0 %v229
    %2890 = vmatpush1.msra.mxu0 %v228
    %2891 = vmatprep.subr.mxu0 %v233
    %2892 = vmatpush1.msra.mxu0 %v232
    %2893 = vmatprep.subr.mxu0 %v237
    %2894 = vmatpush1.msra.mxu0 %v236
    %2895 = vmatprep.subr.mxu0 %v241
    %2896 = vmatpush1.msra.mxu0 %v240
    %2897 = vmatprep.subr.mxu0 %v245
    %2898 = vmatpush1.msra.mxu0 %v244
    %2899 = vmatprep.subr.mxu0 %v249
    %2900 = vmatpush1.msra.mxu0 %v248
    %2901 = vmatprep.subr.mxu0 %v253
    %2902 = vmatpush1.msra.mxu0 %v252
    %2903 = vmatprep.subr.mxu0 %v257
    %2904 = vmatpush1.msra.mxu0 %v256
    %2905 = vmatprep.subr.mxu0 %v261
    %2906 = vmatpush1.msra.mxu0 %v260
    %2907 = vmatprep.subr.mxu0 %v265
    %2908 = vmatpush1.msra.mxu0 %v264
    %2909 = vmatprep.subr.mxu0 %v269
    %2910 = vmatpush1.msra.mxu0 %v268
    %2911 = vmatprep.subr.mxu0 %v273
    %2912 = vmatpush1.msra.mxu0 %v272
    %2913 = vmatprep.subr.mxu0 %v277
    %2914 = vmatpush1.msra.mxu0 %v276
    %2915 = vmatprep.subr.mxu0 %v281
    %2916 = vmatpush1.msra.mxu0 %v280
    %2917 = vmatprep.subr.mxu0 %v285
    %2918 = vmatpush1.msra.mxu0 %v284
    %2919 = vmatprep.subr.mxu0 %v289
    %2920 = vmatpush1.msra.mxu0 %v288
    %2921 = vmatprep.subr.mxu0 %v293
    %2922 = vmatpush1.msra.mxu0 %v292
    %2923 = vmatprep.subr.mxu0 %v297
    %2924 = vmatpush1.msra.mxu0 %v296
    %2925 = vmatprep.subr.mxu0 %v301
    %2926 = vmatpush1.msra.mxu0 %v300
    %2927 = vmatprep.subr.mxu0 %v305
    %2928 = vmatpush1.msra.mxu0 %v304
    %2929 = vmatprep.subr.mxu0 %v309
    %2930 = vmatpush1.msra.mxu0 %v308
    %2931 = vmatprep.subr.mxu0 %v313
    %2932 = vmatpush1.msra.mxu0 %v312
    %2933 = vmatprep.subr.mxu0 %v317
    %2934 = vmatpush1.msra.mxu0 %v316
    %2935 = vmatprep.subr.mxu0 %v321
    %2936 = vmatpush1.msra.mxu0 %v320
    %2937 = vmatprep.subr.mxu0 %v325
    %2938 = vmatpush1.msra.mxu0 %v324
    %2939 = vmatprep.subr.mxu0 %v329
    %2940 = vmatpush1.msra.mxu0 %v328
    %2941 = vmatprep.subr.mxu0 %v333
    %2942 = vmatpush1.msra.mxu0 %v332
    %2943 = vmatprep.subr.mxu0 %v337
    %2944 = vmatpush1.msra.mxu0 %v336
    %2945 = vmatprep.mubr.f32.mxu0 %v2645
    %2946 = vmatmul.mubr.f32.gmra.mrb[0].mxu0 %v2809
    %v2947 = vpop.f32.mrb[0].mxu0
    %v2948 = vadd.f32 %v373, %v2947
    %v2949 = vpop.f32.mrb[0].mxu0
    %v2950 = vadd.f32 %v377, %v2949
    %2951 = vdwg.mxu0
    %v2952 = vmul.f32 %v2877, 0.5
    %v2953 = vtanh.pop %v2952
    %v2954 = vmul.f32 %v2953, 0.5
    %v2955 = vadd.f32 %v2954, 0.5
    %v2956 = vmul.f32 %v2879, 0.5
    %v2957 = vtanh.pop %v2956
    %v2958 = vmul.f32 %v2957, 0.5
    %v2959 = vadd.f32 %v2958, 0.5
    %v2960 = vtanh.pop %v2948
    %v2961 = vmul.f32 %v2950, 0.5
    %v2962 = vtanh.pop %v2961
    %v2963 = vmul.f32 %v2962, 0.5
    %v2964 = vadd.f32 %v2963, 0.5
    %v2965 = vmul.f32 %v2959, %v2643
    %v2966 = vmul.f32 %v2955, %v2960
    %v2967 = vadd.f32 %v2965, %v2966
    %v2968 = vtanh.pop %v2967
    %v2969 = vmul.f32 %v2964, %v2968
    %s2970 = scalar_lea.vmem [#allocation2], 56
    %2971 = vst [vmem:[%s2970] sm:$0xff] %v2969
    %v2972 = vld [vmem:[#allocation2] sm:$0xff]
    %v2973 = vld [vmem:[#allocation2 + $0x8] sm:$0xff]
    %v2974 = vld [vmem:[#allocation2 + $0x10] sm:$0xff]
    %v2975 = vld [vmem:[#allocation2 + $0x18] sm:$0xff]
    %v2976 = vld [vmem:[#allocation2 + $0x20] sm:$0xff]
    %v2977 = vld [vmem:[#allocation2 + $0x28] sm:$0xff]
    %v2978 = vld [vmem:[#allocation2 + $0x30] sm:$0xff]
    %v2979 = vld [vmem:[#allocation2 + $0x38] sm:$0xff]
    %v2980 = vld [vmem:[#allocation9] sm:$0xff]
    %v2981 = vld [vmem:[#allocation9 + $0x8] sm:$0xff]
    %v2982 = vld [vmem:[#allocation9 + $0x10] sm:$0xff]
    %v2983 = vld [vmem:[#allocation9 + $0x18] sm:$0xff]
    %v2984 = vld [vmem:[#allocation9 + $0x20] sm:$0xff]
    %v2985 = vld [vmem:[#allocation9 + $0x28] sm:$0xff]
    %v2986 = vld [vmem:[#allocation9 + $0x30] sm:$0xff]
    %v2987 = vld [vmem:[#allocation9 + $0x38] sm:$0xff]
    %v2988 = vld [vmem:[#allocation9 + $0x40] sm:$0xff]
    %v2989 = vld [vmem:[#allocation9 + $0x48] sm:$0xff]
    %v2990 = vld [vmem:[#allocation9 + $0x50] sm:$0xff]
    %v2991 = vld [vmem:[#allocation9 + $0x58] sm:$0xff]
    %v2992 = vld [vmem:[#allocation9 + $0x60] sm:$0xff]
    %v2993 = vld [vmem:[#allocation9 + $0x68] sm:$0xff]
    %v2994 = vld [vmem:[#allocation9 + $0x70] sm:$0xff]
    %v2995 = vld [vmem:[#allocation9 + $0x78] sm:$0xff]
    %v2996 = vld [vmem:[%s6] sm:$0x1]
    %v2998 = vlaneseq
    %v2999 = vshrl.u32 %v2998, 7
    %v3000 = vsub.s32 0, %v2999
    %v3001 = vrot.slane %v2996, %v3000
    %3003 = vmatprep.subr.mxu0 0.0
    %3004 = vmatpush1.msra.mxu0 %v2980
    %3005 = vmatprep.subr.mxu0 0.0
    %3006 = vmatpush1.msra.mxu0 %v2981
    %3007 = vmatprep.subr.mxu0 0.0
    %3008 = vmatpush1.msra.mxu0 %v2982
    %3009 = vmatprep.subr.mxu0 0.0
    %3010 = vmatpush1.msra.mxu0 %v2983
    %3011 = vmatprep.subr.mxu0 0.0
    %3012 = vmatpush1.msra.mxu0 %v2984
    %3013 = vmatprep.subr.mxu0 0.0
    %3014 = vmatpush1.msra.mxu0 %v2985
    %3015 = vmatprep.subr.mxu0 0.0
    %3016 = vmatpush1.msra.mxu0 %v2986
    %3017 = vmatprep.subr.mxu0 0.0
    %3018 = vmatpush1.msra.mxu0 %v2987
    %3019 = vmatprep.subr.mxu0 0.0
    %3020 = vmatpush1.msra.mxu0 %v2988
    %3021 = vmatprep.subr.mxu0 0.0
    %3022 = vmatpush1.msra.mxu0 %v2989
    %3023 = vmatprep.subr.mxu0 0.0
    %3024 = vmatpush1.msra.mxu0 %v2990
    %3025 = vmatprep.subr.mxu0 0.0
    %3026 = vmatpush1.msra.mxu0 %v2991
    %3027 = vmatprep.subr.mxu0 0.0
    %3028 = vmatpush1.msra.mxu0 %v2992
    %3029 = vmatprep.subr.mxu0 0.0
    %3030 = vmatpush1.msra.mxu0 %v2993
    %3031 = vmatprep.subr.mxu0 0.0
    %3032 = vmatpush1.msra.mxu0 %v2994
    %3033 = vmatprep.subr.mxu0 0.0
    %3034 = vmatpush1.msra.mxu0 %v2995
    %3035 = vmatprep.subr.mxu0 0.0
    %3036 = vmatpush1.msra.mxu0 0.0
    %3037 = vmatprep.subr.mxu0 0.0
    %3038 = vmatpush1.msra.mxu0 0.0
    %3039 = vmatprep.subr.mxu0 0.0
    %3040 = vmatpush1.msra.mxu0 0.0
    %3041 = vmatprep.subr.mxu0 0.0
    %3042 = vmatpush1.msra.mxu0 0.0
    %3043 = vmatprep.subr.mxu0 0.0
    %3044 = vmatpush1.msra.mxu0 0.0
    %3045 = vmatprep.subr.mxu0 0.0
    %3046 = vmatpush1.msra.mxu0 0.0
    %3047 = vmatprep.subr.mxu0 0.0
    %3048 = vmatpush1.msra.mxu0 0.0
    %3049 = vmatprep.subr.mxu0 0.0
    %3050 = vmatpush1.msra.mxu0 0.0
    %3051 = vmatprep.subr.mxu0 0.0
    %3052 = vmatpush1.msra.mxu0 0.0
    %3053 = vmatprep.subr.mxu0 0.0
    %3054 = vmatpush1.msra.mxu0 0.0
    %3055 = vmatprep.subr.mxu0 0.0
    %3056 = vmatpush1.msra.mxu0 0.0
    %3057 = vmatprep.subr.mxu0 0.0
    %3058 = vmatpush1.msra.mxu0 0.0
    %3059 = vmatprep.subr.mxu0 0.0
    %3060 = vmatpush1.msra.mxu0 0.0
    %3061 = vmatprep.subr.mxu0 0.0
    %3062 = vmatpush1.msra.mxu0 0.0
    %3063 = vmatprep.subr.mxu0 0.0
    %3064 = vmatpush1.msra.mxu0 0.0
    %3065 = vmatprep.subr.mxu0 0.0
    %3066 = vmatpush1.msra.mxu0 0.0
    %3067 = vmatprep.mubr.f32.mxu0 0.0
    %3068 = vmatmul.mubr.f32.gmra.mrb[0].mxu0 %v2972
    %v3069 = vpop.f32.mrb[0].mxu0
    %v3070 = vadd.f32 %v3001, %v3069
    %v3071 = vpop.f32.mrb[0].mxu0
    %3072 = vmatprep.mubr.f32.mxu0 0.0
    %3073 = vmatmul.mubr.f32.gmra.mrb[0].mxu0 %v2973
    %v3074 = vpop.f32.mrb[0].mxu0
    %v3075 = vadd.f32 %v3001, %v3074
    %v3076 = vpop.f32.mrb[0].mxu0
    %3077 = vmatprep.mubr.f32.mxu0 0.0
    %3078 = vmatmul.mubr.f32.gmra.mrb[0].mxu0 %v2974
    %v3079 = vpop.f32.mrb[0].mxu0
    %v3080 = vadd.f32 %v3001, %v3079
    %v3081 = vpop.f32.mrb[0].mxu0
    %3082 = vmatprep.mubr.f32.mxu0 0.0
    %3083 = vmatmul.mubr.f32.gmra.mrb[0].mxu0 %v2975
    %v3084 = vpop.f32.mrb[0].mxu0
    %v3085 = vadd.f32 %v3001, %v3084
    %v3086 = vpop.f32.mrb[0].mxu0
    %3087 = vmatprep.mubr.f32.mxu0 0.0
    %3088 = vmatmul.mubr.f32.gmra.mrb[0].mxu0 %v2976
    %v3089 = vpop.f32.mrb[0].mxu0
    %v3090 = vadd.f32 %v3001, %v3089
    %v3091 = vpop.f32.mrb[0].mxu0
    %3092 = vmatprep.mubr.f32.mxu0 0.0
    %3093 = vmatmul.mubr.f32.gmra.mrb[0].mxu0 %v2977
    %v3094 = vpop.f32.mrb[0].mxu0
    %v3095 = vadd.f32 %v3001, %v3094
    %v3096 = vpop.f32.mrb[0].mxu0
    %3097 = vmatprep.mubr.f32.mxu0 0.0
    %3098 = vmatmul.mubr.f32.gmra.mrb[0].mxu0 %v2978
    %v3099 = vpop.f32.mrb[0].mxu0
    %v3100 = vadd.f32 %v3001, %v3099
    %v3101 = vpop.f32.mrb[0].mxu0
    %3102 = vmatprep.mubr.f32.mxu0 0.0
    %3103 = vmatmul.mubr.f32.gmra.mrb[0].mxu0 %v2979
    %v3104 = vpop.f32.mrb[0].mxu0
    %v3105 = vadd.f32 %v3001, %v3104
    %v3106 = vpop.f32.mrb[0].mxu0
    %3107 = vdwg.mxu0
    %3108 = vst [vmem:[#allocation11] sm:$0xff] %v3070
    %3109 = vst [vmem:[#allocation11 + $0x8] sm:$0xff] %v3075
    %3110 = vst [vmem:[#allocation11 + $0x10] sm:$0xff] %v3080
    %3111 = vst [vmem:[#allocation11 + $0x18] sm:$0xff] %v3085
    %3112 = vst [vmem:[#allocation11 + $0x20] sm:$0xff] %v3090
    %3113 = vst [vmem:[#allocation11 + $0x28] sm:$0xff] %v3095
    %3114 = vst [vmem:[#allocation11 + $0x30] sm:$0xff] %v3100
    %3115 = vst [vmem:[#allocation11 + $0x38] sm:$0xff] %v3105
    // Predicated region
    $region46: #{tpu_custom_call.1} parent=1 // pred_check
      _
    $region47: #{tpu_custom_call.1} parent=1 // pred_check_branch
      %3117 = sbr.rel (0) target = $region49
    $region48: #{tpu_custom_call.1} parent=1 // pred_region
      %s3119 = ssub.s32 1024, 1024
      %3120 = vsyncadd [#allocation5], %s3119
      %s3121 = sshll.u32 [#allocation11], 4
      %s3122 = int_to_ptr.vmem [resolvable:$true] %s3121
      %3127 = dma.vmem_to_hbm [thread:$0]  %s3122, 1024, %s7, [#allocation5], 128, 128, 8
    $region49: #{tpu_custom_call.1} parent=1 // pred_fallthru
      _
    // Predicated region
    $region50: #{tpu_custom_call.1} parent=1 // pred_check
      _
    $region51: #{tpu_custom_call.1} parent=1 // pred_check_branch
      %3129 = sbr.rel (0) target = $region53
    $region52: #{tpu_custom_call.1} parent=1 // pred_region
      %3130 = dma.done [#allocation5], 1024
    $region53: #{tpu_custom_call.1} parent=1 // pred_fallthru
      _
    %3131 = vsyncpa [#allocation4], 1
    %3132 = vsyncpa [#allocation7], 1
    %3133 = vsyncpa [#allocation10], 1
    %3134 = vsyncpa [#allocation5], 1

</llo_original>
